<compile_context>
chip_gen: v7x
topology: tpu7x:2x2x1
jax: 0.10.0
libtpu: 0.0.40
codegen_flags: <defaults>
</compile_context>

<pallas_src>
import functools
import numpy as np
import jax
import jax.numpy as jnp
from jax.experimental import pallas as pl
from jax.experimental.pallas import tpu as pltpu

# ---- small synthetic BERT config (scaled-down BERT_HIDDEN_SIZE etc.) --------
B = 2          # batch
S = 8          # sequence length
H = 128        # hidden size
NH = 4         # attention heads
DH = H // NH   # head dim
FF = 512       # FFN intermediate size (4*H)
L = 2          # number of encoder layers
VOCAB = 128
MAXPOS = 64
LN_EPS = 1e-12


def _layer_norm(x, g, b):
    mu = jnp.mean(x, axis=-1, keepdims=True)
    var = jnp.mean((x - mu) ** 2, axis=-1, keepdims=True)
    return (x - mu) * jax.lax.rsqrt(var + LN_EPS) * g + b


# ------------------------------ fused encoder kernel -------------------------
def encoder_kernel(x_ref, mask_bias_ref, emb_g_ref, emb_b_ref,
                   wqkv_ref, bqkv_ref, wo_ref, bo_ref, ln1g_ref, ln1b_ref,
                   w1_ref, b1_ref, w2_ref, b2_ref, ln2g_ref, ln2b_ref,
                   o_ref, *, batch, num_heads, num_layers):
    bs, hidden = x_ref.shape              # (B*S, H) - batch folded into M
    s_len = bs // batch
    dh = hidden // num_heads

    # Embedding LayerNorm (f32 elementwise).
    x = _layer_norm(x_ref[...], emb_g_ref[...], emb_b_ref[...])      # (B*S, H)

    # Hoist the additive attention bias into the head-batched layout once.
    # Index order of the batch dim is h*B + b (matches to_heads/from_heads below).
    bias_b = jnp.broadcast_to(mask_bias_ref[...][:, None, :],
                              (batch, s_len, s_len))                 # (B, S, S)
    bias_hb = jnp.concatenate([bias_b] * num_heads, axis=0)          # (NH*B, S, S)

    def to_heads(t):
        # (B*S, H) bf16 -> (NH*B, S, DH) bf16 ; rows stay seq-contiguous per (h, b).
        th = jnp.stack([t[:, h * dh:(h + 1) * dh] for h in range(num_heads)],
                       axis=0)                                       # (NH, B*S, DH)
        return th.reshape(num_heads * batch, s_len, dh)

    def from_heads(c):
        # (NH*B, S, DH) f32 -> (B*S, H) f32, columns head-major (matches wo layout).
        c = c.reshape(num_heads, batch * s_len, dh)
        return jnp.concatenate([c[h] for h in range(num_heads)], axis=-1)

    for l in range(num_layers):
        # ---- fused QKV projection: ONE (B*S,H)@(H,3H) bf16 MXU matmul -------
        x16 = x.astype(jnp.bfloat16)
        qkv = jnp.dot(x16, wqkv_ref[l],
                      preferred_element_type=jnp.float32) + bqkv_ref[l]
        # 1/sqrt(DH) is folded into the Q slice of wqkv/bqkv at param-prep time.
        q = to_heads(qkv[:, :hidden].astype(jnp.bfloat16))
        k = to_heads(qkv[:, hidden:2 * hidden].astype(jnp.bfloat16))
        v = to_heads(qkv[:, 2 * hidden:].astype(jnp.bfloat16))

        # ---- head-batched attention: 2 batched bf16 MXU dots per layer ------
        sc = jax.lax.dot_general(q, k, (((2,), (2,)), ((0,), (0,))),
                                 preferred_element_type=jnp.float32)  # (NH*B, S, S)
        sc = sc + bias_hb
        sc = sc - jnp.max(sc, axis=-1, keepdims=True)
        p = jnp.exp(sc)
        p = p * pl.reciprocal(jnp.sum(p, axis=-1, keepdims=True), approx=True)
        ctx = jax.lax.dot_general(p.astype(jnp.bfloat16), v,
                                  (((2,), (1,)), ((0,), (0,))),
                                  preferred_element_type=jnp.float32)  # (NH*B, S, DH)
        ctx = from_heads(ctx)                                          # (B*S, H)

        attn = jnp.dot(ctx.astype(jnp.bfloat16), wo_ref[l],
                       preferred_element_type=jnp.float32) + bo_ref[l]
        x = _layer_norm(x + attn, ln1g_ref[l], ln1b_ref[l])

        # ---- GELU FFN: bf16 MXU matmuls, f32 accumulate / elementwise -------
        hdn = jnp.dot(x.astype(jnp.bfloat16), w1_ref[l],
                      preferred_element_type=jnp.float32) + b1_ref[l]
        hdn = jax.nn.gelu(hdn, approximate=True)
        ffn = jnp.dot(hdn.astype(jnp.bfloat16), w2_ref[l],
                      preferred_element_type=jnp.float32) + b2_ref[l]

        x = _layer_norm(x + ffn, ln2g_ref[l], ln2b_ref[l])

    o_ref[...] = x


# ------------------------------ Pallas wrapper --------------------------------
_STACKED_PARAMS = ("wqkv", "bqkv", "wo", "bo", "ln1_g", "ln1_b",
                   "w1", "b1", "w2", "b2", "ln2_g", "ln2_b")


def _full_spec(shape):
    # Single grid step -> every block is grid-invariant and DMA'd exactly once.
    nd = len(shape)
    return pl.BlockSpec(shape, lambda i, _n=nd: (0,) * _n)


def bert_encoder(x_emb_flat, mask_bias, params):
    weights = [params["emb_ln_g"], params["emb_ln_b"]] + \
              [params[k] for k in _STACKED_PARAMS]
    in_specs = [_full_spec(x_emb_flat.shape), _full_spec(mask_bias.shape)]
    in_specs += [_full_spec(w.shape) for w in weights]
    return pl.pallas_call(
        functools.partial(encoder_kernel, batch=B, num_heads=NH, num_layers=L),
        out_shape=jax.ShapeDtypeStruct((B * S, H), jnp.float32),
        grid=(1,),
        in_specs=in_specs,
        out_specs=_full_spec((B * S, H)),
        compiler_params=pltpu.CompilerParams(
            dimension_semantics=("arbitrary",),
            vmem_limit_bytes=32 * 1024 * 1024),   # explicit budget (safe on v5e/v6e/v7x)
    )(x_emb_flat, mask_bias, *weights)


# ---------------------------- MultitaskBERT.forward ---------------------------
def multitask_bert_forward(params, input_ids, attention_mask):
    """Equivalent of MultitaskBERT.forward: BERT encoder -> last_hidden_state[:, 0, :]."""
    # Embedding lookup (gather) stays in plain JAX glue.
    x = (params["word_emb"][input_ids]
         + params["pos_emb"][:S][None, :, :]
         + params["tok_emb"][0][None, None, :])
    x_flat = x.reshape(B * S, H)                                    # batch folded into M
    mask_bias = (1.0 - attention_mask.astype(jnp.float32)) * -10000.0   # (B, S)
    hidden = bert_encoder(x_flat, mask_bias, params)                # (B*S, H)
    # TODO(synk): the `args.task == 'qqp'` branch returns the full BERT output dict;
    # we implement the default branch (CLS token embedding).
    return hidden.reshape(B, S, H)[:, 0, :]


# --------------------------- params & pure-JAX reference ----------------------
def init_params(key):
    ks = iter(jax.random.split(key, 64))

    def nrm(shape, scale=0.02):
        return scale * jax.random.normal(next(ks), shape, jnp.float32)

    p = {
        "word_emb": nrm((VOCAB, H)),
        "pos_emb": nrm((MAXPOS, H)),
        "tok_emb": nrm((2, H)),
        "emb_ln_g": 1.0 + nrm((1, H), 0.1),
        "emb_ln_b": nrm((1, H), 0.1),
    }
    wqkv, bqkv, wo, bo = [], [], [], []
    l1g, l1b, w1, b1, w2, b2, l2g, l2b = [], [], [], [], [], [], [], []
    for _ in range(L):
        wqkv.append(jnp.concatenate([nrm((H, H)), nrm((H, H)), nrm((H, H))], axis=-1))
        bqkv.append(nrm((1, 3 * H)))
        wo.append(nrm((H, H)))
        bo.append(nrm((1, H)))
        l1g.append(1.0 + nrm((1, H), 0.1))
        l1b.append(nrm((1, H), 0.1))
        w1.append(nrm((H, FF)))
        b1.append(nrm((1, FF)))
        w2.append(nrm((FF, H)))
        b2.append(nrm((1, H)))
        l2g.append(1.0 + nrm((1, H), 0.1))
        l2b.append(nrm((1, H), 0.1))
    p.update({
        "wqkv": jnp.stack(wqkv).astype(jnp.bfloat16),   # (L, H, 3H) bf16 MXU weights
        "bqkv": jnp.stack(bqkv),
        "wo": jnp.stack(wo).astype(jnp.bfloat16),
        "bo": jnp.stack(bo),
        "ln1_g": jnp.stack(l1g), "ln1_b": jnp.stack(l1b),
        "w1": jnp.stack(w1).astype(jnp.bfloat16),
        "b1": jnp.stack(b1),
        "w2": jnp.stack(w2).astype(jnp.bfloat16),
        "b2": jnp.stack(b2),
        "ln2_g": jnp.stack(l2g), "ln2_b": jnp.stack(l2b),
    })
    return p


def prepare_kernel_params(params):
    """One-time weight transform: fold 1/sqrt(DH) into the Q third of wqkv/bqkv."""
    scale = 1.0 / float(np.sqrt(DH))
    wqkv, bqkv = params["wqkv"], params["bqkv"]
    wq = (wqkv[:, :, :H].astype(jnp.float32) * scale).astype(wqkv.dtype)
    p = dict(params)
    p["wqkv"] = jnp.concatenate([wq, wqkv[:, :, H:]], axis=-1)
    p["bqkv"] = jnp.concatenate([bqkv[:, :, :H] * scale, bqkv[:, :, H:]], axis=-1)
    return p


def ref_forward(params, input_ids, attention_mask):
    """Pure-JAX reference (unscaled params, explicit /sqrt(DH), exact softmax)."""
    x = (params["word_emb"][input_ids]
         + params["pos_emb"][:S][None, :, :]
         + params["tok_emb"][0][None, None, :])
    x = _layer_norm(x, params["emb_ln_g"], params["emb_ln_b"])
    bias = (1.0 - attention_mask.astype(jnp.float32))[:, None, None, :] * -10000.0
    for l in range(L):
        qkv = jnp.dot(x.astype(jnp.bfloat16), params["wqkv"][l],
                      preferred_element_type=jnp.float32) + params["bqkv"][l]
        q = qkv[..., :H].reshape(B, S, NH, DH).transpose(0, 2, 1, 3) / np.sqrt(DH)
        k = qkv[..., H:2 * H].reshape(B, S, NH, DH).transpose(0, 2, 1, 3)
        v = qkv[..., 2 * H:].reshape(B, S, NH, DH).transpose(0, 2, 1, 3)
        sc = jnp.einsum("bhqd,bhkd->bhqk", q.astype(jnp.bfloat16), k.astype(jnp.bfloat16),
                        preferred_element_type=jnp.float32) + bias
        p = jax.nn.softmax(sc, axis=-1)
        ctx = jnp.einsum("bhqk,bhkd->bhqd", p.astype(jnp.bfloat16), v.astype(jnp.bfloat16),
                         preferred_element_type=jnp.float32)
        ctx = ctx.transpose(0, 2, 1, 3).reshape(B, S, H)
        attn = jnp.dot(ctx.astype(jnp.bfloat16), params["wo"][l],
                       preferred_element_type=jnp.float32) + params["bo"][l]
        x = _layer_norm(x + attn, params["ln1_g"][l], params["ln1_b"][l])
        hdn = jnp.dot(x.astype(jnp.bfloat16), params["w1"][l],
                      preferred_element_type=jnp.float32) + params["b1"][l]
        hdn = jax.nn.gelu(hdn, approximate=True)
        ffn = jnp.dot(hdn.astype(jnp.bfloat16), params["w2"][l],
                      preferred_element_type=jnp.float32) + params["b2"][l]
        x = _layer_norm(x + ffn, params["ln2_g"][l], params["ln2_b"][l])
    return x[:, 0, :]


if __name__ == "__main__":
    key = jax.random.PRNGKey(0)
    pkey, ikey = jax.random.split(key)
    params = init_params(pkey)
    kparams = prepare_kernel_params(params)   # one-time transform, outside jit

    input_ids = jax.random.randint(ikey, (B, S), 0, VOCAB, dtype=jnp.int32)
    attention_mask = jnp.ones((B, S), jnp.float32).at[1, S - 2:].set(0.0)

    cls = jax.jit(multitask_bert_forward)(kparams, input_ids, attention_mask)
    cls = jax.block_until_ready(cls)
    assert cls.shape == (B, H), cls.shape

    ref = ref_forward(params, input_ids, attention_mask)
    err = float(jnp.max(jnp.abs(cls - ref)))
    assert err < 5e-3, f"mismatch vs reference: {err}"
    print("KERNEL_OK")
</pallas_src>

<mosaic_0001>
module attributes {stable_mosaic.version = 11 : i64} {
  func.func @encoder_kernel(%arg0: i32, %arg1: memref<16x128xf32, #tpu.memory_space<vmem>>, %arg2: memref<2x8xf32, #tpu.memory_space<vmem>>, %arg3: memref<1x128xf32, #tpu.memory_space<vmem>>, %arg4: memref<1x128xf32, #tpu.memory_space<vmem>>, %arg5: memref<2x128x384xbf16, #tpu.memory_space<vmem>>, %arg6: memref<2x1x384xf32, #tpu.memory_space<vmem>>, %arg7: memref<2x128x128xbf16, #tpu.memory_space<vmem>>, %arg8: memref<2x1x128xf32, #tpu.memory_space<vmem>>, %arg9: memref<2x1x128xf32, #tpu.memory_space<vmem>>, %arg10: memref<2x1x128xf32, #tpu.memory_space<vmem>>, %arg11: memref<2x128x512xbf16, #tpu.memory_space<vmem>>, %arg12: memref<2x1x512xf32, #tpu.memory_space<vmem>>, %arg13: memref<2x512x128xbf16, #tpu.memory_space<vmem>>, %arg14: memref<2x1x128xf32, #tpu.memory_space<vmem>>, %arg15: memref<2x1x128xf32, #tpu.memory_space<vmem>>, %arg16: memref<2x1x128xf32, #tpu.memory_space<vmem>>, %arg17: memref<16x128xf32, #tpu.memory_space<vmem>>) attributes {dimension_semantics = [#tpu.dimension_semantics<arbitrary>], iteration_bounds = array<i64: 1>, scalar_prefetch = 0 : i64, scratch_operands = 0 : i64, tpu.core_type = #tpu.core_type<tc>, window_params = [{pipeline_mode = #tpu.pipeline_mode<synchronous>, transform_indices = @transform_0, window_bounds = array<i64: 16, 128>}, {pipeline_mode = #tpu.pipeline_mode<synchronous>, transform_indices = @transform_1, window_bounds = array<i64: 2, 8>}, {pipeline_mode = #tpu.pipeline_mode<synchronous>, transform_indices = @transform_2, window_bounds = array<i64: 1, 128>}, {pipeline_mode = #tpu.pipeline_mode<synchronous>, transform_indices = @transform_3, window_bounds = array<i64: 1, 128>}, {pipeline_mode = #tpu.pipeline_mode<synchronous>, transform_indices = @transform_4, window_bounds = array<i64: 2, 128, 384>}, {pipeline_mode = #tpu.pipeline_mode<synchronous>, transform_indices = @transform_5, window_bounds = array<i64: 2, 1, 384>}, {pipeline_mode = #tpu.pipeline_mode<synchronous>, transform_indices = @transform_6, window_bounds = array<i64: 2, 128, 128>}, {pipeline_mode = #tpu.pipeline_mode<synchronous>, transform_indices = @transform_7, window_bounds = array<i64: 2, 1, 128>}, {pipeline_mode = #tpu.pipeline_mode<synchronous>, transform_indices = @transform_8, window_bounds = array<i64: 2, 1, 128>}, {pipeline_mode = #tpu.pipeline_mode<synchronous>, transform_indices = @transform_9, window_bounds = array<i64: 2, 1, 128>}, {pipeline_mode = #tpu.pipeline_mode<synchronous>, transform_indices = @transform_10, window_bounds = array<i64: 2, 128, 512>}, {pipeline_mode = #tpu.pipeline_mode<synchronous>, transform_indices = @transform_11, window_bounds = array<i64: 2, 1, 512>}, {pipeline_mode = #tpu.pipeline_mode<synchronous>, transform_indices = @transform_12, window_bounds = array<i64: 2, 512, 128>}, {pipeline_mode = #tpu.pipeline_mode<synchronous>, transform_indices = @transform_13, window_bounds = array<i64: 2, 1, 128>}, {pipeline_mode = #tpu.pipeline_mode<synchronous>, transform_indices = @transform_14, window_bounds = array<i64: 2, 1, 128>}, {pipeline_mode = #tpu.pipeline_mode<synchronous>, transform_indices = @transform_15, window_bounds = array<i64: 2, 1, 128>}, {pipeline_mode = #tpu.pipeline_mode<synchronous>, transform_indices = @transform_16, window_bounds = array<i64: 16, 128>}]} {
    %c0 = arith.constant 0 : index
    %c0_0 = arith.constant 0 : index
    %0 = vector.load %arg1[%c0, %c0_0] : memref<16x128xf32, #tpu.memory_space<vmem>>, vector<16x128xf32>
    %c0_1 = arith.constant 0 : index
    %c0_2 = arith.constant 0 : index
    %1 = vector.load %arg3[%c0_1, %c0_2] : memref<1x128xf32, #tpu.memory_space<vmem>>, vector<1x128xf32>
    %c0_3 = arith.constant 0 : index
    %c0_4 = arith.constant 0 : index
    %2 = vector.load %arg4[%c0_3, %c0_4] : memref<1x128xf32, #tpu.memory_space<vmem>>, vector<1x128xf32>
    %cst = arith.constant dense<0.000000e+00> : vector<16xf32>
    %3 = vector.multi_reduction <add>, %0, %cst [1] : vector<16x128xf32> to vector<16xf32>
    %4 = vector.shape_cast %3 : vector<16xf32> to vector<16x1xf32>
    %cst_5 = arith.constant 1.280000e+02 : f32
    %5 = vector.broadcast %cst_5 : f32 to vector<16x1xf32>
    %6 = arith.divf %4, %5 : vector<16x1xf32>
    %7 = vector.broadcast %6 : vector<16x1xf32> to vector<16x128xf32>
    %8 = arith.subf %0, %7 : vector<16x128xf32>
    %9 = arith.mulf %8, %8 : vector<16x128xf32>
    %cst_6 = arith.constant dense<0.000000e+00> : vector<16xf32>
    %10 = vector.multi_reduction <add>, %9, %cst_6 [1] : vector<16x128xf32> to vector<16xf32>
    %11 = vector.shape_cast %10 : vector<16xf32> to vector<16x1xf32>
    %cst_7 = arith.constant 1.280000e+02 : f32
    %12 = vector.broadcast %cst_7 : f32 to vector<16x1xf32>
    %13 = arith.divf %11, %12 : vector<16x1xf32>
    %14 = vector.broadcast %6 : vector<16x1xf32> to vector<16x128xf32>
    %15 = arith.subf %0, %14 : vector<16x128xf32>
    %cst_8 = arith.constant 9.99999996E-13 : f32
    %16 = vector.broadcast %cst_8 : f32 to vector<16x1xf32>
    %17 = arith.addf %13, %16 : vector<16x1xf32>
    %18 = math.rsqrt %17 : vector<16x1xf32>
    %19 = vector.broadcast %18 : vector<16x1xf32> to vector<16x128xf32>
    %20 = arith.mulf %15, %19 : vector<16x128xf32>
    %21 = vector.broadcast %1 : vector<1x128xf32> to vector<16x128xf32>
    %22 = arith.mulf %20, %21 : vector<16x128xf32>
    %23 = vector.broadcast %2 : vector<1x128xf32> to vector<16x128xf32>
    %24 = arith.addf %22, %23 : vector<16x128xf32>
    %c0_9 = arith.constant 0 : index
    %c0_10 = arith.constant 0 : index
    %25 = vector.load %arg2[%c0_9, %c0_10] : memref<2x8xf32, #tpu.memory_space<vmem>>, vector<2x8xf32>
    %26 = vector.shape_cast %25 : vector<2x8xf32> to vector<2x1x8xf32>
    %27 = vector.shape_cast %26 : vector<2x1x8xf32> to vector<2x1x8xf32>
    %28 = vector.broadcast %27 : vector<2x1x8xf32> to vector<2x8x8xf32>
    %29 = tpu.concatenate %28, %28, %28, %28 in 0 : vector<2x8x8xf32>, vector<2x8x8xf32>, vector<2x8x8xf32>, vector<2x8x8xf32> -> vector<8x8x8xf32>
    %30 = arith.truncf %24 : vector<16x128xf32> to vector<16x128xbf16>
    %c0_11 = arith.constant 0 : index
    %c0_12 = arith.constant 0 : index
    %c0_13 = arith.constant 0 : index
    %31 = vector.load %arg5[%c0_11, %c0_12, %c0_13] : memref<2x128x384xbf16, #tpu.memory_space<vmem>>, vector<1x128x384xbf16>
    %32 = vector.shape_cast %31 : vector<1x128x384xbf16> to vector<128x384xbf16>
    %cst_14 = arith.constant dense<0.000000e+00> : vector<16x384xf32>
    %33 = tpu.matmul %30, %32, %cst_14 {dimension_numbers = #tpu.dot_dimension_numbers<[1], [0], [0], [1], [0, 0, 1, 1], [], []>} : vector<16x128xbf16>, vector<128x384xbf16>, vector<16x384xf32> -> vector<16x384xf32>
    %c0_15 = arith.constant 0 : index
    %c0_16 = arith.constant 0 : index
    %c0_17 = arith.constant 0 : index
    %34 = vector.load %arg6[%c0_15, %c0_16, %c0_17] : memref<2x1x384xf32, #tpu.memory_space<vmem>>, vector<1x1x384xf32>
    %35 = vector.shape_cast %34 : vector<1x1x384xf32> to vector<1x384xf32>
    %36 = vector.broadcast %35 : vector<1x384xf32> to vector<16x384xf32>
    %37 = arith.addf %33, %36 : vector<16x384xf32>
    %38 = vector.extract_strided_slice %37 {offsets = [0, 0], sizes = [16, 128], strides = [1, 1]} : vector<16x384xf32> to vector<16x128xf32>
    %39 = arith.truncf %38 : vector<16x128xf32> to vector<16x128xbf16>
    %40 = vector.extract_strided_slice %39 {offsets = [0, 0], sizes = [16, 32], strides = [1, 1]} : vector<16x128xbf16> to vector<16x32xbf16>
    %41 = vector.extract_strided_slice %39 {offsets = [0, 32], sizes = [16, 32], strides = [1, 1]} : vector<16x128xbf16> to vector<16x32xbf16>
    %42 = vector.extract_strided_slice %39 {offsets = [0, 64], sizes = [16, 32], strides = [1, 1]} : vector<16x128xbf16> to vector<16x32xbf16>
    %43 = vector.extract_strided_slice %39 {offsets = [0, 96], sizes = [16, 32], strides = [1, 1]} : vector<16x128xbf16> to vector<16x32xbf16>
    %44 = vector.shape_cast %40 : vector<16x32xbf16> to vector<1x16x32xbf16>
    %45 = vector.shape_cast %41 : vector<16x32xbf16> to vector<1x16x32xbf16>
    %46 = vector.shape_cast %42 : vector<16x32xbf16> to vector<1x16x32xbf16>
    %47 = vector.shape_cast %43 : vector<16x32xbf16> to vector<1x16x32xbf16>
    %48 = tpu.concatenate %44, %45, %46, %47 in 0 : vector<1x16x32xbf16>, vector<1x16x32xbf16>, vector<1x16x32xbf16>, vector<1x16x32xbf16> -> vector<4x16x32xbf16>
    %49 = vector.shape_cast %48 : vector<4x16x32xbf16> to vector<8x8x32xbf16>
    %50 = vector.extract_strided_slice %37 {offsets = [0, 128], sizes = [16, 128], strides = [1, 1]} : vector<16x384xf32> to vector<16x128xf32>
    %51 = arith.truncf %50 : vector<16x128xf32> to vector<16x128xbf16>
    %52 = vector.extract_strided_slice %51 {offsets = [0, 0], sizes = [16, 32], strides = [1, 1]} : vector<16x128xbf16> to vector<16x32xbf16>
    %53 = vector.extract_strided_slice %51 {offsets = [0, 32], sizes = [16, 32], strides = [1, 1]} : vector<16x128xbf16> to vector<16x32xbf16>
    %54 = vector.extract_strided_slice %51 {offsets = [0, 64], sizes = [16, 32], strides = [1, 1]} : vector<16x128xbf16> to vector<16x32xbf16>
    %55 = vector.extract_strided_slice %51 {offsets = [0, 96], sizes = [16, 32], strides = [1, 1]} : vector<16x128xbf16> to vector<16x32xbf16>
    %56 = vector.shape_cast %52 : vector<16x32xbf16> to vector<1x16x32xbf16>
    %57 = vector.shape_cast %53 : vector<16x32xbf16> to vector<1x16x32xbf16>
    %58 = vector.shape_cast %54 : vector<16x32xbf16> to vector<1x16x32xbf16>
    %59 = vector.shape_cast %55 : vector<16x32xbf16> to vector<1x16x32xbf16>
    %60 = tpu.concatenate %56, %57, %58, %59 in 0 : vector<1x16x32xbf16>, vector<1x16x32xbf16>, vector<1x16x32xbf16>, vector<1x16x32xbf16> -> vector<4x16x32xbf16>
    %61 = vector.shape_cast %60 : vector<4x16x32xbf16> to vector<8x8x32xbf16>
    %62 = vector.extract_strided_slice %37 {offsets = [0, 256], sizes = [16, 128], strides = [1, 1]} : vector<16x384xf32> to vector<16x128xf32>
    %63 = arith.truncf %62 : vector<16x128xf32> to vector<16x128xbf16>
    %64 = vector.extract_strided_slice %63 {offsets = [0, 0], sizes = [16, 32], strides = [1, 1]} : vector<16x128xbf16> to vector<16x32xbf16>
    %65 = vector.extract_strided_slice %63 {offsets = [0, 32], sizes = [16, 32], strides = [1, 1]} : vector<16x128xbf16> to vector<16x32xbf16>
    %66 = vector.extract_strided_slice %63 {offsets = [0, 64], sizes = [16, 32], strides = [1, 1]} : vector<16x128xbf16> to vector<16x32xbf16>
    %67 = vector.extract_strided_slice %63 {offsets = [0, 96], sizes = [16, 32], strides = [1, 1]} : vector<16x128xbf16> to vector<16x32xbf16>
    %68 = vector.shape_cast %64 : vector<16x32xbf16> to vector<1x16x32xbf16>
    %69 = vector.shape_cast %65 : vector<16x32xbf16> to vector<1x16x32xbf16>
    %70 = vector.shape_cast %66 : vector<16x32xbf16> to vector<1x16x32xbf16>
    %71 = vector.shape_cast %67 : vector<16x32xbf16> to vector<1x16x32xbf16>
    %72 = tpu.concatenate %68, %69, %70, %71 in 0 : vector<1x16x32xbf16>, vector<1x16x32xbf16>, vector<1x16x32xbf16>, vector<1x16x32xbf16> -> vector<4x16x32xbf16>
    %73 = vector.shape_cast %72 : vector<4x16x32xbf16> to vector<8x8x32xbf16>
    %cst_18 = arith.constant dense<0.000000e+00> : vector<8x8x8xf32>
    %74 = tpu.matmul %49, %61, %cst_18 {dimension_numbers = #tpu.dot_dimension_numbers<[2], [2], [1], [1], [0, 0, 0, 1, 1, 1], [0], [0]>} : vector<8x8x32xbf16>, vector<8x8x32xbf16>, vector<8x8x8xf32> -> vector<8x8x8xf32>
    %75 = arith.addf %74, %29 : vector<8x8x8xf32>
    %cst_19 = arith.constant dense<0xFF800000> : vector<8x8xf32>
    %76 = vector.multi_reduction <maximumf>, %75, %cst_19 [2] : vector<8x8x8xf32> to vector<8x8xf32>
    %77 = vector.shape_cast %76 : vector<8x8xf32> to vector<8x8x1xf32>
    %78 = vector.broadcast %77 : vector<8x8x1xf32> to vector<8x8x8xf32>
    %79 = arith.subf %75, %78 : vector<8x8x8xf32>
    %80 = math.exp %79 : vector<8x8x8xf32>
    %cst_20 = arith.constant dense<0.000000e+00> : vector<8x8xf32>
    %81 = vector.multi_reduction <add>, %80, %cst_20 [2] : vector<8x8x8xf32> to vector<8x8xf32>
    %82 = vector.shape_cast %81 : vector<8x8xf32> to vector<8x8x1xf32>
    %83 = tpu.reciprocal %82 {approx = true} : vector<8x8x1xf32> -> vector<8x8x1xf32>
    %84 = vector.broadcast %83 : vector<8x8x1xf32> to vector<8x8x8xf32>
    %85 = arith.mulf %80, %84 : vector<8x8x8xf32>
    %86 = arith.truncf %85 : vector<8x8x8xf32> to vector<8x8x8xbf16>
    %cst_21 = arith.constant dense<0.000000e+00> : vector<8x8x32xf32>
    %87 = tpu.matmul %86, %73, %cst_21 {dimension_numbers = #tpu.dot_dimension_numbers<[2], [1], [1], [2], [0, 0, 0, 1, 1, 2], [0], [0]>} : vector<8x8x8xbf16>, vector<8x8x32xbf16>, vector<8x8x32xf32> -> vector<8x8x32xf32>
    %88 = vector.shape_cast %87 : vector<8x8x32xf32> to vector<4x16x32xf32>
    %89 = vector.extract_strided_slice %88 {offsets = [0, 0, 0], sizes = [1, 16, 32], strides = [1, 1, 1]} : vector<4x16x32xf32> to vector<1x16x32xf32>
    %90 = vector.shape_cast %89 : vector<1x16x32xf32> to vector<16x32xf32>
    %91 = vector.extract_strided_slice %88 {offsets = [1, 0, 0], sizes = [1, 16, 32], strides = [1, 1, 1]} : vector<4x16x32xf32> to vector<1x16x32xf32>
    %92 = vector.shape_cast %91 : vector<1x16x32xf32> to vector<16x32xf32>
    %93 = vector.extract_strided_slice %88 {offsets = [2, 0, 0], sizes = [1, 16, 32], strides = [1, 1, 1]} : vector<4x16x32xf32> to vector<1x16x32xf32>
    %94 = vector.shape_cast %93 : vector<1x16x32xf32> to vector<16x32xf32>
    %95 = vector.extract_strided_slice %88 {offsets = [3, 0, 0], sizes = [1, 16, 32], strides = [1, 1, 1]} : vector<4x16x32xf32> to vector<1x16x32xf32>
    %96 = vector.shape_cast %95 : vector<1x16x32xf32> to vector<16x32xf32>
    %97 = tpu.concatenate %90, %92, %94, %96 in 1 : vector<16x32xf32>, vector<16x32xf32>, vector<16x32xf32>, vector<16x32xf32> -> vector<16x128xf32>
    %98 = arith.truncf %97 : vector<16x128xf32> to vector<16x128xbf16>
    %c0_22 = arith.constant 0 : index
    %c0_23 = arith.constant 0 : index
    %c0_24 = arith.constant 0 : index
    %99 = vector.load %arg7[%c0_22, %c0_23, %c0_24] : memref<2x128x128xbf16, #tpu.memory_space<vmem>>, vector<1x128x128xbf16>
    %100 = vector.shape_cast %99 : vector<1x128x128xbf16> to vector<128x128xbf16>
    %cst_25 = arith.constant dense<0.000000e+00> : vector<16x128xf32>
    %101 = tpu.matmul %98, %100, %cst_25 {dimension_numbers = #tpu.dot_dimension_numbers<[1], [0], [0], [1], [0, 0, 1, 1], [], []>} : vector<16x128xbf16>, vector<128x128xbf16>, vector<16x128xf32> -> vector<16x128xf32>
    %c0_26 = arith.constant 0 : index
    %c0_27 = arith.constant 0 : index
    %c0_28 = arith.constant 0 : index
    %102 = vector.load %arg8[%c0_26, %c0_27, %c0_28] : memref<2x1x128xf32, #tpu.memory_space<vmem>>, vector<1x1x128xf32>
    %103 = vector.shape_cast %102 : vector<1x1x128xf32> to vector<1x128xf32>
    %104 = vector.broadcast %103 : vector<1x128xf32> to vector<16x128xf32>
    %105 = arith.addf %101, %104 : vector<16x128xf32>
    %106 = arith.addf %24, %105 : vector<16x128xf32>
    %c0_29 = arith.constant 0 : index
    %c0_30 = arith.constant 0 : index
    %c0_31 = arith.constant 0 : index
    %107 = vector.load %arg9[%c0_29, %c0_30, %c0_31] : memref<2x1x128xf32, #tpu.memory_space<vmem>>, vector<1x1x128xf32>
    %108 = vector.shape_cast %107 : vector<1x1x128xf32> to vector<1x128xf32>
    %c0_32 = arith.constant 0 : index
    %c0_33 = arith.constant 0 : index
    %c0_34 = arith.constant 0 : index
    %109 = vector.load %arg10[%c0_32, %c0_33, %c0_34] : memref<2x1x128xf32, #tpu.memory_space<vmem>>, vector<1x1x128xf32>
    %110 = vector.shape_cast %109 : vector<1x1x128xf32> to vector<1x128xf32>
    %cst_35 = arith.constant dense<0.000000e+00> : vector<16xf32>
    %111 = vector.multi_reduction <add>, %106, %cst_35 [1] : vector<16x128xf32> to vector<16xf32>
    %112 = vector.shape_cast %111 : vector<16xf32> to vector<16x1xf32>
    %cst_36 = arith.constant 1.280000e+02 : f32
    %113 = vector.broadcast %cst_36 : f32 to vector<16x1xf32>
    %114 = arith.divf %112, %113 : vector<16x1xf32>
    %115 = vector.broadcast %114 : vector<16x1xf32> to vector<16x128xf32>
    %116 = arith.subf %106, %115 : vector<16x128xf32>
    %117 = arith.mulf %116, %116 : vector<16x128xf32>
    %cst_37 = arith.constant dense<0.000000e+00> : vector<16xf32>
    %118 = vector.multi_reduction <add>, %117, %cst_37 [1] : vector<16x128xf32> to vector<16xf32>
    %119 = vector.shape_cast %118 : vector<16xf32> to vector<16x1xf32>
    %cst_38 = arith.constant 1.280000e+02 : f32
    %120 = vector.broadcast %cst_38 : f32 to vector<16x1xf32>
    %121 = arith.divf %119, %120 : vector<16x1xf32>
    %122 = vector.broadcast %114 : vector<16x1xf32> to vector<16x128xf32>
    %123 = arith.subf %106, %122 : vector<16x128xf32>
    %cst_39 = arith.constant 9.99999996E-13 : f32
    %124 = vector.broadcast %cst_39 : f32 to vector<16x1xf32>
    %125 = arith.addf %121, %124 : vector<16x1xf32>
    %126 = math.rsqrt %125 : vector<16x1xf32>
    %127 = vector.broadcast %126 : vector<16x1xf32> to vector<16x128xf32>
    %128 = arith.mulf %123, %127 : vector<16x128xf32>
    %129 = vector.broadcast %108 : vector<1x128xf32> to vector<16x128xf32>
    %130 = arith.mulf %128, %129 : vector<16x128xf32>
    %131 = vector.broadcast %110 : vector<1x128xf32> to vector<16x128xf32>
    %132 = arith.addf %130, %131 : vector<16x128xf32>
    %133 = arith.truncf %132 : vector<16x128xf32> to vector<16x128xbf16>
    %c0_40 = arith.constant 0 : index
    %c0_41 = arith.constant 0 : index
    %c0_42 = arith.constant 0 : index
    %134 = vector.load %arg11[%c0_40, %c0_41, %c0_42] : memref<2x128x512xbf16, #tpu.memory_space<vmem>>, vector<1x128x512xbf16>
    %135 = vector.shape_cast %134 : vector<1x128x512xbf16> to vector<128x512xbf16>
    %cst_43 = arith.constant dense<0.000000e+00> : vector<16x512xf32>
    %136 = tpu.matmul %133, %135, %cst_43 {dimension_numbers = #tpu.dot_dimension_numbers<[1], [0], [0], [1], [0, 0, 1, 1], [], []>} : vector<16x128xbf16>, vector<128x512xbf16>, vector<16x512xf32> -> vector<16x512xf32>
    %c0_44 = arith.constant 0 : index
    %c0_45 = arith.constant 0 : index
    %c0_46 = arith.constant 0 : index
    %137 = vector.load %arg12[%c0_44, %c0_45, %c0_46] : memref<2x1x512xf32, #tpu.memory_space<vmem>>, vector<1x1x512xf32>
    %138 = vector.shape_cast %137 : vector<1x1x512xf32> to vector<1x512xf32>
    %139 = vector.broadcast %138 : vector<1x512xf32> to vector<16x512xf32>
    %140 = arith.addf %136, %139 : vector<16x512xf32>
    %141 = arith.mulf %140, %140 : vector<16x512xf32>
    %142 = arith.mulf %140, %141 : vector<16x512xf32>
    %cst_47 = arith.constant 4.471500e-02 : f32
    %143 = vector.broadcast %cst_47 : f32 to vector<16x512xf32>
    %144 = arith.mulf %143, %142 : vector<16x512xf32>
    %145 = arith.addf %140, %144 : vector<16x512xf32>
    %cst_48 = arith.constant 0.797884583 : f32
    %146 = vector.broadcast %cst_48 : f32 to vector<16x512xf32>
    %147 = arith.mulf %146, %145 : vector<16x512xf32>
    %148 = math.tanh %147 : vector<16x512xf32>
    %cst_49 = arith.constant 1.000000e+00 : f32
    %149 = vector.broadcast %cst_49 : f32 to vector<16x512xf32>
    %150 = arith.addf %149, %148 : vector<16x512xf32>
    %cst_50 = arith.constant 5.000000e-01 : f32
    %151 = vector.broadcast %cst_50 : f32 to vector<16x512xf32>
    %152 = arith.mulf %151, %150 : vector<16x512xf32>
    %153 = arith.mulf %140, %152 : vector<16x512xf32>
    %154 = arith.truncf %153 : vector<16x512xf32> to vector<16x512xbf16>
    %c0_51 = arith.constant 0 : index
    %c0_52 = arith.constant 0 : index
    %c0_53 = arith.constant 0 : index
    %155 = vector.load %arg13[%c0_51, %c0_52, %c0_53] : memref<2x512x128xbf16, #tpu.memory_space<vmem>>, vector<1x512x128xbf16>
    %156 = vector.shape_cast %155 : vector<1x512x128xbf16> to vector<512x128xbf16>
    %cst_54 = arith.constant dense<0.000000e+00> : vector<16x128xf32>
    %157 = tpu.matmul %154, %156, %cst_54 {dimension_numbers = #tpu.dot_dimension_numbers<[1], [0], [0], [1], [0, 0, 1, 1], [], []>} : vector<16x512xbf16>, vector<512x128xbf16>, vector<16x128xf32> -> vector<16x128xf32>
    %c0_55 = arith.constant 0 : index
    %c0_56 = arith.constant 0 : index
    %c0_57 = arith.constant 0 : index
    %158 = vector.load %arg14[%c0_55, %c0_56, %c0_57] : memref<2x1x128xf32, #tpu.memory_space<vmem>>, vector<1x1x128xf32>
    %159 = vector.shape_cast %158 : vector<1x1x128xf32> to vector<1x128xf32>
    %160 = vector.broadcast %159 : vector<1x128xf32> to vector<16x128xf32>
    %161 = arith.addf %157, %160 : vector<16x128xf32>
    %162 = arith.addf %132, %161 : vector<16x128xf32>
    %c0_58 = arith.constant 0 : index
    %c0_59 = arith.constant 0 : index
    %c0_60 = arith.constant 0 : index
    %163 = vector.load %arg15[%c0_58, %c0_59, %c0_60] : memref<2x1x128xf32, #tpu.memory_space<vmem>>, vector<1x1x128xf32>
    %164 = vector.shape_cast %163 : vector<1x1x128xf32> to vector<1x128xf32>
    %c0_61 = arith.constant 0 : index
    %c0_62 = arith.constant 0 : index
    %c0_63 = arith.constant 0 : index
    %165 = vector.load %arg16[%c0_61, %c0_62, %c0_63] : memref<2x1x128xf32, #tpu.memory_space<vmem>>, vector<1x1x128xf32>
    %166 = vector.shape_cast %165 : vector<1x1x128xf32> to vector<1x128xf32>
    %cst_64 = arith.constant dense<0.000000e+00> : vector<16xf32>
    %167 = vector.multi_reduction <add>, %162, %cst_64 [1] : vector<16x128xf32> to vector<16xf32>
    %168 = vector.shape_cast %167 : vector<16xf32> to vector<16x1xf32>
    %cst_65 = arith.constant 1.280000e+02 : f32
    %169 = vector.broadcast %cst_65 : f32 to vector<16x1xf32>
    %170 = arith.divf %168, %169 : vector<16x1xf32>
    %171 = vector.broadcast %170 : vector<16x1xf32> to vector<16x128xf32>
    %172 = arith.subf %162, %171 : vector<16x128xf32>
    %173 = arith.mulf %172, %172 : vector<16x128xf32>
    %cst_66 = arith.constant dense<0.000000e+00> : vector<16xf32>
    %174 = vector.multi_reduction <add>, %173, %cst_66 [1] : vector<16x128xf32> to vector<16xf32>
    %175 = vector.shape_cast %174 : vector<16xf32> to vector<16x1xf32>
    %cst_67 = arith.constant 1.280000e+02 : f32
    %176 = vector.broadcast %cst_67 : f32 to vector<16x1xf32>
    %177 = arith.divf %175, %176 : vector<16x1xf32>
    %178 = vector.broadcast %170 : vector<16x1xf32> to vector<16x128xf32>
    %179 = arith.subf %162, %178 : vector<16x128xf32>
    %cst_68 = arith.constant 9.99999996E-13 : f32
    %180 = vector.broadcast %cst_68 : f32 to vector<16x1xf32>
    %181 = arith.addf %177, %180 : vector<16x1xf32>
    %182 = math.rsqrt %181 : vector<16x1xf32>
    %183 = vector.broadcast %182 : vector<16x1xf32> to vector<16x128xf32>
    %184 = arith.mulf %179, %183 : vector<16x128xf32>
    %185 = vector.broadcast %164 : vector<1x128xf32> to vector<16x128xf32>
    %186 = arith.mulf %184, %185 : vector<16x128xf32>
    %187 = vector.broadcast %166 : vector<1x128xf32> to vector<16x128xf32>
    %188 = arith.addf %186, %187 : vector<16x128xf32>
    %189 = arith.truncf %188 : vector<16x128xf32> to vector<16x128xbf16>
    %c1 = arith.constant 1 : index
    %c0_69 = arith.constant 0 : index
    %c0_70 = arith.constant 0 : index
    %190 = vector.load %arg5[%c1, %c0_69, %c0_70] : memref<2x128x384xbf16, #tpu.memory_space<vmem>>, vector<1x128x384xbf16>
    %191 = vector.shape_cast %190 : vector<1x128x384xbf16> to vector<128x384xbf16>
    %cst_71 = arith.constant dense<0.000000e+00> : vector<16x384xf32>
    %192 = tpu.matmul %189, %191, %cst_71 {dimension_numbers = #tpu.dot_dimension_numbers<[1], [0], [0], [1], [0, 0, 1, 1], [], []>} : vector<16x128xbf16>, vector<128x384xbf16>, vector<16x384xf32> -> vector<16x384xf32>
    %c1_72 = arith.constant 1 : index
    %c0_73 = arith.constant 0 : index
    %c0_74 = arith.constant 0 : index
    %193 = vector.load %arg6[%c1_72, %c0_73, %c0_74] : memref<2x1x384xf32, #tpu.memory_space<vmem>>, vector<1x1x384xf32>
    %194 = vector.shape_cast %193 : vector<1x1x384xf32> to vector<1x384xf32>
    %195 = vector.broadcast %194 : vector<1x384xf32> to vector<16x384xf32>
    %196 = arith.addf %192, %195 : vector<16x384xf32>
    %197 = vector.extract_strided_slice %196 {offsets = [0, 0], sizes = [16, 128], strides = [1, 1]} : vector<16x384xf32> to vector<16x128xf32>
    %198 = arith.truncf %197 : vector<16x128xf32> to vector<16x128xbf16>
    %199 = vector.extract_strided_slice %198 {offsets = [0, 0], sizes = [16, 32], strides = [1, 1]} : vector<16x128xbf16> to vector<16x32xbf16>
    %200 = vector.extract_strided_slice %198 {offsets = [0, 32], sizes = [16, 32], strides = [1, 1]} : vector<16x128xbf16> to vector<16x32xbf16>
    %201 = vector.extract_strided_slice %198 {offsets = [0, 64], sizes = [16, 32], strides = [1, 1]} : vector<16x128xbf16> to vector<16x32xbf16>
    %202 = vector.extract_strided_slice %198 {offsets = [0, 96], sizes = [16, 32], strides = [1, 1]} : vector<16x128xbf16> to vector<16x32xbf16>
    %203 = vector.shape_cast %199 : vector<16x32xbf16> to vector<1x16x32xbf16>
    %204 = vector.shape_cast %200 : vector<16x32xbf16> to vector<1x16x32xbf16>
    %205 = vector.shape_cast %201 : vector<16x32xbf16> to vector<1x16x32xbf16>
    %206 = vector.shape_cast %202 : vector<16x32xbf16> to vector<1x16x32xbf16>
    %207 = tpu.concatenate %203, %204, %205, %206 in 0 : vector<1x16x32xbf16>, vector<1x16x32xbf16>, vector<1x16x32xbf16>, vector<1x16x32xbf16> -> vector<4x16x32xbf16>
    %208 = vector.shape_cast %207 : vector<4x16x32xbf16> to vector<8x8x32xbf16>
    %209 = vector.extract_strided_slice %196 {offsets = [0, 128], sizes = [16, 128], strides = [1, 1]} : vector<16x384xf32> to vector<16x128xf32>
    %210 = arith.truncf %209 : vector<16x128xf32> to vector<16x128xbf16>
    %211 = vector.extract_strided_slice %210 {offsets = [0, 0], sizes = [16, 32], strides = [1, 1]} : vector<16x128xbf16> to vector<16x32xbf16>
    %212 = vector.extract_strided_slice %210 {offsets = [0, 32], sizes = [16, 32], strides = [1, 1]} : vector<16x128xbf16> to vector<16x32xbf16>
    %213 = vector.extract_strided_slice %210 {offsets = [0, 64], sizes = [16, 32], strides = [1, 1]} : vector<16x128xbf16> to vector<16x32xbf16>
    %214 = vector.extract_strided_slice %210 {offsets = [0, 96], sizes = [16, 32], strides = [1, 1]} : vector<16x128xbf16> to vector<16x32xbf16>
    %215 = vector.shape_cast %211 : vector<16x32xbf16> to vector<1x16x32xbf16>
    %216 = vector.shape_cast %212 : vector<16x32xbf16> to vector<1x16x32xbf16>
    %217 = vector.shape_cast %213 : vector<16x32xbf16> to vector<1x16x32xbf16>
    %218 = vector.shape_cast %214 : vector<16x32xbf16> to vector<1x16x32xbf16>
    %219 = tpu.concatenate %215, %216, %217, %218 in 0 : vector<1x16x32xbf16>, vector<1x16x32xbf16>, vector<1x16x32xbf16>, vector<1x16x32xbf16> -> vector<4x16x32xbf16>
    %220 = vector.shape_cast %219 : vector<4x16x32xbf16> to vector<8x8x32xbf16>
    %221 = vector.extract_strided_slice %196 {offsets = [0, 256], sizes = [16, 128], strides = [1, 1]} : vector<16x384xf32> to vector<16x128xf32>
    %222 = arith.truncf %221 : vector<16x128xf32> to vector<16x128xbf16>
    %223 = vector.extract_strided_slice %222 {offsets = [0, 0], sizes = [16, 32], strides = [1, 1]} : vector<16x128xbf16> to vector<16x32xbf16>
    %224 = vector.extract_strided_slice %222 {offsets = [0, 32], sizes = [16, 32], strides = [1, 1]} : vector<16x128xbf16> to vector<16x32xbf16>
    %225 = vector.extract_strided_slice %222 {offsets = [0, 64], sizes = [16, 32], strides = [1, 1]} : vector<16x128xbf16> to vector<16x32xbf16>
    %226 = vector.extract_strided_slice %222 {offsets = [0, 96], sizes = [16, 32], strides = [1, 1]} : vector<16x128xbf16> to vector<16x32xbf16>
    %227 = vector.shape_cast %223 : vector<16x32xbf16> to vector<1x16x32xbf16>
    %228 = vector.shape_cast %224 : vector<16x32xbf16> to vector<1x16x32xbf16>
    %229 = vector.shape_cast %225 : vector<16x32xbf16> to vector<1x16x32xbf16>
    %230 = vector.shape_cast %226 : vector<16x32xbf16> to vector<1x16x32xbf16>
    %231 = tpu.concatenate %227, %228, %229, %230 in 0 : vector<1x16x32xbf16>, vector<1x16x32xbf16>, vector<1x16x32xbf16>, vector<1x16x32xbf16> -> vector<4x16x32xbf16>
    %232 = vector.shape_cast %231 : vector<4x16x32xbf16> to vector<8x8x32xbf16>
    %cst_75 = arith.constant dense<0.000000e+00> : vector<8x8x8xf32>
    %233 = tpu.matmul %208, %220, %cst_75 {dimension_numbers = #tpu.dot_dimension_numbers<[2], [2], [1], [1], [0, 0, 0, 1, 1, 1], [0], [0]>} : vector<8x8x32xbf16>, vector<8x8x32xbf16>, vector<8x8x8xf32> -> vector<8x8x8xf32>
    %234 = arith.addf %233, %29 : vector<8x8x8xf32>
    %cst_76 = arith.constant dense<0xFF800000> : vector<8x8xf32>
    %235 = vector.multi_reduction <maximumf>, %234, %cst_76 [2] : vector<8x8x8xf32> to vector<8x8xf32>
    %236 = vector.shape_cast %235 : vector<8x8xf32> to vector<8x8x1xf32>
    %237 = vector.broadcast %236 : vector<8x8x1xf32> to vector<8x8x8xf32>
    %238 = arith.subf %234, %237 : vector<8x8x8xf32>
    %239 = math.exp %238 : vector<8x8x8xf32>
    %cst_77 = arith.constant dense<0.000000e+00> : vector<8x8xf32>
    %240 = vector.multi_reduction <add>, %239, %cst_77 [2] : vector<8x8x8xf32> to vector<8x8xf32>
    %241 = vector.shape_cast %240 : vector<8x8xf32> to vector<8x8x1xf32>
    %242 = tpu.reciprocal %241 {approx = true} : vector<8x8x1xf32> -> vector<8x8x1xf32>
    %243 = vector.broadcast %242 : vector<8x8x1xf32> to vector<8x8x8xf32>
    %244 = arith.mulf %239, %243 : vector<8x8x8xf32>
    %245 = arith.truncf %244 : vector<8x8x8xf32> to vector<8x8x8xbf16>
    %cst_78 = arith.constant dense<0.000000e+00> : vector<8x8x32xf32>
    %246 = tpu.matmul %245, %232, %cst_78 {dimension_numbers = #tpu.dot_dimension_numbers<[2], [1], [1], [2], [0, 0, 0, 1, 1, 2], [0], [0]>} : vector<8x8x8xbf16>, vector<8x8x32xbf16>, vector<8x8x32xf32> -> vector<8x8x32xf32>
    %247 = vector.shape_cast %246 : vector<8x8x32xf32> to vector<4x16x32xf32>
    %248 = vector.extract_strided_slice %247 {offsets = [0, 0, 0], sizes = [1, 16, 32], strides = [1, 1, 1]} : vector<4x16x32xf32> to vector<1x16x32xf32>
    %249 = vector.shape_cast %248 : vector<1x16x32xf32> to vector<16x32xf32>
    %250 = vector.extract_strided_slice %247 {offsets = [1, 0, 0], sizes = [1, 16, 32], strides = [1, 1, 1]} : vector<4x16x32xf32> to vector<1x16x32xf32>
    %251 = vector.shape_cast %250 : vector<1x16x32xf32> to vector<16x32xf32>
    %252 = vector.extract_strided_slice %247 {offsets = [2, 0, 0], sizes = [1, 16, 32], strides = [1, 1, 1]} : vector<4x16x32xf32> to vector<1x16x32xf32>
    %253 = vector.shape_cast %252 : vector<1x16x32xf32> to vector<16x32xf32>
    %254 = vector.extract_strided_slice %247 {offsets = [3, 0, 0], sizes = [1, 16, 32], strides = [1, 1, 1]} : vector<4x16x32xf32> to vector<1x16x32xf32>
    %255 = vector.shape_cast %254 : vector<1x16x32xf32> to vector<16x32xf32>
    %256 = tpu.concatenate %249, %251, %253, %255 in 1 : vector<16x32xf32>, vector<16x32xf32>, vector<16x32xf32>, vector<16x32xf32> -> vector<16x128xf32>
    %257 = arith.truncf %256 : vector<16x128xf32> to vector<16x128xbf16>
    %c1_79 = arith.constant 1 : index
    %c0_80 = arith.constant 0 : index
    %c0_81 = arith.constant 0 : index
    %258 = vector.load %arg7[%c1_79, %c0_80, %c0_81] : memref<2x128x128xbf16, #tpu.memory_space<vmem>>, vector<1x128x128xbf16>
    %259 = vector.shape_cast %258 : vector<1x128x128xbf16> to vector<128x128xbf16>
    %cst_82 = arith.constant dense<0.000000e+00> : vector<16x128xf32>
    %260 = tpu.matmul %257, %259, %cst_82 {dimension_numbers = #tpu.dot_dimension_numbers<[1], [0], [0], [1], [0, 0, 1, 1], [], []>} : vector<16x128xbf16>, vector<128x128xbf16>, vector<16x128xf32> -> vector<16x128xf32>
    %c1_83 = arith.constant 1 : index
    %c0_84 = arith.constant 0 : index
    %c0_85 = arith.constant 0 : index
    %261 = vector.load %arg8[%c1_83, %c0_84, %c0_85] : memref<2x1x128xf32, #tpu.memory_space<vmem>>, vector<1x1x128xf32>
    %262 = vector.shape_cast %261 : vector<1x1x128xf32> to vector<1x128xf32>
    %263 = vector.broadcast %262 : vector<1x128xf32> to vector<16x128xf32>
    %264 = arith.addf %260, %263 : vector<16x128xf32>
    %265 = arith.addf %188, %264 : vector<16x128xf32>
    %c1_86 = arith.constant 1 : index
    %c0_87 = arith.constant 0 : index
    %c0_88 = arith.constant 0 : index
    %266 = vector.load %arg9[%c1_86, %c0_87, %c0_88] : memref<2x1x128xf32, #tpu.memory_space<vmem>>, vector<1x1x128xf32>
    %267 = vector.shape_cast %266 : vector<1x1x128xf32> to vector<1x128xf32>
    %c1_89 = arith.constant 1 : index
    %c0_90 = arith.constant 0 : index
    %c0_91 = arith.constant 0 : index
    %268 = vector.load %arg10[%c1_89, %c0_90, %c0_91] : memref<2x1x128xf32, #tpu.memory_space<vmem>>, vector<1x1x128xf32>
    %269 = vector.shape_cast %268 : vector<1x1x128xf32> to vector<1x128xf32>
    %cst_92 = arith.constant dense<0.000000e+00> : vector<16xf32>
    %270 = vector.multi_reduction <add>, %265, %cst_92 [1] : vector<16x128xf32> to vector<16xf32>
    %271 = vector.shape_cast %270 : vector<16xf32> to vector<16x1xf32>
    %cst_93 = arith.constant 1.280000e+02 : f32
    %272 = vector.broadcast %cst_93 : f32 to vector<16x1xf32>
    %273 = arith.divf %271, %272 : vector<16x1xf32>
    %274 = vector.broadcast %273 : vector<16x1xf32> to vector<16x128xf32>
    %275 = arith.subf %265, %274 : vector<16x128xf32>
    %276 = arith.mulf %275, %275 : vector<16x128xf32>
    %cst_94 = arith.constant dense<0.000000e+00> : vector<16xf32>
    %277 = vector.multi_reduction <add>, %276, %cst_94 [1] : vector<16x128xf32> to vector<16xf32>
    %278 = vector.shape_cast %277 : vector<16xf32> to vector<16x1xf32>
    %cst_95 = arith.constant 1.280000e+02 : f32
    %279 = vector.broadcast %cst_95 : f32 to vector<16x1xf32>
    %280 = arith.divf %278, %279 : vector<16x1xf32>
    %281 = vector.broadcast %273 : vector<16x1xf32> to vector<16x128xf32>
    %282 = arith.subf %265, %281 : vector<16x128xf32>
    %cst_96 = arith.constant 9.99999996E-13 : f32
    %283 = vector.broadcast %cst_96 : f32 to vector<16x1xf32>
    %284 = arith.addf %280, %283 : vector<16x1xf32>
    %285 = math.rsqrt %284 : vector<16x1xf32>
    %286 = vector.broadcast %285 : vector<16x1xf32> to vector<16x128xf32>
    %287 = arith.mulf %282, %286 : vector<16x128xf32>
    %288 = vector.broadcast %267 : vector<1x128xf32> to vector<16x128xf32>
    %289 = arith.mulf %287, %288 : vector<16x128xf32>
    %290 = vector.broadcast %269 : vector<1x128xf32> to vector<16x128xf32>
    %291 = arith.addf %289, %290 : vector<16x128xf32>
    %292 = arith.truncf %291 : vector<16x128xf32> to vector<16x128xbf16>
    %c1_97 = arith.constant 1 : index
    %c0_98 = arith.constant 0 : index
    %c0_99 = arith.constant 0 : index
    %293 = vector.load %arg11[%c1_97, %c0_98, %c0_99] : memref<2x128x512xbf16, #tpu.memory_space<vmem>>, vector<1x128x512xbf16>
    %294 = vector.shape_cast %293 : vector<1x128x512xbf16> to vector<128x512xbf16>
    %cst_100 = arith.constant dense<0.000000e+00> : vector<16x512xf32>
    %295 = tpu.matmul %292, %294, %cst_100 {dimension_numbers = #tpu.dot_dimension_numbers<[1], [0], [0], [1], [0, 0, 1, 1], [], []>} : vector<16x128xbf16>, vector<128x512xbf16>, vector<16x512xf32> -> vector<16x512xf32>
    %c1_101 = arith.constant 1 : index
    %c0_102 = arith.constant 0 : index
    %c0_103 = arith.constant 0 : index
    %296 = vector.load %arg12[%c1_101, %c0_102, %c0_103] : memref<2x1x512xf32, #tpu.memory_space<vmem>>, vector<1x1x512xf32>
    %297 = vector.shape_cast %296 : vector<1x1x512xf32> to vector<1x512xf32>
    %298 = vector.broadcast %297 : vector<1x512xf32> to vector<16x512xf32>
    %299 = arith.addf %295, %298 : vector<16x512xf32>
    %300 = arith.mulf %299, %299 : vector<16x512xf32>
    %301 = arith.mulf %299, %300 : vector<16x512xf32>
    %cst_104 = arith.constant 4.471500e-02 : f32
    %302 = vector.broadcast %cst_104 : f32 to vector<16x512xf32>
    %303 = arith.mulf %302, %301 : vector<16x512xf32>
    %304 = arith.addf %299, %303 : vector<16x512xf32>
    %cst_105 = arith.constant 0.797884583 : f32
    %305 = vector.broadcast %cst_105 : f32 to vector<16x512xf32>
    %306 = arith.mulf %305, %304 : vector<16x512xf32>
    %307 = math.tanh %306 : vector<16x512xf32>
    %cst_106 = arith.constant 1.000000e+00 : f32
    %308 = vector.broadcast %cst_106 : f32 to vector<16x512xf32>
    %309 = arith.addf %308, %307 : vector<16x512xf32>
    %cst_107 = arith.constant 5.000000e-01 : f32
    %310 = vector.broadcast %cst_107 : f32 to vector<16x512xf32>
    %311 = arith.mulf %310, %309 : vector<16x512xf32>
    %312 = arith.mulf %299, %311 : vector<16x512xf32>
    %313 = arith.truncf %312 : vector<16x512xf32> to vector<16x512xbf16>
    %c1_108 = arith.constant 1 : index
    %c0_109 = arith.constant 0 : index
    %c0_110 = arith.constant 0 : index
    %314 = vector.load %arg13[%c1_108, %c0_109, %c0_110] : memref<2x512x128xbf16, #tpu.memory_space<vmem>>, vector<1x512x128xbf16>
    %315 = vector.shape_cast %314 : vector<1x512x128xbf16> to vector<512x128xbf16>
    %cst_111 = arith.constant dense<0.000000e+00> : vector<16x128xf32>
    %316 = tpu.matmul %313, %315, %cst_111 {dimension_numbers = #tpu.dot_dimension_numbers<[1], [0], [0], [1], [0, 0, 1, 1], [], []>} : vector<16x512xbf16>, vector<512x128xbf16>, vector<16x128xf32> -> vector<16x128xf32>
    %c1_112 = arith.constant 1 : index
    %c0_113 = arith.constant 0 : index
    %c0_114 = arith.constant 0 : index
    %317 = vector.load %arg14[%c1_112, %c0_113, %c0_114] : memref<2x1x128xf32, #tpu.memory_space<vmem>>, vector<1x1x128xf32>
    %318 = vector.shape_cast %317 : vector<1x1x128xf32> to vector<1x128xf32>
    %319 = vector.broadcast %318 : vector<1x128xf32> to vector<16x128xf32>
    %320 = arith.addf %316, %319 : vector<16x128xf32>
    %321 = arith.addf %291, %320 : vector<16x128xf32>
    %c1_115 = arith.constant 1 : index
    %c0_116 = arith.constant 0 : index
    %c0_117 = arith.constant 0 : index
    %322 = vector.load %arg15[%c1_115, %c0_116, %c0_117] : memref<2x1x128xf32, #tpu.memory_space<vmem>>, vector<1x1x128xf32>
    %323 = vector.shape_cast %322 : vector<1x1x128xf32> to vector<1x128xf32>
    %c1_118 = arith.constant 1 : index
    %c0_119 = arith.constant 0 : index
    %c0_120 = arith.constant 0 : index
    %324 = vector.load %arg16[%c1_118, %c0_119, %c0_120] : memref<2x1x128xf32, #tpu.memory_space<vmem>>, vector<1x1x128xf32>
    %325 = vector.shape_cast %324 : vector<1x1x128xf32> to vector<1x128xf32>
    %cst_121 = arith.constant dense<0.000000e+00> : vector<16xf32>
    %326 = vector.multi_reduction <add>, %321, %cst_121 [1] : vector<16x128xf32> to vector<16xf32>
    %327 = vector.shape_cast %326 : vector<16xf32> to vector<16x1xf32>
    %cst_122 = arith.constant 1.280000e+02 : f32
    %328 = vector.broadcast %cst_122 : f32 to vector<16x1xf32>
    %329 = arith.divf %327, %328 : vector<16x1xf32>
    %330 = vector.broadcast %329 : vector<16x1xf32> to vector<16x128xf32>
    %331 = arith.subf %321, %330 : vector<16x128xf32>
    %332 = arith.mulf %331, %331 : vector<16x128xf32>
    %cst_123 = arith.constant dense<0.000000e+00> : vector<16xf32>
    %333 = vector.multi_reduction <add>, %332, %cst_123 [1] : vector<16x128xf32> to vector<16xf32>
    %334 = vector.shape_cast %333 : vector<16xf32> to vector<16x1xf32>
    %cst_124 = arith.constant 1.280000e+02 : f32
    %335 = vector.broadcast %cst_124 : f32 to vector<16x1xf32>
    %336 = arith.divf %334, %335 : vector<16x1xf32>
    %337 = vector.broadcast %329 : vector<16x1xf32> to vector<16x128xf32>
    %338 = arith.subf %321, %337 : vector<16x128xf32>
    %cst_125 = arith.constant 9.99999996E-13 : f32
    %339 = vector.broadcast %cst_125 : f32 to vector<16x1xf32>
    %340 = arith.addf %336, %339 : vector<16x1xf32>
    %341 = math.rsqrt %340 : vector<16x1xf32>
    %342 = vector.broadcast %341 : vector<16x1xf32> to vector<16x128xf32>
    %343 = arith.mulf %338, %342 : vector<16x128xf32>
    %344 = vector.broadcast %323 : vector<1x128xf32> to vector<16x128xf32>
    %345 = arith.mulf %343, %344 : vector<16x128xf32>
    %346 = vector.broadcast %325 : vector<1x128xf32> to vector<16x128xf32>
    %347 = arith.addf %345, %346 : vector<16x128xf32>
    %c0_126 = arith.constant 0 : index
    %c0_127 = arith.constant 0 : index
    %348 = vector.load %arg17[%c0_126, %c0_127] : memref<16x128xf32, #tpu.memory_space<vmem>>, vector<16x128xf32>
    tpu.vector_store %arg17[%c0_126, %c0_127], %347 {strides = array<i32>} : memref<16x128xf32, #tpu.memory_space<vmem>>, vector<16x128xf32>,
    return
  }
  func.func @transform_0(%arg0: i32) -> (i32, i32) {
    %c0_i32 = arith.constant 0 : i32
    %c0_i32_0 = arith.constant 0 : i32
    %c0_i32_1 = arith.constant 0 : i32
    return %c0_i32, %c0_i32_0 : i32, i32
  }
  func.func @transform_1(%arg0: i32) -> (i32, i32) {
    %c0_i32 = arith.constant 0 : i32
    %c0_i32_0 = arith.constant 0 : i32
    %c0_i32_1 = arith.constant 0 : i32
    return %c0_i32, %c0_i32_0 : i32, i32
  }
  func.func @transform_2(%arg0: i32) -> (i32, i32) {
    %c0_i32 = arith.constant 0 : i32
    %c0_i32_0 = arith.constant 0 : i32
    %c0_i32_1 = arith.constant 0 : i32
    return %c0_i32, %c0_i32_0 : i32, i32
  }
  func.func @transform_3(%arg0: i32) -> (i32, i32) {
    %c0_i32 = arith.constant 0 : i32
    %c0_i32_0 = arith.constant 0 : i32
    %c0_i32_1 = arith.constant 0 : i32
    return %c0_i32, %c0_i32_0 : i32, i32
  }
  func.func @transform_4(%arg0: i32) -> (i32, i32, i32) {
    %c0_i32 = arith.constant 0 : i32
    %c0_i32_0 = arith.constant 0 : i32
    %c0_i32_1 = arith.constant 0 : i32
    %c0_i32_2 = arith.constant 0 : i32
    return %c0_i32, %c0_i32_0, %c0_i32_1 : i32, i32, i32
  }
  func.func @transform_5(%arg0: i32) -> (i32, i32, i32) {
    %c0_i32 = arith.constant 0 : i32
    %c0_i32_0 = arith.constant 0 : i32
    %c0_i32_1 = arith.constant 0 : i32
    %c0_i32_2 = arith.constant 0 : i32
    return %c0_i32, %c0_i32_0, %c0_i32_1 : i32, i32, i32
  }
  func.func @transform_6(%arg0: i32) -> (i32, i32, i32) {
    %c0_i32 = arith.constant 0 : i32
    %c0_i32_0 = arith.constant 0 : i32
    %c0_i32_1 = arith.constant 0 : i32
    %c0_i32_2 = arith.constant 0 : i32
    return %c0_i32, %c0_i32_0, %c0_i32_1 : i32, i32, i32
  }
  func.func @transform_7(%arg0: i32) -> (i32, i32, i32) {
    %c0_i32 = arith.constant 0 : i32
    %c0_i32_0 = arith.constant 0 : i32
    %c0_i32_1 = arith.constant 0 : i32
    %c0_i32_2 = arith.constant 0 : i32
    return %c0_i32, %c0_i32_0, %c0_i32_1 : i32, i32, i32
  }
  func.func @transform_8(%arg0: i32) -> (i32, i32, i32) {
    %c0_i32 = arith.constant 0 : i32
    %c0_i32_0 = arith.constant 0 : i32
    %c0_i32_1 = arith.constant 0 : i32
    %c0_i32_2 = arith.constant 0 : i32
    return %c0_i32, %c0_i32_0, %c0_i32_1 : i32, i32, i32
  }
  func.func @transform_9(%arg0: i32) -> (i32, i32, i32) {
    %c0_i32 = arith.constant 0 : i32
    %c0_i32_0 = arith.constant 0 : i32
    %c0_i32_1 = arith.constant 0 : i32
    %c0_i32_2 = arith.constant 0 : i32
    return %c0_i32, %c0_i32_0, %c0_i32_1 : i32, i32, i32
  }
  func.func @transform_10(%arg0: i32) -> (i32, i32, i32) {
    %c0_i32 = arith.constant 0 : i32
    %c0_i32_0 = arith.constant 0 : i32
    %c0_i32_1 = arith.constant 0 : i32
    %c0_i32_2 = arith.constant 0 : i32
    return %c0_i32, %c0_i32_0, %c0_i32_1 : i32, i32, i32
  }
  func.func @transform_11(%arg0: i32) -> (i32, i32, i32) {
    %c0_i32 = arith.constant 0 : i32
    %c0_i32_0 = arith.constant 0 : i32
    %c0_i32_1 = arith.constant 0 : i32
    %c0_i32_2 = arith.constant 0 : i32
    return %c0_i32, %c0_i32_0, %c0_i32_1 : i32, i32, i32
  }
  func.func @transform_12(%arg0: i32) -> (i32, i32, i32) {
    %c0_i32 = arith.constant 0 : i32
    %c0_i32_0 = arith.constant 0 : i32
    %c0_i32_1 = arith.constant 0 : i32
    %c0_i32_2 = arith.constant 0 : i32
    return %c0_i32, %c0_i32_0, %c0_i32_1 : i32, i32, i32
  }
  func.func @transform_13(%arg0: i32) -> (i32, i32, i32) {
    %c0_i32 = arith.constant 0 : i32
    %c0_i32_0 = arith.constant 0 : i32
    %c0_i32_1 = arith.constant 0 : i32
    %c0_i32_2 = arith.constant 0 : i32
    return %c0_i32, %c0_i32_0, %c0_i32_1 : i32, i32, i32
  }
  func.func @transform_14(%arg0: i32) -> (i32, i32, i32) {
    %c0_i32 = arith.constant 0 : i32
    %c0_i32_0 = arith.constant 0 : i32
    %c0_i32_1 = arith.constant 0 : i32
    %c0_i32_2 = arith.constant 0 : i32
    return %c0_i32, %c0_i32_0, %c0_i32_1 : i32, i32, i32
  }
  func.func @transform_15(%arg0: i32) -> (i32, i32, i32) {
    %c0_i32 = arith.constant 0 : i32
    %c0_i32_0 = arith.constant 0 : i32
    %c0_i32_1 = arith.constant 0 : i32
    %c0_i32_2 = arith.constant 0 : i32
    return %c0_i32, %c0_i32_0, %c0_i32_1 : i32, i32, i32
  }
  func.func @transform_16(%arg0: i32) -> (i32, i32) {
    %c0_i32 = arith.constant 0 : i32
    %c0_i32_0 = arith.constant 0 : i32
    %c0_i32_1 = arith.constant 0 : i32
    return %c0_i32, %c0_i32_0 : i32, i32
  }
}

</mosaic_0001>

<llo_original>
// kernel: multitask_bert_forward.1
$region0: #{multitask_bert_forward.1}
  #allocation0 [shape = 'u32[]', space=smem, size = 0x4, offset = 0x4, fixed_abs, tag = 'smem constant byte address 0x4 - core index']
  #allocation1 [shape = 'u32[144,128]{1,0:T(1,128)}', space=vmem, size = 0x12000, scoped, tag = 'internal scratch']
  %s0 = inlined_call_operand.vmem [shape: f32[16,128], index: 0, kind: input, shape index: {}]
  %s1 = inlined_call_operand.vmem [shape: f32[2,8], index: 1, kind: input, shape index: {}]
  %s2 = inlined_call_operand.vmem [shape: f32[1,128], index: 2, kind: input, shape index: {}]
  %s3 = inlined_call_operand.vmem [shape: f32[1,128], index: 3, kind: input, shape index: {}]
  %s4 = inlined_call_operand.hbm [shape: bf16[2,128,384], index: 4, kind: input, shape index: {}]
  %s5 = inlined_call_operand.vmem [shape: f32[2,1,384], index: 5, kind: input, shape index: {}]
  %s6 = inlined_call_operand.vmem [shape: bf16[2,128,128], index: 6, kind: input, shape index: {}]
  %s7 = inlined_call_operand.vmem [shape: f32[2,1,128], index: 7, kind: input, shape index: {}]
  %s8 = inlined_call_operand.vmem [shape: f32[2,1,128], index: 8, kind: input, shape index: {}]
  %s9 = inlined_call_operand.vmem [shape: f32[2,1,128], index: 9, kind: input, shape index: {}]
  %s10 = inlined_call_operand.hbm [shape: bf16[2,128,512], index: 10, kind: input, shape index: {}]
  %s11 = inlined_call_operand.vmem [shape: f32[2,1,512], index: 11, kind: input, shape index: {}]
  %s12 = inlined_call_operand.hbm [shape: bf16[2,512,128], index: 12, kind: input, shape index: {}]
  %s13 = inlined_call_operand.vmem [shape: f32[2,1,128], index: 13, kind: input, shape index: {}]
  %s14 = inlined_call_operand.vmem [shape: f32[2,1,128], index: 14, kind: input, shape index: {}]
  %s15 = inlined_call_operand.vmem [shape: f32[2,1,128], index: 15, kind: input, shape index: {}]
  %s16 = inlined_call_operand.vmem [shape: f32[16,128], index: 16, kind: output, shape index: {}]
  %s17 = sld [smem:[#allocation0]]
  $region86: #{multitask_bert_forward.1} parent=0
    _
  %s19 = ssub.s32 1, %s17
  %s20 = scalar_select 0, %s19, %s17
  $region1: #{multitask_bert_forward.1} parent=0
    #allocation2 [shape = 'u8[196608]{0}', space=vmem, size = 0x30000, scoped, tag = 'input window, operand 4, single buffered']
    #allocation3 [shape = 's32[1]{0}', space=sflag, size = 0x4, scoped, tag = 'scoped memory for multitask_bert_forward.1']
    #allocation4 [shape = 'u8[262144]{0}', space=vmem, size = 0x40000, scoped, tag = 'input window, operand 10, single buffered']
    #allocation5 [shape = 's32[1]{0}', space=sflag, size = 0x4, scoped, tag = 'scoped memory for multitask_bert_forward.1']
    #allocation6 [shape = 'u8[262144]{0}', space=vmem, size = 0x40000, scoped, tag = 'input window, operand 12, single buffered']
    %21 = vsyncpa [#allocation3], 0
    %22 = vsyncpa [#allocation5], 0
    // Predicated region
    $region2: #{multitask_bert_forward.1} parent=1 // pred_check
      _
    $region3: #{multitask_bert_forward.1} parent=1 // pred_check_branch
      %24 = sbr.rel (0) target = $region5
    $region4: #{multitask_bert_forward.1} parent=1 // pred_region
      _
    $region5: #{multitask_bert_forward.1} parent=1 // pred_fallthru
      _
    // Predicated region
    $region6: #{multitask_bert_forward.1} parent=1 // pred_check
      _
    $region7: #{multitask_bert_forward.1} parent=1 // pred_check_branch
      %26 = sbr.rel (0) target = $region9
    $region8: #{multitask_bert_forward.1} parent=1 // pred_region
      _
    $region9: #{multitask_bert_forward.1} parent=1 // pred_fallthru
      _
    // Predicated region
    $region10: #{multitask_bert_forward.1} parent=1 // pred_check
      _
    $region11: #{multitask_bert_forward.1} parent=1 // pred_check_branch
      %28 = sbr.rel (0) target = $region13
    $region12: #{multitask_bert_forward.1} parent=1 // pred_region
      _
    $region13: #{multitask_bert_forward.1} parent=1 // pred_fallthru
      _
    // Predicated region
    $region14: #{multitask_bert_forward.1} parent=1 // pred_check
      _
    $region15: #{multitask_bert_forward.1} parent=1 // pred_check_branch
      %30 = sbr.rel (0) target = $region17
    $region16: #{multitask_bert_forward.1} parent=1 // pred_region
      _
    $region17: #{multitask_bert_forward.1} parent=1 // pred_fallthru
      _
    // Predicated region
    $region18: #{multitask_bert_forward.1} parent=1 // pred_check
      _
    $region19: #{multitask_bert_forward.1} parent=1 // pred_check_branch
      %32 = sbr.rel (0) target = $region21
    $region20: #{multitask_bert_forward.1} parent=1 // pred_region
      %s34 = ssub.s32 6144, 6144
      %35 = vsyncadd [#allocation3], %s34
      %s36 = sshll.u32 [#allocation2], 4
      %s37 = int_to_ptr.vmem [resolvable:$true] %s36
      %42 = dma.hbm_to_vmem [thread:$0]  %s4, 6144, %s37, [#allocation3], 192, 192, 12
    $region21: #{multitask_bert_forward.1} parent=1 // pred_fallthru
      _
    // Predicated region
    $region22: #{multitask_bert_forward.1} parent=1 // pred_check
      _
    $region23: #{multitask_bert_forward.1} parent=1 // pred_check_branch
      %44 = sbr.rel (0) target = $region25
    $region24: #{multitask_bert_forward.1} parent=1 // pred_region
      _
    $region25: #{multitask_bert_forward.1} parent=1 // pred_fallthru
      _
    // Predicated region
    $region26: #{multitask_bert_forward.1} parent=1 // pred_check
      _
    $region27: #{multitask_bert_forward.1} parent=1 // pred_check_branch
      %46 = sbr.rel (0) target = $region29
    $region28: #{multitask_bert_forward.1} parent=1 // pred_region
      _
    $region29: #{multitask_bert_forward.1} parent=1 // pred_fallthru
      _
    // Predicated region
    $region30: #{multitask_bert_forward.1} parent=1 // pred_check
      _
    $region31: #{multitask_bert_forward.1} parent=1 // pred_check_branch
      %48 = sbr.rel (0) target = $region33
    $region32: #{multitask_bert_forward.1} parent=1 // pred_region
      _
    $region33: #{multitask_bert_forward.1} parent=1 // pred_fallthru
      _
    // Predicated region
    $region34: #{multitask_bert_forward.1} parent=1 // pred_check
      _
    $region35: #{multitask_bert_forward.1} parent=1 // pred_check_branch
      %50 = sbr.rel (0) target = $region37
    $region36: #{multitask_bert_forward.1} parent=1 // pred_region
      _
    $region37: #{multitask_bert_forward.1} parent=1 // pred_fallthru
      _
    // Predicated region
    $region38: #{multitask_bert_forward.1} parent=1 // pred_check
      _
    $region39: #{multitask_bert_forward.1} parent=1 // pred_check_branch
      %52 = sbr.rel (0) target = $region41
    $region40: #{multitask_bert_forward.1} parent=1 // pred_region
      _
    $region41: #{multitask_bert_forward.1} parent=1 // pred_fallthru
      _
    // Predicated region
    $region42: #{multitask_bert_forward.1} parent=1 // pred_check
      _
    $region43: #{multitask_bert_forward.1} parent=1 // pred_check_branch
      %54 = sbr.rel (0) target = $region45
    $region44: #{multitask_bert_forward.1} parent=1 // pred_region
      %s56 = ssub.s32 8192, 8192
      %57 = vsyncadd [#allocation5], %s56
      %s58 = sshll.u32 [#allocation4], 4
      %s59 = int_to_ptr.vmem [resolvable:$true] %s58
      %64 = dma.hbm_to_vmem [thread:$0]  %s10, 8192, %s59, [#allocation5], 256, 256, 16
    $region45: #{multitask_bert_forward.1} parent=1 // pred_fallthru
      _
    // Predicated region
    $region46: #{multitask_bert_forward.1} parent=1 // pred_check
      _
    $region47: #{multitask_bert_forward.1} parent=1 // pred_check_branch
      %66 = sbr.rel (0) target = $region49
    $region48: #{multitask_bert_forward.1} parent=1 // pred_region
      _
    $region49: #{multitask_bert_forward.1} parent=1 // pred_fallthru
      _
    // Predicated region
    $region50: #{multitask_bert_forward.1} parent=1 // pred_check
      _
    $region51: #{multitask_bert_forward.1} parent=1 // pred_check_branch
      %68 = sbr.rel (0) target = $region53
    $region52: #{multitask_bert_forward.1} parent=1 // pred_region
      %s70 = ssub.s32 8192, 8192
      %71 = vsyncadd [#allocation5], %s70
      %s72 = sshll.u32 [#allocation6], 4
      %s73 = int_to_ptr.vmem [resolvable:$true] %s72
      %78 = dma.hbm_to_vmem [thread:$0]  %s12, 8192, %s73, [#allocation5], 64, 64, 4
    $region53: #{multitask_bert_forward.1} parent=1 // pred_fallthru
      _
    // Predicated region
    $region54: #{multitask_bert_forward.1} parent=1 // pred_check
      _
    $region55: #{multitask_bert_forward.1} parent=1 // pred_check_branch
      %80 = sbr.rel (0) target = $region57
    $region56: #{multitask_bert_forward.1} parent=1 // pred_region
      _
    $region57: #{multitask_bert_forward.1} parent=1 // pred_fallthru
      _
    // Predicated region
    $region58: #{multitask_bert_forward.1} parent=1 // pred_check
      _
    $region59: #{multitask_bert_forward.1} parent=1 // pred_check_branch
      %82 = sbr.rel (0) target = $region61
    $region60: #{multitask_bert_forward.1} parent=1 // pred_region
      _
    $region61: #{multitask_bert_forward.1} parent=1 // pred_fallthru
      _
    // Predicated region
    $region62: #{multitask_bert_forward.1} parent=1 // pred_check
      _
    $region63: #{multitask_bert_forward.1} parent=1 // pred_check_branch
      %84 = sbr.rel (0) target = $region65
    $region64: #{multitask_bert_forward.1} parent=1 // pred_region
      _
    $region65: #{multitask_bert_forward.1} parent=1 // pred_fallthru
      _
    // Predicated region
    $region66: #{multitask_bert_forward.1} parent=1 // pred_check
      _
    $region67: #{multitask_bert_forward.1} parent=1 // pred_check_branch
      %86 = sbr.rel (0) target = $region69
    $region68: #{multitask_bert_forward.1} parent=1 // pred_region
      %87 = dma.done [#allocation3], 6144
    $region69: #{multitask_bert_forward.1} parent=1 // pred_fallthru
      _
    // Predicated region
    $region70: #{multitask_bert_forward.1} parent=1 // pred_check
      _
    $region71: #{multitask_bert_forward.1} parent=1 // pred_check_branch
      %89 = sbr.rel (0) target = $region73
    $region72: #{multitask_bert_forward.1} parent=1 // pred_region
      %90 = dma.done [#allocation5], 8192
    $region73: #{multitask_bert_forward.1} parent=1 // pred_fallthru
      _
    // Predicated region
    $region74: #{multitask_bert_forward.1} parent=1 // pred_check
      _
    $region75: #{multitask_bert_forward.1} parent=1 // pred_check_branch
      %92 = sbr.rel (0) target = $region77
    $region76: #{multitask_bert_forward.1} parent=1 // pred_region
      %93 = dma.done [#allocation5], 8192
    $region77: #{multitask_bert_forward.1} parent=1 // pred_fallthru
      _
    %v95 = vld [vmem:[%s0] sm:$0xff]
    %v96 = vld [vmem:[%s0 + $0x8] sm:$0xff]
    %v97 = vld [vmem:[%s2] sm:$0x1]
    %v98 = vld [vmem:[%s3] sm:$0x1]
    %99 = vadd.xlane.f32.xlu0 %v95
    %v100 = vpop.xlane.xlu0 %99
    %101 = vadd.xlane.f32.xlu0 %v96
    %v102 = vpop.xlane.xlu0 %101
    %v103 = vrcp.pop 128.0
    %v104 = vmul.f32 %v100, %v103
    %v105 = vmul.f32 %v102, %v103
    %v106 = vsub.f32 %v95, %v104
    %v107 = vsub.f32 %v96, %v105
    %v108 = vmul.f32 %v106, %v106
    %v109 = vmul.f32 %v107, %v107
    %110 = vadd.xlane.f32.xlu0 %v108
    %v111 = vpop.xlane.xlu0 %110
    %112 = vadd.xlane.f32.xlu0 %v109
    %v113 = vpop.xlane.xlu0 %112
    %v114 = vmul.f32 %v111, %v103
    %v115 = vmul.f32 %v113, %v103
    %v116 = vadd.f32 %v114, 1e-12
    %v117 = vadd.f32 %v115, 1e-12
    %v118 = vrsqrt.pop %v116
    %v119 = vrsqrt.pop %v117
    %v120 = vmul.f32 %v106, %v118
    %v121 = vmul.f32 %v107, %v119
    %v123 = vlaneseq
    %v124 = vshrl.u32 %v123, 7
    %v125 = vsub.s32 0, %v124
    %v126 = vrot.slane %v97, %v125
    %v128 = vmul.f32 %v120, %v126
    %v129 = vmul.f32 %v121, %v126
    %v131 = vlaneseq
    %v132 = vshrl.u32 %v131, 7
    %v133 = vsub.s32 0, %v132
    %v134 = vrot.slane %v98, %v133
    %v136 = vadd.f32 %v128, %v134
    %v137 = vadd.f32 %v129, %v134
    %v138 = vld [vmem:[%s1] sm:$0x3]
    %v141 = vunpack.c.l.s4 1966171168
    %v142 = vunpack.c.0.s8 %v141
    %v143 = vlaneseq
    %v144 = vshrl.u32 %v143, 7
    %v145 = vsub.s32 %v142, %v144
    %v146 = vrot.slane %v138, %v145
    %v147 = vcombine.high %v146, %v146
    %v149 = vunpack.c.l.s4 1966171168
    %v150 = vunpack.c.0.s8 %v149
    %v151 = vlaneseq
    %v152 = vshrl.u32 %v151, 7
    %v153 = vsub.s32 %v150, %v152
    %v154 = vrot.slane %v146, %v153
    %v156 = vunpack.c.l.s4 1966171168
    %v157 = vunpack.c.0.s8 %v156
    %v158 = vlaneseq
    %v159 = vshrl.u32 %v158, 7
    %v160 = vsub.s32 %v157, %v159
    %v161 = vrot.slane %v147, %v160
    %v162 = vlaneseq
    %v163 = vshrl.u32 %v162, 7
    %v164 = vsub.s32 0, %v163
    %v165 = vrot.slane %v154, %v164
    %v166 = vlaneseq
    %v167 = vshrl.u32 %v166, 7
    %v168 = vsub.s32 0, %v167
    %v169 = vrot.slane %v161, %v168
    %v172 = vpack.c.bf16 %v137, %v136
    %v173 = vld [vmem:[#allocation2] sm:$0xff]
    %v174 = vld [vmem:[#allocation2 + $0x8] sm:$0xf]
    %v175 = vld [vmem:[#allocation2 + $0xc] sm:$0xff]
    %v176 = vld [vmem:[#allocation2 + $0x14] sm:$0xf]
    %v177 = vld [vmem:[#allocation2 + $0x18] sm:$0xff]
    %v178 = vld [vmem:[#allocation2 + $0x20] sm:$0xf]
    %v179 = vld [vmem:[#allocation2 + $0x24] sm:$0xff]
    %v180 = vld [vmem:[#allocation2 + $0x2c] sm:$0xf]
    %v181 = vld [vmem:[#allocation2 + $0x30] sm:$0xff]
    %v182 = vld [vmem:[#allocation2 + $0x38] sm:$0xf]
    %v183 = vld [vmem:[#allocation2 + $0x3c] sm:$0xff]
    %v184 = vld [vmem:[#allocation2 + $0x44] sm:$0xf]
    %v185 = vld [vmem:[#allocation2 + $0x48] sm:$0xff]
    %v186 = vld [vmem:[#allocation2 + $0x50] sm:$0xf]
    %v187 = vld [vmem:[#allocation2 + $0x54] sm:$0xff]
    %v188 = vld [vmem:[#allocation2 + $0x5c] sm:$0xf]
    %v189 = vld [vmem:[#allocation2 + $0x60] sm:$0xff]
    %v190 = vld [vmem:[#allocation2 + $0x68] sm:$0xf]
    %v191 = vld [vmem:[#allocation2 + $0x6c] sm:$0xff]
    %v192 = vld [vmem:[#allocation2 + $0x74] sm:$0xf]
    %v193 = vld [vmem:[#allocation2 + $0x78] sm:$0xff]
    %v194 = vld [vmem:[#allocation2 + $0x80] sm:$0xf]
    %v195 = vld [vmem:[#allocation2 + $0x84] sm:$0xff]
    %v196 = vld [vmem:[#allocation2 + $0x8c] sm:$0xf]
    %v197 = vld [vmem:[#allocation2 + $0x90] sm:$0xff]
    %v198 = vld [vmem:[#allocation2 + $0x98] sm:$0xf]
    %v199 = vld [vmem:[#allocation2 + $0x9c] sm:$0xff]
    %v200 = vld [vmem:[#allocation2 + $0xa4] sm:$0xf]
    %v201 = vld [vmem:[#allocation2 + $0xa8] sm:$0xff]
    %v202 = vld [vmem:[#allocation2 + $0xb0] sm:$0xf]
    %v203 = vld [vmem:[#allocation2 + $0xb4] sm:$0xff]
    %v204 = vld [vmem:[#allocation2 + $0xbc] sm:$0xf]
    %v205 = vld [vmem:[%s5] sm:$0x7]
    %v207 = vlaneseq
    %v208 = vshrl.u32 %v207, 7
    %v209 = vsub.s32 0, %v208
    %v210 = vrot.slane %v205, %v209
    %v211 = vlaneseq
    %v212 = vshrl.u32 %v211, 7
    %v213 = vsub.s32 1, %v212
    %v214 = vrot.slane %v205, %v213
    %v215 = vlaneseq
    %v216 = vshrl.u32 %v215, 7
    %v217 = vsub.s32 2, %v216
    %v218 = vrot.slane %v205, %v217
    %v254 = vunpack.c.l.b16 %v173
    %v255 = vunpack.c.h.b16 %v173
    %v256 = vunpack.c.l.b16 %v174
    %v257 = vunpack.c.l.b16 %v175
    %v258 = vunpack.c.h.b16 %v175
    %v259 = vunpack.c.l.b16 %v176
    %v260 = vunpack.c.l.b16 %v177
    %v261 = vunpack.c.h.b16 %v177
    %v262 = vunpack.c.l.b16 %v178
    %v263 = vunpack.c.l.b16 %v179
    %v264 = vunpack.c.h.b16 %v179
    %v265 = vunpack.c.l.b16 %v180
    %v266 = vunpack.c.l.b16 %v181
    %v267 = vunpack.c.h.b16 %v181
    %v268 = vunpack.c.l.b16 %v182
    %v269 = vunpack.c.l.b16 %v183
    %v270 = vunpack.c.h.b16 %v183
    %v271 = vunpack.c.l.b16 %v184
    %v272 = vunpack.c.l.b16 %v185
    %v273 = vunpack.c.h.b16 %v185
    %v274 = vunpack.c.l.b16 %v186
    %v275 = vunpack.c.l.b16 %v187
    %v276 = vunpack.c.h.b16 %v187
    %v277 = vunpack.c.l.b16 %v188
    %v278 = vunpack.c.l.b16 %v189
    %v279 = vunpack.c.h.b16 %v189
    %v280 = vunpack.c.l.b16 %v190
    %v281 = vunpack.c.l.b16 %v191
    %v282 = vunpack.c.h.b16 %v191
    %v283 = vunpack.c.l.b16 %v192
    %v284 = vunpack.c.l.b16 %v193
    %v285 = vunpack.c.h.b16 %v193
    %v286 = vunpack.c.l.b16 %v194
    %v287 = vunpack.c.l.b16 %v195
    %v288 = vunpack.c.h.b16 %v195
    %v289 = vunpack.c.l.b16 %v196
    %v290 = vunpack.c.l.b16 %v197
    %v291 = vunpack.c.h.b16 %v197
    %v292 = vunpack.c.l.b16 %v198
    %v293 = vunpack.c.l.b16 %v199
    %v294 = vunpack.c.h.b16 %v199
    %v295 = vunpack.c.l.b16 %v200
    %v296 = vunpack.c.l.b16 %v201
    %v297 = vunpack.c.h.b16 %v201
    %v298 = vunpack.c.l.b16 %v202
    %v299 = vunpack.c.l.b16 %v203
    %v300 = vunpack.c.h.b16 %v203
    %v301 = vunpack.c.l.b16 %v204
    %v302 = vpack.c.b16 %v257, %v254
    %v303 = vpack.c.b16 %v258, %v255
    %v304 = vpack.c.b16 %v259, %v256
    %v305 = vpack.c.b16 %v263, %v260
    %v306 = vpack.c.b16 %v264, %v261
    %v307 = vpack.c.b16 %v265, %v262
    %v308 = vpack.c.b16 %v269, %v266
    %v309 = vpack.c.b16 %v270, %v267
    %v310 = vpack.c.b16 %v271, %v268
    %v311 = vpack.c.b16 %v275, %v272
    %v312 = vpack.c.b16 %v276, %v273
    %v313 = vpack.c.b16 %v277, %v274
    %v314 = vpack.c.b16 %v281, %v278
    %v315 = vpack.c.b16 %v282, %v279
    %v316 = vpack.c.b16 %v283, %v280
    %v317 = vpack.c.b16 %v287, %v284
    %v318 = vpack.c.b16 %v288, %v285
    %v319 = vpack.c.b16 %v289, %v286
    %v320 = vpack.c.b16 %v293, %v290
    %v321 = vpack.c.b16 %v294, %v291
    %v322 = vpack.c.b16 %v295, %v292
    %v323 = vpack.c.b16 %v299, %v296
    %v324 = vpack.c.b16 %v300, %v297
    %v325 = vpack.c.b16 %v301, %v298
    %350 = vmatprep.subr.bf16.mxu0 %v303
    %351 = vmatpush1.bf16.msra.mxu0 %v302
    %352 = vmatprep.subr.bf16.mxu0 %v306
    %353 = vmatpush1.bf16.msra.mxu0 %v305
    %354 = vmatprep.subr.bf16.mxu0 %v309
    %355 = vmatpush1.bf16.msra.mxu0 %v308
    %356 = vmatprep.subr.bf16.mxu0 %v312
    %357 = vmatpush1.bf16.msra.mxu0 %v311
    %358 = vmatprep.subr.bf16.mxu0 %v315
    %359 = vmatpush1.bf16.msra.mxu0 %v314
    %360 = vmatprep.subr.bf16.mxu0 %v318
    %361 = vmatpush1.bf16.msra.mxu0 %v317
    %362 = vmatprep.subr.bf16.mxu0 %v321
    %363 = vmatpush1.bf16.msra.mxu0 %v320
    %364 = vmatprep.subr.bf16.mxu0 %v324
    %365 = vmatpush1.bf16.msra.mxu0 %v323
    %366 = vmatprep.subr.bf16.mxu0 0
    %367 = vmatpush1.bf16.msra.mxu0 0
    %368 = vmatprep.subr.bf16.mxu0 0
    %369 = vmatpush1.bf16.msra.mxu0 0
    %370 = vmatprep.subr.bf16.mxu0 0
    %371 = vmatpush1.bf16.msra.mxu0 0
    %372 = vmatprep.subr.bf16.mxu0 0
    %373 = vmatpush1.bf16.msra.mxu0 0
    %374 = vmatprep.subr.bf16.mxu0 0
    %375 = vmatpush1.bf16.msra.mxu0 0
    %376 = vmatprep.subr.bf16.mxu0 0
    %377 = vmatpush1.bf16.msra.mxu0 0
    %378 = vmatprep.subr.bf16.mxu0 0
    %379 = vmatpush1.bf16.msra.mxu0 0
    %380 = vmatprep.subr.bf16.mxu0 0
    %381 = vmatpush1.bf16.msra.mxu0 0
    %382 = vmatprep.mubr.bf16.mxu0 0
    %383 = vmatmul.mubr.bf16.gmra.mrb[0].mxu0 %v172
    %v384 = vpop.f32.mrb[0].mxu0
    %v385 = vadd.f32 %v210, %v384
    %v386 = vpop.f32.mrb[0].mxu0
    %v387 = vadd.f32 %v214, %v386
    %v388 = vpop.f32.mrb[0].mxu0
    %v389 = vadd.f32 %v210, %v388
    %v390 = vpop.f32.mrb[0].mxu0
    %v391 = vadd.f32 %v214, %v390
    %392 = vdwg.mxu0
    %393 = vmatprep.subr.bf16.mxu0 0
    %394 = vmatpush1.bf16.msra.mxu0 %v304
    %395 = vmatprep.subr.bf16.mxu0 0
    %396 = vmatpush1.bf16.msra.mxu0 %v307
    %397 = vmatprep.subr.bf16.mxu0 0
    %398 = vmatpush1.bf16.msra.mxu0 %v310
    %399 = vmatprep.subr.bf16.mxu0 0
    %400 = vmatpush1.bf16.msra.mxu0 %v313
    %401 = vmatprep.subr.bf16.mxu0 0
    %402 = vmatpush1.bf16.msra.mxu0 %v316
    %403 = vmatprep.subr.bf16.mxu0 0
    %404 = vmatpush1.bf16.msra.mxu0 %v319
    %405 = vmatprep.subr.bf16.mxu0 0
    %406 = vmatpush1.bf16.msra.mxu0 %v322
    %407 = vmatprep.subr.bf16.mxu0 0
    %408 = vmatpush1.bf16.msra.mxu0 %v325
    %409 = vmatprep.subr.bf16.mxu0 0
    %410 = vmatpush1.bf16.msra.mxu0 0
    %411 = vmatprep.subr.bf16.mxu0 0
    %412 = vmatpush1.bf16.msra.mxu0 0
    %413 = vmatprep.subr.bf16.mxu0 0
    %414 = vmatpush1.bf16.msra.mxu0 0
    %415 = vmatprep.subr.bf16.mxu0 0
    %416 = vmatpush1.bf16.msra.mxu0 0
    %417 = vmatprep.subr.bf16.mxu0 0
    %418 = vmatpush1.bf16.msra.mxu0 0
    %419 = vmatprep.subr.bf16.mxu0 0
    %420 = vmatpush1.bf16.msra.mxu0 0
    %421 = vmatprep.subr.bf16.mxu0 0
    %422 = vmatpush1.bf16.msra.mxu0 0
    %423 = vmatprep.subr.bf16.mxu0 0
    %424 = vmatpush1.bf16.msra.mxu0 0
    %425 = vmatprep.mubr.bf16.mxu0 0
    %426 = vmatmul.mubr.bf16.gmra.mrb[0].mxu0 %v172
    %v427 = vpop.f32.mrb[0].mxu0
    %v428 = vadd.f32 %v218, %v427
    %v429 = vpop.f32.mrb[0].mxu0
    %v430 = vpop.f32.mrb[0].mxu0
    %v431 = vadd.f32 %v218, %v430
    %v432 = vpop.f32.mrb[0].mxu0
    %433 = vdwg.mxu0
    %v434 = vpack.c.bf16 %v389, %v385
    %436 = vrot.lane.b32.xlu0 %v434, 96
    %v437 = vpop.permute.xlu0 %436
    %438 = vrot.lane.b32.xlu0 %v434, 64
    %v439 = vpop.permute.xlu0 %438
    %440 = vrot.lane.b32.xlu0 %v434, 32
    %v441 = vpop.permute.xlu0 %440
    %v442 = vunpack.c.l.b16 %v434
    %v443 = vunpack.c.h.b16 %v434
    %v444 = vunpack.c.l.b16 %v437
    %v445 = vunpack.c.h.b16 %v437
    %v446 = vunpack.c.l.b16 %v439
    %v447 = vunpack.c.h.b16 %v439
    %v448 = vunpack.c.l.b16 %v441
    %v449 = vunpack.c.h.b16 %v441
    %v450 = vpack.c.b16 %v442, %v442
    %v451 = vpack.c.b16 %v443, %v443
    %v452 = vpack.c.b16 %v444, %v444
    %v453 = vpack.c.b16 %v445, %v445
    %v454 = vpack.c.b16 %v446, %v446
    %v455 = vpack.c.b16 %v447, %v447
    %v456 = vpack.c.b16 %v448, %v448
    %v457 = vpack.c.b16 %v449, %v449
    %v458 = vpack.c.bf16 %v391, %v387
    %460 = vrot.lane.b32.xlu0 %v458, 96
    %v461 = vpop.permute.xlu0 %460
    %462 = vrot.lane.b32.xlu0 %v458, 64
    %v463 = vpop.permute.xlu0 %462
    %464 = vrot.lane.b32.xlu0 %v458, 32
    %v465 = vpop.permute.xlu0 %464
    %v466 = vunpack.c.l.b16 %v458
    %v467 = vunpack.c.h.b16 %v458
    %v468 = vunpack.c.l.b16 %v461
    %v469 = vunpack.c.h.b16 %v461
    %v470 = vunpack.c.l.b16 %v463
    %v471 = vunpack.c.h.b16 %v463
    %v472 = vunpack.c.l.b16 %v465
    %v473 = vunpack.c.h.b16 %v465
    %v474 = vpack.c.b16 %v466, %v466
    %v475 = vpack.c.b16 %v467, %v467
    %v476 = vpack.c.b16 %v468, %v468
    %v477 = vpack.c.b16 %v469, %v469
    %v478 = vpack.c.b16 %v470, %v470
    %v479 = vpack.c.b16 %v471, %v471
    %v480 = vpack.c.b16 %v472, %v472
    %v481 = vpack.c.b16 %v473, %v473
    %v482 = vpack.c.bf16 %v431, %v428
    %484 = vrot.lane.b32.xlu0 %v482, 96
    %v485 = vpop.permute.xlu0 %484
    %486 = vrot.lane.b32.xlu0 %v482, 64
    %v487 = vpop.permute.xlu0 %486
    %488 = vrot.lane.b32.xlu0 %v482, 32
    %v489 = vpop.permute.xlu0 %488
    %v490 = vunpack.c.l.b16 %v482
    %v491 = vunpack.c.h.b16 %v482
    %v492 = vunpack.c.l.b16 %v485
    %v493 = vunpack.c.h.b16 %v485
    %v494 = vunpack.c.l.b16 %v487
    %v495 = vunpack.c.h.b16 %v487
    %v496 = vunpack.c.l.b16 %v489
    %v497 = vunpack.c.h.b16 %v489
    %v498 = vpack.c.b16 %v490, %v490
    %v499 = vpack.c.b16 %v491, %v491
    %v500 = vpack.c.b16 %v492, %v492
    %v501 = vpack.c.b16 %v493, %v493
    %v502 = vpack.c.b16 %v494, %v494
    %v503 = vpack.c.b16 %v495, %v495
    %v504 = vpack.c.b16 %v496, %v496
    %v505 = vpack.c.b16 %v497, %v497
    %vm506 = vcmask 261120
    %v508 = vsel %vm506, %v450, 0
    %v511 = vsel %vm506, %v474, 0
    %513 = vmatprep.subr.bf16.mxu0 0
    %514 = vmatpush1.bf16.xpose.msra.mxu0 %v511
    %515 = vmatprep.subr.bf16.mxu0 0
    %516 = vmatpush1.bf16.xpose.msra.mxu0 0
    %517 = vmatprep.subr.bf16.mxu0 0
    %518 = vmatpush1.bf16.xpose.msra.mxu0 0
    %519 = vmatprep.subr.bf16.mxu0 0
    %520 = vmatpush1.bf16.xpose.msra.mxu0 0
    %521 = vmatprep.subr.bf16.mxu0 0
    %522 = vmatpush1.bf16.xpose.msra.mxu0 0
    %523 = vmatprep.subr.bf16.mxu0 0
    %524 = vmatpush1.bf16.xpose.msra.mxu0 0
    %525 = vmatprep.subr.bf16.mxu0 0
    %526 = vmatpush1.bf16.xpose.msra.mxu0 0
    %527 = vmatprep.subr.bf16.mxu0 0
    %528 = vmatpush1.bf16.xpose.msra.mxu0 0
    %529 = vmatprep.subr.bf16.mxu0 0
    %530 = vmatpush1.bf16.xpose.msra.mxu0 0
    %531 = vmatprep.subr.bf16.mxu0 0
    %532 = vmatpush1.bf16.xpose.msra.mxu0 0
    %533 = vmatprep.subr.bf16.mxu0 0
    %534 = vmatpush1.bf16.xpose.msra.mxu0 0
    %535 = vmatprep.subr.bf16.mxu0 0
    %536 = vmatpush1.bf16.xpose.msra.mxu0 0
    %537 = vmatprep.subr.bf16.mxu0 0
    %538 = vmatpush1.bf16.xpose.msra.mxu0 0
    %539 = vmatprep.subr.bf16.mxu0 0
    %540 = vmatpush1.bf16.xpose.msra.mxu0 0
    %541 = vmatprep.subr.bf16.mxu0 0
    %542 = vmatpush1.bf16.xpose.msra.mxu0 0
    %543 = vmatprep.subr.bf16.mxu0 0
    %544 = vmatpush1.bf16.xpose.msra.mxu0 0
    %545 = vmatprep.mubr.bf16.mxu0 0
    %546 = vmatmul.mubr.bf16.gmra.mrb[0].mxu0 %v508
    %v547 = vpop.f32.mrb[0].mxu0
    %v548 = vadd.f32 %v165, %v547
    %v549 = vpop.f32.mrb[0].mxu0
    %v550 = vpop.f32.mrb[0].mxu0
    %v551 = vpop.f32.mrb[0].mxu0
    %552 = vdwg.mxu0
    %v554 = vsel %vm506, %v451, 0
    %v557 = vsel %vm506, %v475, 0
    %559 = vmatprep.subr.bf16.mxu0 0
    %560 = vmatpush1.bf16.xpose.msra.mxu0 %v557
    %561 = vmatprep.subr.bf16.mxu0 0
    %562 = vmatpush1.bf16.xpose.msra.mxu0 0
    %563 = vmatprep.subr.bf16.mxu0 0
    %564 = vmatpush1.bf16.xpose.msra.mxu0 0
    %565 = vmatprep.subr.bf16.mxu0 0
    %566 = vmatpush1.bf16.xpose.msra.mxu0 0
    %567 = vmatprep.subr.bf16.mxu0 0
    %568 = vmatpush1.bf16.xpose.msra.mxu0 0
    %569 = vmatprep.subr.bf16.mxu0 0
    %570 = vmatpush1.bf16.xpose.msra.mxu0 0
    %571 = vmatprep.subr.bf16.mxu0 0
    %572 = vmatpush1.bf16.xpose.msra.mxu0 0
    %573 = vmatprep.subr.bf16.mxu0 0
    %574 = vmatpush1.bf16.xpose.msra.mxu0 0
    %575 = vmatprep.subr.bf16.mxu0 0
    %576 = vmatpush1.bf16.xpose.msra.mxu0 0
    %577 = vmatprep.subr.bf16.mxu0 0
    %578 = vmatpush1.bf16.xpose.msra.mxu0 0
    %579 = vmatprep.subr.bf16.mxu0 0
    %580 = vmatpush1.bf16.xpose.msra.mxu0 0
    %581 = vmatprep.subr.bf16.mxu0 0
    %582 = vmatpush1.bf16.xpose.msra.mxu0 0
    %583 = vmatprep.subr.bf16.mxu0 0
    %584 = vmatpush1.bf16.xpose.msra.mxu0 0
    %585 = vmatprep.subr.bf16.mxu0 0
    %586 = vmatpush1.bf16.xpose.msra.mxu0 0
    %587 = vmatprep.subr.bf16.mxu0 0
    %588 = vmatpush1.bf16.xpose.msra.mxu0 0
    %589 = vmatprep.subr.bf16.mxu0 0
    %590 = vmatpush1.bf16.xpose.msra.mxu0 0
    %591 = vmatprep.mubr.bf16.mxu0 0
    %592 = vmatmul.mubr.bf16.gmra.mrb[0].mxu0 %v554
    %v593 = vpop.f32.mrb[0].mxu0
    %v594 = vadd.f32 %v169, %v593
    %v595 = vpop.f32.mrb[0].mxu0
    %v596 = vpop.f32.mrb[0].mxu0
    %v597 = vpop.f32.mrb[0].mxu0
    %598 = vdwg.mxu0
    %v600 = vsel %vm506, %v452, 0
    %v603 = vsel %vm506, %v476, 0
    %605 = vmatprep.subr.bf16.mxu0 0
    %606 = vmatpush1.bf16.xpose.msra.mxu0 %v603
    %607 = vmatprep.subr.bf16.mxu0 0
    %608 = vmatpush1.bf16.xpose.msra.mxu0 0
    %609 = vmatprep.subr.bf16.mxu0 0
    %610 = vmatpush1.bf16.xpose.msra.mxu0 0
    %611 = vmatprep.subr.bf16.mxu0 0
    %612 = vmatpush1.bf16.xpose.msra.mxu0 0
    %613 = vmatprep.subr.bf16.mxu0 0
    %614 = vmatpush1.bf16.xpose.msra.mxu0 0
    %615 = vmatprep.subr.bf16.mxu0 0
    %616 = vmatpush1.bf16.xpose.msra.mxu0 0
    %617 = vmatprep.subr.bf16.mxu0 0
    %618 = vmatpush1.bf16.xpose.msra.mxu0 0
    %619 = vmatprep.subr.bf16.mxu0 0
    %620 = vmatpush1.bf16.xpose.msra.mxu0 0
    %621 = vmatprep.subr.bf16.mxu0 0
    %622 = vmatpush1.bf16.xpose.msra.mxu0 0
    %623 = vmatprep.subr.bf16.mxu0 0
    %624 = vmatpush1.bf16.xpose.msra.mxu0 0
    %625 = vmatprep.subr.bf16.mxu0 0
    %626 = vmatpush1.bf16.xpose.msra.mxu0 0
    %627 = vmatprep.subr.bf16.mxu0 0
    %628 = vmatpush1.bf16.xpose.msra.mxu0 0
    %629 = vmatprep.subr.bf16.mxu0 0
    %630 = vmatpush1.bf16.xpose.msra.mxu0 0
    %631 = vmatprep.subr.bf16.mxu0 0
    %632 = vmatpush1.bf16.xpose.msra.mxu0 0
    %633 = vmatprep.subr.bf16.mxu0 0
    %634 = vmatpush1.bf16.xpose.msra.mxu0 0
    %635 = vmatprep.subr.bf16.mxu0 0
    %636 = vmatpush1.bf16.xpose.msra.mxu0 0
    %637 = vmatprep.mubr.bf16.mxu0 0
    %638 = vmatmul.mubr.bf16.gmra.mrb[0].mxu0 %v600
    %v639 = vpop.f32.mrb[0].mxu0
    %v640 = vadd.f32 %v165, %v639
    %v641 = vpop.f32.mrb[0].mxu0
    %v642 = vpop.f32.mrb[0].mxu0
    %v643 = vpop.f32.mrb[0].mxu0
    %644 = vdwg.mxu0
    %v646 = vsel %vm506, %v453, 0
    %v649 = vsel %vm506, %v477, 0
    %651 = vmatprep.subr.bf16.mxu0 0
    %652 = vmatpush1.bf16.xpose.msra.mxu0 %v649
    %653 = vmatprep.subr.bf16.mxu0 0
    %654 = vmatpush1.bf16.xpose.msra.mxu0 0
    %655 = vmatprep.subr.bf16.mxu0 0
    %656 = vmatpush1.bf16.xpose.msra.mxu0 0
    %657 = vmatprep.subr.bf16.mxu0 0
    %658 = vmatpush1.bf16.xpose.msra.mxu0 0
    %659 = vmatprep.subr.bf16.mxu0 0
    %660 = vmatpush1.bf16.xpose.msra.mxu0 0
    %661 = vmatprep.subr.bf16.mxu0 0
    %662 = vmatpush1.bf16.xpose.msra.mxu0 0
    %663 = vmatprep.subr.bf16.mxu0 0
    %664 = vmatpush1.bf16.xpose.msra.mxu0 0
    %665 = vmatprep.subr.bf16.mxu0 0
    %666 = vmatpush1.bf16.xpose.msra.mxu0 0
    %667 = vmatprep.subr.bf16.mxu0 0
    %668 = vmatpush1.bf16.xpose.msra.mxu0 0
    %669 = vmatprep.subr.bf16.mxu0 0
    %670 = vmatpush1.bf16.xpose.msra.mxu0 0
    %671 = vmatprep.subr.bf16.mxu0 0
    %672 = vmatpush1.bf16.xpose.msra.mxu0 0
    %673 = vmatprep.subr.bf16.mxu0 0
    %674 = vmatpush1.bf16.xpose.msra.mxu0 0
    %675 = vmatprep.subr.bf16.mxu0 0
    %676 = vmatpush1.bf16.xpose.msra.mxu0 0
    %677 = vmatprep.subr.bf16.mxu0 0
    %678 = vmatpush1.bf16.xpose.msra.mxu0 0
    %679 = vmatprep.subr.bf16.mxu0 0
    %680 = vmatpush1.bf16.xpose.msra.mxu0 0
    %681 = vmatprep.subr.bf16.mxu0 0
    %682 = vmatpush1.bf16.xpose.msra.mxu0 0
    %683 = vmatprep.mubr.bf16.mxu0 0
    %684 = vmatmul.mubr.bf16.gmra.mrb[0].mxu0 %v646
    %v685 = vpop.f32.mrb[0].mxu0
    %v686 = vadd.f32 %v169, %v685
    %v687 = vpop.f32.mrb[0].mxu0
    %v688 = vpop.f32.mrb[0].mxu0
    %v689 = vpop.f32.mrb[0].mxu0
    %690 = vdwg.mxu0
    %v692 = vsel %vm506, %v454, 0
    %v695 = vsel %vm506, %v478, 0
    %697 = vmatprep.subr.bf16.mxu0 0
    %698 = vmatpush1.bf16.xpose.msra.mxu0 %v695
    %699 = vmatprep.subr.bf16.mxu0 0
    %700 = vmatpush1.bf16.xpose.msra.mxu0 0
    %701 = vmatprep.subr.bf16.mxu0 0
    %702 = vmatpush1.bf16.xpose.msra.mxu0 0
    %703 = vmatprep.subr.bf16.mxu0 0
    %704 = vmatpush1.bf16.xpose.msra.mxu0 0
    %705 = vmatprep.subr.bf16.mxu0 0
    %706 = vmatpush1.bf16.xpose.msra.mxu0 0
    %707 = vmatprep.subr.bf16.mxu0 0
    %708 = vmatpush1.bf16.xpose.msra.mxu0 0
    %709 = vmatprep.subr.bf16.mxu0 0
    %710 = vmatpush1.bf16.xpose.msra.mxu0 0
    %711 = vmatprep.subr.bf16.mxu0 0
    %712 = vmatpush1.bf16.xpose.msra.mxu0 0
    %713 = vmatprep.subr.bf16.mxu0 0
    %714 = vmatpush1.bf16.xpose.msra.mxu0 0
    %715 = vmatprep.subr.bf16.mxu0 0
    %716 = vmatpush1.bf16.xpose.msra.mxu0 0
    %717 = vmatprep.subr.bf16.mxu0 0
    %718 = vmatpush1.bf16.xpose.msra.mxu0 0
    %719 = vmatprep.subr.bf16.mxu0 0
    %720 = vmatpush1.bf16.xpose.msra.mxu0 0
    %721 = vmatprep.subr.bf16.mxu0 0
    %722 = vmatpush1.bf16.xpose.msra.mxu0 0
    %723 = vmatprep.subr.bf16.mxu0 0
    %724 = vmatpush1.bf16.xpose.msra.mxu0 0
    %725 = vmatprep.subr.bf16.mxu0 0
    %726 = vmatpush1.bf16.xpose.msra.mxu0 0
    %727 = vmatprep.subr.bf16.mxu0 0
    %728 = vmatpush1.bf16.xpose.msra.mxu0 0
    %729 = vmatprep.mubr.bf16.mxu0 0
    %730 = vmatmul.mubr.bf16.gmra.mrb[0].mxu0 %v692
    %v731 = vpop.f32.mrb[0].mxu0
    %v732 = vadd.f32 %v165, %v731
    %v733 = vpop.f32.mrb[0].mxu0
    %v734 = vpop.f32.mrb[0].mxu0
    %v735 = vpop.f32.mrb[0].mxu0
    %736 = vdwg.mxu0
    %v738 = vsel %vm506, %v455, 0
    %v741 = vsel %vm506, %v479, 0
    %743 = vmatprep.subr.bf16.mxu0 0
    %744 = vmatpush1.bf16.xpose.msra.mxu0 %v741
    %745 = vmatprep.subr.bf16.mxu0 0
    %746 = vmatpush1.bf16.xpose.msra.mxu0 0
    %747 = vmatprep.subr.bf16.mxu0 0
    %748 = vmatpush1.bf16.xpose.msra.mxu0 0
    %749 = vmatprep.subr.bf16.mxu0 0
    %750 = vmatpush1.bf16.xpose.msra.mxu0 0
    %751 = vmatprep.subr.bf16.mxu0 0
    %752 = vmatpush1.bf16.xpose.msra.mxu0 0
    %753 = vmatprep.subr.bf16.mxu0 0
    %754 = vmatpush1.bf16.xpose.msra.mxu0 0
    %755 = vmatprep.subr.bf16.mxu0 0
    %756 = vmatpush1.bf16.xpose.msra.mxu0 0
    %757 = vmatprep.subr.bf16.mxu0 0
    %758 = vmatpush1.bf16.xpose.msra.mxu0 0
    %759 = vmatprep.subr.bf16.mxu0 0
    %760 = vmatpush1.bf16.xpose.msra.mxu0 0
    %761 = vmatprep.subr.bf16.mxu0 0
    %762 = vmatpush1.bf16.xpose.msra.mxu0 0
    %763 = vmatprep.subr.bf16.mxu0 0
    %764 = vmatpush1.bf16.xpose.msra.mxu0 0
    %765 = vmatprep.subr.bf16.mxu0 0
    %766 = vmatpush1.bf16.xpose.msra.mxu0 0
    %767 = vmatprep.subr.bf16.mxu0 0
    %768 = vmatpush1.bf16.xpose.msra.mxu0 0
    %769 = vmatprep.subr.bf16.mxu0 0
    %770 = vmatpush1.bf16.xpose.msra.mxu0 0
    %771 = vmatprep.subr.bf16.mxu0 0
    %772 = vmatpush1.bf16.xpose.msra.mxu0 0
    %773 = vmatprep.subr.bf16.mxu0 0
    %774 = vmatpush1.bf16.xpose.msra.mxu0 0
    %775 = vmatprep.mubr.bf16.mxu0 0
    %776 = vmatmul.mubr.bf16.gmra.mrb[0].mxu0 %v738
    %v777 = vpop.f32.mrb[0].mxu0
    %v778 = vadd.f32 %v169, %v777
    %v779 = vpop.f32.mrb[0].mxu0
    %v780 = vpop.f32.mrb[0].mxu0
    %v781 = vpop.f32.mrb[0].mxu0
    %782 = vdwg.mxu0
    %v784 = vsel %vm506, %v456, 0
    %v787 = vsel %vm506, %v480, 0
    %789 = vmatprep.subr.bf16.mxu0 0
    %790 = vmatpush1.bf16.xpose.msra.mxu0 %v787
    %791 = vmatprep.subr.bf16.mxu0 0
    %792 = vmatpush1.bf16.xpose.msra.mxu0 0
    %793 = vmatprep.subr.bf16.mxu0 0
    %794 = vmatpush1.bf16.xpose.msra.mxu0 0
    %795 = vmatprep.subr.bf16.mxu0 0
    %796 = vmatpush1.bf16.xpose.msra.mxu0 0
    %797 = vmatprep.subr.bf16.mxu0 0
    %798 = vmatpush1.bf16.xpose.msra.mxu0 0
    %799 = vmatprep.subr.bf16.mxu0 0
    %800 = vmatpush1.bf16.xpose.msra.mxu0 0
    %801 = vmatprep.subr.bf16.mxu0 0
    %802 = vmatpush1.bf16.xpose.msra.mxu0 0
    %803 = vmatprep.subr.bf16.mxu0 0
    %804 = vmatpush1.bf16.xpose.msra.mxu0 0
    %805 = vmatprep.subr.bf16.mxu0 0
    %806 = vmatpush1.bf16.xpose.msra.mxu0 0
    %807 = vmatprep.subr.bf16.mxu0 0
    %808 = vmatpush1.bf16.xpose.msra.mxu0 0
    %809 = vmatprep.subr.bf16.mxu0 0
    %810 = vmatpush1.bf16.xpose.msra.mxu0 0
    %811 = vmatprep.subr.bf16.mxu0 0
    %812 = vmatpush1.bf16.xpose.msra.mxu0 0
    %813 = vmatprep.subr.bf16.mxu0 0
    %814 = vmatpush1.bf16.xpose.msra.mxu0 0
    %815 = vmatprep.subr.bf16.mxu0 0
    %816 = vmatpush1.bf16.xpose.msra.mxu0 0
    %817 = vmatprep.subr.bf16.mxu0 0
    %818 = vmatpush1.bf16.xpose.msra.mxu0 0
    %819 = vmatprep.subr.bf16.mxu0 0
    %820 = vmatpush1.bf16.xpose.msra.mxu0 0
    %821 = vmatprep.mubr.bf16.mxu0 0
    %822 = vmatmul.mubr.bf16.gmra.mrb[0].mxu0 %v784
    %v823 = vpop.f32.mrb[0].mxu0
    %v824 = vadd.f32 %v165, %v823
    %v825 = vpop.f32.mrb[0].mxu0
    %v826 = vpop.f32.mrb[0].mxu0
    %v827 = vpop.f32.mrb[0].mxu0
    %828 = vdwg.mxu0
    %v830 = vsel %vm506, %v457, 0
    %v833 = vsel %vm506, %v481, 0
    %835 = vmatprep.subr.bf16.mxu0 0
    %836 = vmatpush1.bf16.xpose.msra.mxu0 %v833
    %837 = vmatprep.subr.bf16.mxu0 0
    %838 = vmatpush1.bf16.xpose.msra.mxu0 0
    %839 = vmatprep.subr.bf16.mxu0 0
    %840 = vmatpush1.bf16.xpose.msra.mxu0 0
    %841 = vmatprep.subr.bf16.mxu0 0
    %842 = vmatpush1.bf16.xpose.msra.mxu0 0
    %843 = vmatprep.subr.bf16.mxu0 0
    %844 = vmatpush1.bf16.xpose.msra.mxu0 0
    %845 = vmatprep.subr.bf16.mxu0 0
    %846 = vmatpush1.bf16.xpose.msra.mxu0 0
    %847 = vmatprep.subr.bf16.mxu0 0
    %848 = vmatpush1.bf16.xpose.msra.mxu0 0
    %849 = vmatprep.subr.bf16.mxu0 0
    %850 = vmatpush1.bf16.xpose.msra.mxu0 0
    %851 = vmatprep.subr.bf16.mxu0 0
    %852 = vmatpush1.bf16.xpose.msra.mxu0 0
    %853 = vmatprep.subr.bf16.mxu0 0
    %854 = vmatpush1.bf16.xpose.msra.mxu0 0
    %855 = vmatprep.subr.bf16.mxu0 0
    %856 = vmatpush1.bf16.xpose.msra.mxu0 0
    %857 = vmatprep.subr.bf16.mxu0 0
    %858 = vmatpush1.bf16.xpose.msra.mxu0 0
    %859 = vmatprep.subr.bf16.mxu0 0
    %860 = vmatpush1.bf16.xpose.msra.mxu0 0
    %861 = vmatprep.subr.bf16.mxu0 0
    %862 = vmatpush1.bf16.xpose.msra.mxu0 0
    %863 = vmatprep.subr.bf16.mxu0 0
    %864 = vmatpush1.bf16.xpose.msra.mxu0 0
    %865 = vmatprep.subr.bf16.mxu0 0
    %866 = vmatpush1.bf16.xpose.msra.mxu0 0
    %867 = vmatprep.mubr.bf16.mxu0 0
    %868 = vmatmul.mubr.bf16.gmra.mrb[0].mxu0 %v830
    %v869 = vpop.f32.mrb[0].mxu0
    %v870 = vadd.f32 %v169, %v869
    %v871 = vpop.f32.mrb[0].mxu0
    %v872 = vpop.f32.mrb[0].mxu0
    %v873 = vpop.f32.mrb[0].mxu0
    %874 = vdwg.mxu0
    %vm875 = vcmask 64512
    %v876 = vsel %vm875, %v548, -inf
    %877 = vmax.xlane.f32.xlu0 %v876
    %v878 = vpop.xlane.xlu0 %877
    %v879 = vsel %vm875, %v594, -inf
    %880 = vmax.xlane.f32.xlu0 %v879
    %v881 = vpop.xlane.xlu0 %880
    %v882 = vsel %vm875, %v640, -inf
    %883 = vmax.xlane.f32.xlu0 %v882
    %v884 = vpop.xlane.xlu0 %883
    %v885 = vsel %vm875, %v686, -inf
    %886 = vmax.xlane.f32.xlu0 %v885
    %v887 = vpop.xlane.xlu0 %886
    %v888 = vsel %vm875, %v732, -inf
    %889 = vmax.xlane.f32.xlu0 %v888
    %v890 = vpop.xlane.xlu0 %889
    %v891 = vsel %vm875, %v778, -inf
    %892 = vmax.xlane.f32.xlu0 %v891
    %v893 = vpop.xlane.xlu0 %892
    %v894 = vsel %vm875, %v824, -inf
    %895 = vmax.xlane.f32.xlu0 %v894
    %v896 = vpop.xlane.xlu0 %895
    %v897 = vsel %vm875, %v870, -inf
    %898 = vmax.xlane.f32.xlu0 %v897
    %v899 = vpop.xlane.xlu0 %898
    %v900 = vsub.f32 %v548, %v878
    %v901 = vsub.f32 %v594, %v881
    %v902 = vsub.f32 %v640, %v884
    %v903 = vsub.f32 %v686, %v887
    %v904 = vsub.f32 %v732, %v890
    %v905 = vsub.f32 %v778, %v893
    %v906 = vsub.f32 %v824, %v896
    %v907 = vsub.f32 %v870, %v899
    %v908 = vmul.f32 %v900, 1.442695
    %v909 = vpow.pop %v908
    %v910 = vmul.f32 %v901, 1.442695
    %v911 = vpow.pop %v910
    %v912 = vmul.f32 %v902, 1.442695
    %v913 = vpow.pop %v912
    %v914 = vmul.f32 %v903, 1.442695
    %v915 = vpow.pop %v914
    %v916 = vmul.f32 %v904, 1.442695
    %v917 = vpow.pop %v916
    %v918 = vmul.f32 %v905, 1.442695
    %v919 = vpow.pop %v918
    %v920 = vmul.f32 %v906, 1.442695
    %v921 = vpow.pop %v920
    %v922 = vmul.f32 %v907, 1.442695
    %v923 = vpow.pop %v922
    %v924 = vsel %vm875, %v909, 0.0
    %925 = vadd.xlane.f32.xlu0 %v924
    %v926 = vpop.xlane.xlu0 %925
    %v927 = vsel %vm875, %v911, 0.0
    %928 = vadd.xlane.f32.xlu0 %v927
    %v929 = vpop.xlane.xlu0 %928
    %v930 = vsel %vm875, %v913, 0.0
    %931 = vadd.xlane.f32.xlu0 %v930
    %v932 = vpop.xlane.xlu0 %931
    %v933 = vsel %vm875, %v915, 0.0
    %934 = vadd.xlane.f32.xlu0 %v933
    %v935 = vpop.xlane.xlu0 %934
    %v936 = vsel %vm875, %v917, 0.0
    %937 = vadd.xlane.f32.xlu0 %v936
    %v938 = vpop.xlane.xlu0 %937
    %v939 = vsel %vm875, %v919, 0.0
    %940 = vadd.xlane.f32.xlu0 %v939
    %v941 = vpop.xlane.xlu0 %940
    %v942 = vsel %vm875, %v921, 0.0
    %943 = vadd.xlane.f32.xlu0 %v942
    %v944 = vpop.xlane.xlu0 %943
    %v945 = vsel %vm875, %v923, 0.0
    %946 = vadd.xlane.f32.xlu0 %v945
    %v947 = vpop.xlane.xlu0 %946
    %v948 = vrcp.pop %v926
    %v949 = vrcp.pop %v929
    %v950 = vrcp.pop %v932
    %v951 = vrcp.pop %v935
    %v952 = vrcp.pop %v938
    %v953 = vrcp.pop %v941
    %v954 = vrcp.pop %v944
    %v955 = vrcp.pop %v947
    %v956 = vmul.f32 %v909, %v948
    %v957 = vmul.f32 %v911, %v949
    %v958 = vmul.f32 %v913, %v950
    %v959 = vmul.f32 %v915, %v951
    %v960 = vmul.f32 %v917, %v952
    %v961 = vmul.f32 %v919, %v953
    %v962 = vmul.f32 %v921, %v954
    %v963 = vmul.f32 %v923, %v955
    %v964 = vpack.c.bf16 %v956, %v956
    %v965 = vpack.c.bf16 %v957, %v957
    %v966 = vpack.c.bf16 %v958, %v958
    %v967 = vpack.c.bf16 %v959, %v959
    %v968 = vpack.c.bf16 %v960, %v960
    %v969 = vpack.c.bf16 %v961, %v961
    %v970 = vpack.c.bf16 %v962, %v962
    %v971 = vpack.c.bf16 %v963, %v963
    %v973 = vsel %vm875, %v964, 0
    %vm975 = vcmask 1043456
    %v977 = vsel %vm975, %v498, 0
    %979 = vmatprep.subr.bf16.mxu0 0
    %980 = vmatpush1.bf16.msra.mxu0 %v977
    %981 = vmatprep.subr.bf16.mxu0 0
    %982 = vmatpush1.bf16.msra.mxu0 0
    %983 = vmatprep.subr.bf16.mxu0 0
    %984 = vmatpush1.bf16.msra.mxu0 0
    %985 = vmatprep.subr.bf16.mxu0 0
    %986 = vmatpush1.bf16.msra.mxu0 0
    %987 = vmatprep.subr.bf16.mxu0 0
    %988 = vmatpush1.bf16.msra.mxu0 0
    %989 = vmatprep.subr.bf16.mxu0 0
    %990 = vmatpush1.bf16.msra.mxu0 0
    %991 = vmatprep.subr.bf16.mxu0 0
    %992 = vmatpush1.bf16.msra.mxu0 0
    %993 = vmatprep.subr.bf16.mxu0 0
    %994 = vmatpush1.bf16.msra.mxu0 0
    %995 = vmatprep.subr.bf16.mxu0 0
    %996 = vmatpush1.bf16.msra.mxu0 0
    %997 = vmatprep.subr.bf16.mxu0 0
    %998 = vmatpush1.bf16.msra.mxu0 0
    %999 = vmatprep.subr.bf16.mxu0 0
    %1000 = vmatpush1.bf16.msra.mxu0 0
    %1001 = vmatprep.subr.bf16.mxu0 0
    %1002 = vmatpush1.bf16.msra.mxu0 0
    %1003 = vmatprep.subr.bf16.mxu0 0
    %1004 = vmatpush1.bf16.msra.mxu0 0
    %1005 = vmatprep.subr.bf16.mxu0 0
    %1006 = vmatpush1.bf16.msra.mxu0 0
    %1007 = vmatprep.subr.bf16.mxu0 0
    %1008 = vmatpush1.bf16.msra.mxu0 0
    %1009 = vmatprep.subr.bf16.mxu0 0
    %1010 = vmatpush1.bf16.msra.mxu0 0
    %1011 = vmatprep.mubr.bf16.mxu0 0
    %1012 = vmatmul.mubr.bf16.gmra.mrb[0].mxu0 %v973
    %v1013 = vpop.f32.mrb[0].mxu0
    %v1014 = vadd.f32 0.0, %v1013
    %v1015 = vpop.f32.mrb[0].mxu0
    %v1016 = vpop.f32.mrb[0].mxu0
    %v1017 = vpop.f32.mrb[0].mxu0
    %1018 = vdwg.mxu0
    %v1020 = vsel %vm875, %v965, 0
    %v1023 = vsel %vm975, %v499, 0
    %1025 = vmatprep.subr.bf16.mxu0 0
    %1026 = vmatpush1.bf16.msra.mxu0 %v1023
    %1027 = vmatprep.subr.bf16.mxu0 0
    %1028 = vmatpush1.bf16.msra.mxu0 0
    %1029 = vmatprep.subr.bf16.mxu0 0
    %1030 = vmatpush1.bf16.msra.mxu0 0
    %1031 = vmatprep.subr.bf16.mxu0 0
    %1032 = vmatpush1.bf16.msra.mxu0 0
    %1033 = vmatprep.subr.bf16.mxu0 0
    %1034 = vmatpush1.bf16.msra.mxu0 0
    %1035 = vmatprep.subr.bf16.mxu0 0
    %1036 = vmatpush1.bf16.msra.mxu0 0
    %1037 = vmatprep.subr.bf16.mxu0 0
    %1038 = vmatpush1.bf16.msra.mxu0 0
    %1039 = vmatprep.subr.bf16.mxu0 0
    %1040 = vmatpush1.bf16.msra.mxu0 0
    %1041 = vmatprep.subr.bf16.mxu0 0
    %1042 = vmatpush1.bf16.msra.mxu0 0
    %1043 = vmatprep.subr.bf16.mxu0 0
    %1044 = vmatpush1.bf16.msra.mxu0 0
    %1045 = vmatprep.subr.bf16.mxu0 0
    %1046 = vmatpush1.bf16.msra.mxu0 0
    %1047 = vmatprep.subr.bf16.mxu0 0
    %1048 = vmatpush1.bf16.msra.mxu0 0
    %1049 = vmatprep.subr.bf16.mxu0 0
    %1050 = vmatpush1.bf16.msra.mxu0 0
    %1051 = vmatprep.subr.bf16.mxu0 0
    %1052 = vmatpush1.bf16.msra.mxu0 0
    %1053 = vmatprep.subr.bf16.mxu0 0
    %1054 = vmatpush1.bf16.msra.mxu0 0
    %1055 = vmatprep.subr.bf16.mxu0 0
    %1056 = vmatpush1.bf16.msra.mxu0 0
    %1057 = vmatprep.mubr.bf16.mxu0 0
    %1058 = vmatmul.mubr.bf16.gmra.mrb[0].mxu0 %v1020
    %v1059 = vpop.f32.mrb[0].mxu0
    %v1060 = vadd.f32 0.0, %v1059
    %v1061 = vpop.f32.mrb[0].mxu0
    %v1062 = vpop.f32.mrb[0].mxu0
    %v1063 = vpop.f32.mrb[0].mxu0
    %1064 = vdwg.mxu0
    %v1066 = vsel %vm875, %v966, 0
    %v1069 = vsel %vm975, %v500, 0
    %1071 = vmatprep.subr.bf16.mxu0 0
    %1072 = vmatpush1.bf16.msra.mxu0 %v1069
    %1073 = vmatprep.subr.bf16.mxu0 0
    %1074 = vmatpush1.bf16.msra.mxu0 0
    %1075 = vmatprep.subr.bf16.mxu0 0
    %1076 = vmatpush1.bf16.msra.mxu0 0
    %1077 = vmatprep.subr.bf16.mxu0 0
    %1078 = vmatpush1.bf16.msra.mxu0 0
    %1079 = vmatprep.subr.bf16.mxu0 0
    %1080 = vmatpush1.bf16.msra.mxu0 0
    %1081 = vmatprep.subr.bf16.mxu0 0
    %1082 = vmatpush1.bf16.msra.mxu0 0
    %1083 = vmatprep.subr.bf16.mxu0 0
    %1084 = vmatpush1.bf16.msra.mxu0 0
    %1085 = vmatprep.subr.bf16.mxu0 0
    %1086 = vmatpush1.bf16.msra.mxu0 0
    %1087 = vmatprep.subr.bf16.mxu0 0
    %1088 = vmatpush1.bf16.msra.mxu0 0
    %1089 = vmatprep.subr.bf16.mxu0 0
    %1090 = vmatpush1.bf16.msra.mxu0 0
    %1091 = vmatprep.subr.bf16.mxu0 0
    %1092 = vmatpush1.bf16.msra.mxu0 0
    %1093 = vmatprep.subr.bf16.mxu0 0
    %1094 = vmatpush1.bf16.msra.mxu0 0
    %1095 = vmatprep.subr.bf16.mxu0 0
    %1096 = vmatpush1.bf16.msra.mxu0 0
    %1097 = vmatprep.subr.bf16.mxu0 0
    %1098 = vmatpush1.bf16.msra.mxu0 0
    %1099 = vmatprep.subr.bf16.mxu0 0
    %1100 = vmatpush1.bf16.msra.mxu0 0
    %1101 = vmatprep.subr.bf16.mxu0 0
    %1102 = vmatpush1.bf16.msra.mxu0 0
    %1103 = vmatprep.mubr.bf16.mxu0 0
    %1104 = vmatmul.mubr.bf16.gmra.mrb[0].mxu0 %v1066
    %v1105 = vpop.f32.mrb[0].mxu0
    %v1106 = vadd.f32 0.0, %v1105
    %v1107 = vpop.f32.mrb[0].mxu0
    %v1108 = vpop.f32.mrb[0].mxu0
    %v1109 = vpop.f32.mrb[0].mxu0
    %1110 = vdwg.mxu0
    %v1112 = vsel %vm875, %v967, 0
    %v1115 = vsel %vm975, %v501, 0
    %1117 = vmatprep.subr.bf16.mxu0 0
    %1118 = vmatpush1.bf16.msra.mxu0 %v1115
    %1119 = vmatprep.subr.bf16.mxu0 0
    %1120 = vmatpush1.bf16.msra.mxu0 0
    %1121 = vmatprep.subr.bf16.mxu0 0
    %1122 = vmatpush1.bf16.msra.mxu0 0
    %1123 = vmatprep.subr.bf16.mxu0 0
    %1124 = vmatpush1.bf16.msra.mxu0 0
    %1125 = vmatprep.subr.bf16.mxu0 0
    %1126 = vmatpush1.bf16.msra.mxu0 0
    %1127 = vmatprep.subr.bf16.mxu0 0
    %1128 = vmatpush1.bf16.msra.mxu0 0
    %1129 = vmatprep.subr.bf16.mxu0 0
    %1130 = vmatpush1.bf16.msra.mxu0 0
    %1131 = vmatprep.subr.bf16.mxu0 0
    %1132 = vmatpush1.bf16.msra.mxu0 0
    %1133 = vmatprep.subr.bf16.mxu0 0
    %1134 = vmatpush1.bf16.msra.mxu0 0
    %1135 = vmatprep.subr.bf16.mxu0 0
    %1136 = vmatpush1.bf16.msra.mxu0 0
    %1137 = vmatprep.subr.bf16.mxu0 0
    %1138 = vmatpush1.bf16.msra.mxu0 0
    %1139 = vmatprep.subr.bf16.mxu0 0
    %1140 = vmatpush1.bf16.msra.mxu0 0
    %1141 = vmatprep.subr.bf16.mxu0 0
    %1142 = vmatpush1.bf16.msra.mxu0 0
    %1143 = vmatprep.subr.bf16.mxu0 0
    %1144 = vmatpush1.bf16.msra.mxu0 0
    %1145 = vmatprep.subr.bf16.mxu0 0
    %1146 = vmatpush1.bf16.msra.mxu0 0
    %1147 = vmatprep.subr.bf16.mxu0 0
    %1148 = vmatpush1.bf16.msra.mxu0 0
    %1149 = vmatprep.mubr.bf16.mxu0 0
    %1150 = vmatmul.mubr.bf16.gmra.mrb[0].mxu0 %v1112
    %v1151 = vpop.f32.mrb[0].mxu0
    %v1152 = vadd.f32 0.0, %v1151
    %v1153 = vpop.f32.mrb[0].mxu0
    %v1154 = vpop.f32.mrb[0].mxu0
    %v1155 = vpop.f32.mrb[0].mxu0
    %1156 = vdwg.mxu0
    %v1158 = vsel %vm875, %v968, 0
    %v1161 = vsel %vm975, %v502, 0
    %1163 = vmatprep.subr.bf16.mxu0 0
    %1164 = vmatpush1.bf16.msra.mxu0 %v1161
    %1165 = vmatprep.subr.bf16.mxu0 0
    %1166 = vmatpush1.bf16.msra.mxu0 0
    %1167 = vmatprep.subr.bf16.mxu0 0
    %1168 = vmatpush1.bf16.msra.mxu0 0
    %1169 = vmatprep.subr.bf16.mxu0 0
    %1170 = vmatpush1.bf16.msra.mxu0 0
    %1171 = vmatprep.subr.bf16.mxu0 0
    %1172 = vmatpush1.bf16.msra.mxu0 0
    %1173 = vmatprep.subr.bf16.mxu0 0
    %1174 = vmatpush1.bf16.msra.mxu0 0
    %1175 = vmatprep.subr.bf16.mxu0 0
    %1176 = vmatpush1.bf16.msra.mxu0 0
    %1177 = vmatprep.subr.bf16.mxu0 0
    %1178 = vmatpush1.bf16.msra.mxu0 0
    %1179 = vmatprep.subr.bf16.mxu0 0
    %1180 = vmatpush1.bf16.msra.mxu0 0
    %1181 = vmatprep.subr.bf16.mxu0 0
    %1182 = vmatpush1.bf16.msra.mxu0 0
    %1183 = vmatprep.subr.bf16.mxu0 0
    %1184 = vmatpush1.bf16.msra.mxu0 0
    %1185 = vmatprep.subr.bf16.mxu0 0
    %1186 = vmatpush1.bf16.msra.mxu0 0
    %1187 = vmatprep.subr.bf16.mxu0 0
    %1188 = vmatpush1.bf16.msra.mxu0 0
    %1189 = vmatprep.subr.bf16.mxu0 0
    %1190 = vmatpush1.bf16.msra.mxu0 0
    %1191 = vmatprep.subr.bf16.mxu0 0
    %1192 = vmatpush1.bf16.msra.mxu0 0
    %1193 = vmatprep.subr.bf16.mxu0 0
    %1194 = vmatpush1.bf16.msra.mxu0 0
    %1195 = vmatprep.mubr.bf16.mxu0 0
    %1196 = vmatmul.mubr.bf16.gmra.mrb[0].mxu0 %v1158
    %v1197 = vpop.f32.mrb[0].mxu0
    %v1198 = vadd.f32 0.0, %v1197
    %v1199 = vpop.f32.mrb[0].mxu0
    %v1200 = vpop.f32.mrb[0].mxu0
    %v1201 = vpop.f32.mrb[0].mxu0
    %1202 = vdwg.mxu0
    %v1204 = vsel %vm875, %v969, 0
    %v1207 = vsel %vm975, %v503, 0
    %1209 = vmatprep.subr.bf16.mxu0 0
    %1210 = vmatpush1.bf16.msra.mxu0 %v1207
    %1211 = vmatprep.subr.bf16.mxu0 0
    %1212 = vmatpush1.bf16.msra.mxu0 0
    %1213 = vmatprep.subr.bf16.mxu0 0
    %1214 = vmatpush1.bf16.msra.mxu0 0
    %1215 = vmatprep.subr.bf16.mxu0 0
    %1216 = vmatpush1.bf16.msra.mxu0 0
    %1217 = vmatprep.subr.bf16.mxu0 0
    %1218 = vmatpush1.bf16.msra.mxu0 0
    %1219 = vmatprep.subr.bf16.mxu0 0
    %1220 = vmatpush1.bf16.msra.mxu0 0
    %1221 = vmatprep.subr.bf16.mxu0 0
    %1222 = vmatpush1.bf16.msra.mxu0 0
    %1223 = vmatprep.subr.bf16.mxu0 0
    %1224 = vmatpush1.bf16.msra.mxu0 0
    %1225 = vmatprep.subr.bf16.mxu0 0
    %1226 = vmatpush1.bf16.msra.mxu0 0
    %1227 = vmatprep.subr.bf16.mxu0 0
    %1228 = vmatpush1.bf16.msra.mxu0 0
    %1229 = vmatprep.subr.bf16.mxu0 0
    %1230 = vmatpush1.bf16.msra.mxu0 0
    %1231 = vmatprep.subr.bf16.mxu0 0
    %1232 = vmatpush1.bf16.msra.mxu0 0
    %1233 = vmatprep.subr.bf16.mxu0 0
    %1234 = vmatpush1.bf16.msra.mxu0 0
    %1235 = vmatprep.subr.bf16.mxu0 0
    %1236 = vmatpush1.bf16.msra.mxu0 0
    %1237 = vmatprep.subr.bf16.mxu0 0
    %1238 = vmatpush1.bf16.msra.mxu0 0
    %1239 = vmatprep.subr.bf16.mxu0 0
    %1240 = vmatpush1.bf16.msra.mxu0 0
    %1241 = vmatprep.mubr.bf16.mxu0 0
    %1242 = vmatmul.mubr.bf16.gmra.mrb[0].mxu0 %v1204
    %v1243 = vpop.f32.mrb[0].mxu0
    %v1244 = vadd.f32 0.0, %v1243
    %v1245 = vpop.f32.mrb[0].mxu0
    %v1246 = vpop.f32.mrb[0].mxu0
    %v1247 = vpop.f32.mrb[0].mxu0
    %1248 = vdwg.mxu0
    %v1250 = vsel %vm875, %v970, 0
    %v1253 = vsel %vm975, %v504, 0
    %1255 = vmatprep.subr.bf16.mxu0 0
    %1256 = vmatpush1.bf16.msra.mxu0 %v1253
    %1257 = vmatprep.subr.bf16.mxu0 0
    %1258 = vmatpush1.bf16.msra.mxu0 0
    %1259 = vmatprep.subr.bf16.mxu0 0
    %1260 = vmatpush1.bf16.msra.mxu0 0
    %1261 = vmatprep.subr.bf16.mxu0 0
    %1262 = vmatpush1.bf16.msra.mxu0 0
    %1263 = vmatprep.subr.bf16.mxu0 0
    %1264 = vmatpush1.bf16.msra.mxu0 0
    %1265 = vmatprep.subr.bf16.mxu0 0
    %1266 = vmatpush1.bf16.msra.mxu0 0
    %1267 = vmatprep.subr.bf16.mxu0 0
    %1268 = vmatpush1.bf16.msra.mxu0 0
    %1269 = vmatprep.subr.bf16.mxu0 0
    %1270 = vmatpush1.bf16.msra.mxu0 0
    %1271 = vmatprep.subr.bf16.mxu0 0
    %1272 = vmatpush1.bf16.msra.mxu0 0
    %1273 = vmatprep.subr.bf16.mxu0 0
    %1274 = vmatpush1.bf16.msra.mxu0 0
    %1275 = vmatprep.subr.bf16.mxu0 0
    %1276 = vmatpush1.bf16.msra.mxu0 0
    %1277 = vmatprep.subr.bf16.mxu0 0
    %1278 = vmatpush1.bf16.msra.mxu0 0
    %1279 = vmatprep.subr.bf16.mxu0 0
    %1280 = vmatpush1.bf16.msra.mxu0 0
    %1281 = vmatprep.subr.bf16.mxu0 0
    %1282 = vmatpush1.bf16.msra.mxu0 0
    %1283 = vmatprep.subr.bf16.mxu0 0
    %1284 = vmatpush1.bf16.msra.mxu0 0
    %1285 = vmatprep.subr.bf16.mxu0 0
    %1286 = vmatpush1.bf16.msra.mxu0 0
    %1287 = vmatprep.mubr.bf16.mxu0 0
    %1288 = vmatmul.mubr.bf16.gmra.mrb[0].mxu0 %v1250
    %v1289 = vpop.f32.mrb[0].mxu0
    %v1290 = vadd.f32 0.0, %v1289
    %v1291 = vpop.f32.mrb[0].mxu0
    %v1292 = vpop.f32.mrb[0].mxu0
    %v1293 = vpop.f32.mrb[0].mxu0
    %1294 = vdwg.mxu0
    %v1296 = vsel %vm875, %v971, 0
    %v1299 = vsel %vm975, %v505, 0
    %1301 = vmatprep.subr.bf16.mxu0 0
    %1302 = vmatpush1.bf16.msra.mxu0 %v1299
    %1303 = vmatprep.subr.bf16.mxu0 0
    %1304 = vmatpush1.bf16.msra.mxu0 0
    %1305 = vmatprep.subr.bf16.mxu0 0
    %1306 = vmatpush1.bf16.msra.mxu0 0
    %1307 = vmatprep.subr.bf16.mxu0 0
    %1308 = vmatpush1.bf16.msra.mxu0 0
    %1309 = vmatprep.subr.bf16.mxu0 0
    %1310 = vmatpush1.bf16.msra.mxu0 0
    %1311 = vmatprep.subr.bf16.mxu0 0
    %1312 = vmatpush1.bf16.msra.mxu0 0
    %1313 = vmatprep.subr.bf16.mxu0 0
    %1314 = vmatpush1.bf16.msra.mxu0 0
    %1315 = vmatprep.subr.bf16.mxu0 0
    %1316 = vmatpush1.bf16.msra.mxu0 0
    %1317 = vmatprep.subr.bf16.mxu0 0
    %1318 = vmatpush1.bf16.msra.mxu0 0
    %1319 = vmatprep.subr.bf16.mxu0 0
    %1320 = vmatpush1.bf16.msra.mxu0 0
    %1321 = vmatprep.subr.bf16.mxu0 0
    %1322 = vmatpush1.bf16.msra.mxu0 0
    %1323 = vmatprep.subr.bf16.mxu0 0
    %1324 = vmatpush1.bf16.msra.mxu0 0
    %1325 = vmatprep.subr.bf16.mxu0 0
    %1326 = vmatpush1.bf16.msra.mxu0 0
    %1327 = vmatprep.subr.bf16.mxu0 0
    %1328 = vmatpush1.bf16.msra.mxu0 0
    %1329 = vmatprep.subr.bf16.mxu0 0
    %1330 = vmatpush1.bf16.msra.mxu0 0
    %1331 = vmatprep.subr.bf16.mxu0 0
    %1332 = vmatpush1.bf16.msra.mxu0 0
    %1333 = vmatprep.mubr.bf16.mxu0 0
    %1334 = vmatmul.mubr.bf16.gmra.mrb[0].mxu0 %v1296
    %v1335 = vpop.f32.mrb[0].mxu0
    %v1336 = vadd.f32 0.0, %v1335
    %v1337 = vpop.f32.mrb[0].mxu0
    %v1338 = vpop.f32.mrb[0].mxu0
    %v1339 = vpop.f32.mrb[0].mxu0
    %1340 = vdwg.mxu0
    %1343 = vrot.lane.b32.xlu0 %v1106, 32
    %v1344 = vpop.permute.xlu0 %1343
    %1345 = vrot.lane.b32.xlu0 %v1152, 32
    %v1346 = vpop.permute.xlu0 %1345
    %1351 = vrot.lane.b32.xlu0 %v1198, 64
    %v1352 = vpop.permute.xlu0 %1351
    %1353 = vrot.lane.b32.xlu0 %v1244, 64
    %v1354 = vpop.permute.xlu0 %1353
    %1359 = vrot.lane.b32.xlu0 %v1290, 96
    %v1360 = vpop.permute.xlu0 %1359
    %1361 = vrot.lane.b32.xlu0 %v1336, 96
    %v1362 = vpop.permute.xlu0 %1361
    %v1365 = vsel %vm506, %v1014, %v1344
    %v1366 = vsel %vm506, %v1060, %v1346
    %vm1367 = vcmask 523264
    %v1368 = vsel %vm1367, %v1365, %v1352
    %v1369 = vsel %vm1367, %v1366, %v1354
    %vm1370 = vcmask 785408
    %v1371 = vsel %vm1370, %v1368, %v1360
    %v1372 = vsel %vm1370, %v1369, %v1362
    %v1373 = vpack.c.bf16 %v1372, %v1371
    %v1374 = vld [vmem:[%s6] sm:$0xf]
    %v1375 = vld [vmem:[%s6 + $0x4] sm:$0xf]
    %v1376 = vld [vmem:[%s6 + $0x8] sm:$0xf]
    %v1377 = vld [vmem:[%s6 + $0xc] sm:$0xf]
    %v1378 = vld [vmem:[%s6 + $0x10] sm:$0xf]
    %v1379 = vld [vmem:[%s6 + $0x14] sm:$0xf]
    %v1380 = vld [vmem:[%s6 + $0x18] sm:$0xf]
    %v1381 = vld [vmem:[%s6 + $0x1c] sm:$0xf]
    %v1382 = vld [vmem:[%s6 + $0x20] sm:$0xf]
    %v1383 = vld [vmem:[%s6 + $0x24] sm:$0xf]
    %v1384 = vld [vmem:[%s6 + $0x28] sm:$0xf]
    %v1385 = vld [vmem:[%s6 + $0x2c] sm:$0xf]
    %v1386 = vld [vmem:[%s6 + $0x30] sm:$0xf]
    %v1387 = vld [vmem:[%s6 + $0x34] sm:$0xf]
    %v1388 = vld [vmem:[%s6 + $0x38] sm:$0xf]
    %v1389 = vld [vmem:[%s6 + $0x3c] sm:$0xf]
    %v1390 = vld [vmem:[%s7] sm:$0x1]
    %v1392 = vlaneseq
    %v1393 = vshrl.u32 %v1392, 7
    %v1394 = vsub.s32 0, %v1393
    %v1395 = vrot.slane %v1390, %v1394
    %v1413 = vunpack.c.l.b16 %v1374
    %v1414 = vunpack.c.l.b16 %v1375
    %v1415 = vunpack.c.l.b16 %v1376
    %v1416 = vunpack.c.l.b16 %v1377
    %v1417 = vunpack.c.l.b16 %v1378
    %v1418 = vunpack.c.l.b16 %v1379
    %v1419 = vunpack.c.l.b16 %v1380
    %v1420 = vunpack.c.l.b16 %v1381
    %v1421 = vunpack.c.l.b16 %v1382
    %v1422 = vunpack.c.l.b16 %v1383
    %v1423 = vunpack.c.l.b16 %v1384
    %v1424 = vunpack.c.l.b16 %v1385
    %v1425 = vunpack.c.l.b16 %v1386
    %v1426 = vunpack.c.l.b16 %v1387
    %v1427 = vunpack.c.l.b16 %v1388
    %v1428 = vunpack.c.l.b16 %v1389
    %v1429 = vpack.c.b16 %v1414, %v1413
    %v1430 = vpack.c.b16 %v1416, %v1415
    %v1431 = vpack.c.b16 %v1418, %v1417
    %v1432 = vpack.c.b16 %v1420, %v1419
    %v1433 = vpack.c.b16 %v1422, %v1421
    %v1434 = vpack.c.b16 %v1424, %v1423
    %v1435 = vpack.c.b16 %v1426, %v1425
    %v1436 = vpack.c.b16 %v1428, %v1427
    %1445 = vmatprep.subr.bf16.mxu0 0
    %1446 = vmatpush1.bf16.msra.mxu0 %v1429
    %1447 = vmatprep.subr.bf16.mxu0 0
    %1448 = vmatpush1.bf16.msra.mxu0 %v1430
    %1449 = vmatprep.subr.bf16.mxu0 0
    %1450 = vmatpush1.bf16.msra.mxu0 %v1431
    %1451 = vmatprep.subr.bf16.mxu0 0
    %1452 = vmatpush1.bf16.msra.mxu0 %v1432
    %1453 = vmatprep.subr.bf16.mxu0 0
    %1454 = vmatpush1.bf16.msra.mxu0 %v1433
    %1455 = vmatprep.subr.bf16.mxu0 0
    %1456 = vmatpush1.bf16.msra.mxu0 %v1434
    %1457 = vmatprep.subr.bf16.mxu0 0
    %1458 = vmatpush1.bf16.msra.mxu0 %v1435
    %1459 = vmatprep.subr.bf16.mxu0 0
    %1460 = vmatpush1.bf16.msra.mxu0 %v1436
    %1461 = vmatprep.subr.bf16.mxu0 0
    %1462 = vmatpush1.bf16.msra.mxu0 0
    %1463 = vmatprep.subr.bf16.mxu0 0
    %1464 = vmatpush1.bf16.msra.mxu0 0
    %1465 = vmatprep.subr.bf16.mxu0 0
    %1466 = vmatpush1.bf16.msra.mxu0 0
    %1467 = vmatprep.subr.bf16.mxu0 0
    %1468 = vmatpush1.bf16.msra.mxu0 0
    %1469 = vmatprep.subr.bf16.mxu0 0
    %1470 = vmatpush1.bf16.msra.mxu0 0
    %1471 = vmatprep.subr.bf16.mxu0 0
    %1472 = vmatpush1.bf16.msra.mxu0 0
    %1473 = vmatprep.subr.bf16.mxu0 0
    %1474 = vmatpush1.bf16.msra.mxu0 0
    %1475 = vmatprep.subr.bf16.mxu0 0
    %1476 = vmatpush1.bf16.msra.mxu0 0
    %1477 = vmatprep.mubr.bf16.mxu0 0
    %1478 = vmatmul.mubr.bf16.gmra.mrb[0].mxu0 %v1373
    %v1479 = vpop.f32.mrb[0].mxu0
    %v1480 = vadd.f32 %v1395, %v1479
    %v1481 = vpop.f32.mrb[0].mxu0
    %v1482 = vpop.f32.mrb[0].mxu0
    %v1483 = vadd.f32 %v1395, %v1482
    %v1484 = vpop.f32.mrb[0].mxu0
    %1485 = vdwg.mxu0
    %v1486 = vadd.f32 %v136, %v1480
    %v1487 = vadd.f32 %v137, %v1483
    %v1488 = vld [vmem:[%s8] sm:$0x1]
    %v1489 = vld [vmem:[%s9] sm:$0x1]
    %1490 = vadd.xlane.f32.xlu0 %v1486
    %v1491 = vpop.xlane.xlu0 %1490
    %1492 = vadd.xlane.f32.xlu0 %v1487
    %v1493 = vpop.xlane.xlu0 %1492
    %v1494 = vmul.f32 %v1491, %v103
    %v1495 = vmul.f32 %v1493, %v103
    %v1496 = vsub.f32 %v1486, %v1494
    %v1497 = vsub.f32 %v1487, %v1495
    %v1498 = vmul.f32 %v1496, %v1496
    %v1499 = vmul.f32 %v1497, %v1497
    %1500 = vadd.xlane.f32.xlu0 %v1498
    %v1501 = vpop.xlane.xlu0 %1500
    %1502 = vadd.xlane.f32.xlu0 %v1499
    %v1503 = vpop.xlane.xlu0 %1502
    %v1504 = vmul.f32 %v1501, %v103
    %v1505 = vmul.f32 %v1503, %v103
    %v1506 = vadd.f32 %v1504, 1e-12
    %v1507 = vadd.f32 %v1505, 1e-12
    %v1508 = vrsqrt.pop %v1506
    %v1509 = vrsqrt.pop %v1507
    %v1510 = vmul.f32 %v1496, %v1508
    %v1511 = vmul.f32 %v1497, %v1509
    %v1513 = vlaneseq
    %v1514 = vshrl.u32 %v1513, 7
    %v1515 = vsub.s32 0, %v1514
    %v1516 = vrot.slane %v1488, %v1515
    %v1518 = vmul.f32 %v1510, %v1516
    %v1519 = vmul.f32 %v1511, %v1516
    %v1521 = vlaneseq
    %v1522 = vshrl.u32 %v1521, 7
    %v1523 = vsub.s32 0, %v1522
    %v1524 = vrot.slane %v1489, %v1523
    %v1526 = vadd.f32 %v1518, %v1524
    %v1527 = vadd.f32 %v1519, %v1524
    %v1528 = vpack.c.bf16 %v1527, %v1526
    %v1529 = vld [vmem:[#allocation4] sm:$0xff]
    %v1530 = vld [vmem:[#allocation4 + $0x8] sm:$0xff]
    %v1531 = vld [vmem:[#allocation4 + $0x10] sm:$0xff]
    %v1532 = vld [vmem:[#allocation4 + $0x18] sm:$0xff]
    %v1533 = vld [vmem:[#allocation4 + $0x20] sm:$0xff]
    %v1534 = vld [vmem:[#allocation4 + $0x28] sm:$0xff]
    %v1535 = vld [vmem:[#allocation4 + $0x30] sm:$0xff]
    %v1536 = vld [vmem:[#allocation4 + $0x38] sm:$0xff]
    %v1537 = vld [vmem:[#allocation4 + $0x40] sm:$0xff]
    %v1538 = vld [vmem:[#allocation4 + $0x48] sm:$0xff]
    %v1539 = vld [vmem:[#allocation4 + $0x50] sm:$0xff]
    %v1540 = vld [vmem:[#allocation4 + $0x58] sm:$0xff]
    %v1541 = vld [vmem:[#allocation4 + $0x60] sm:$0xff]
    %v1542 = vld [vmem:[#allocation4 + $0x68] sm:$0xff]
    %v1543 = vld [vmem:[#allocation4 + $0x70] sm:$0xff]
    %v1544 = vld [vmem:[#allocation4 + $0x78] sm:$0xff]
    %v1545 = vld [vmem:[#allocation4 + $0x80] sm:$0xff]
    %v1546 = vld [vmem:[#allocation4 + $0x88] sm:$0xff]
    %v1547 = vld [vmem:[#allocation4 + $0x90] sm:$0xff]
    %v1548 = vld [vmem:[#allocation4 + $0x98] sm:$0xff]
    %v1549 = vld [vmem:[#allocation4 + $0xa0] sm:$0xff]
    %v1550 = vld [vmem:[#allocation4 + $0xa8] sm:$0xff]
    %v1551 = vld [vmem:[#allocation4 + $0xb0] sm:$0xff]
    %v1552 = vld [vmem:[#allocation4 + $0xb8] sm:$0xff]
    %v1553 = vld [vmem:[#allocation4 + $0xc0] sm:$0xff]
    %v1554 = vld [vmem:[#allocation4 + $0xc8] sm:$0xff]
    %v1555 = vld [vmem:[#allocation4 + $0xd0] sm:$0xff]
    %v1556 = vld [vmem:[#allocation4 + $0xd8] sm:$0xff]
    %v1557 = vld [vmem:[#allocation4 + $0xe0] sm:$0xff]
    %v1558 = vld [vmem:[#allocation4 + $0xe8] sm:$0xff]
    %v1559 = vld [vmem:[#allocation4 + $0xf0] sm:$0xff]
    %v1560 = vld [vmem:[#allocation4 + $0xf8] sm:$0xff]
    %v1561 = vld [vmem:[%s11] sm:$0xf]
    %v1563 = vlaneseq
    %v1564 = vshrl.u32 %v1563, 7
    %v1565 = vsub.s32 0, %v1564
    %v1566 = vrot.slane %v1561, %v1565
    %v1567 = vlaneseq
    %v1568 = vshrl.u32 %v1567, 7
    %v1569 = vsub.s32 1, %v1568
    %v1570 = vrot.slane %v1561, %v1569
    %v1571 = vlaneseq
    %v1572 = vshrl.u32 %v1571, 7
    %v1573 = vsub.s32 2, %v1572
    %v1574 = vrot.slane %v1561, %v1573
    %v1575 = vlaneseq
    %v1576 = vshrl.u32 %v1575, 7
    %v1577 = vsub.s32 3, %v1576
    %v1578 = vrot.slane %v1561, %v1577
    %v1615 = vunpack.c.l.b16 %v1529
    %v1616 = vunpack.c.h.b16 %v1529
    %v1617 = vunpack.c.l.b16 %v1530
    %v1618 = vunpack.c.h.b16 %v1530
    %v1619 = vunpack.c.l.b16 %v1531
    %v1620 = vunpack.c.h.b16 %v1531
    %v1621 = vunpack.c.l.b16 %v1532
    %v1622 = vunpack.c.h.b16 %v1532
    %v1623 = vunpack.c.l.b16 %v1533
    %v1624 = vunpack.c.h.b16 %v1533
    %v1625 = vunpack.c.l.b16 %v1534
    %v1626 = vunpack.c.h.b16 %v1534
    %v1627 = vunpack.c.l.b16 %v1535
    %v1628 = vunpack.c.h.b16 %v1535
    %v1629 = vunpack.c.l.b16 %v1536
    %v1630 = vunpack.c.h.b16 %v1536
    %v1631 = vunpack.c.l.b16 %v1537
    %v1632 = vunpack.c.h.b16 %v1537
    %v1633 = vunpack.c.l.b16 %v1538
    %v1634 = vunpack.c.h.b16 %v1538
    %v1635 = vunpack.c.l.b16 %v1539
    %v1636 = vunpack.c.h.b16 %v1539
    %v1637 = vunpack.c.l.b16 %v1540
    %v1638 = vunpack.c.h.b16 %v1540
    %v1639 = vunpack.c.l.b16 %v1541
    %v1640 = vunpack.c.h.b16 %v1541
    %v1641 = vunpack.c.l.b16 %v1542
    %v1642 = vunpack.c.h.b16 %v1542
    %v1643 = vunpack.c.l.b16 %v1543
    %v1644 = vunpack.c.h.b16 %v1543
    %v1645 = vunpack.c.l.b16 %v1544
    %v1646 = vunpack.c.h.b16 %v1544
    %v1647 = vunpack.c.l.b16 %v1545
    %v1648 = vunpack.c.h.b16 %v1545
    %v1649 = vunpack.c.l.b16 %v1546
    %v1650 = vunpack.c.h.b16 %v1546
    %v1651 = vunpack.c.l.b16 %v1547
    %v1652 = vunpack.c.h.b16 %v1547
    %v1653 = vunpack.c.l.b16 %v1548
    %v1654 = vunpack.c.h.b16 %v1548
    %v1655 = vunpack.c.l.b16 %v1549
    %v1656 = vunpack.c.h.b16 %v1549
    %v1657 = vunpack.c.l.b16 %v1550
    %v1658 = vunpack.c.h.b16 %v1550
    %v1659 = vunpack.c.l.b16 %v1551
    %v1660 = vunpack.c.h.b16 %v1551
    %v1661 = vunpack.c.l.b16 %v1552
    %v1662 = vunpack.c.h.b16 %v1552
    %v1663 = vunpack.c.l.b16 %v1553
    %v1664 = vunpack.c.h.b16 %v1553
    %v1665 = vunpack.c.l.b16 %v1554
    %v1666 = vunpack.c.h.b16 %v1554
    %v1667 = vunpack.c.l.b16 %v1555
    %v1668 = vunpack.c.h.b16 %v1555
    %v1669 = vunpack.c.l.b16 %v1556
    %v1670 = vunpack.c.h.b16 %v1556
    %v1671 = vunpack.c.l.b16 %v1557
    %v1672 = vunpack.c.h.b16 %v1557
    %v1673 = vunpack.c.l.b16 %v1558
    %v1674 = vunpack.c.h.b16 %v1558
    %v1675 = vunpack.c.l.b16 %v1559
    %v1676 = vunpack.c.h.b16 %v1559
    %v1677 = vunpack.c.l.b16 %v1560
    %v1678 = vunpack.c.h.b16 %v1560
    %v1679 = vpack.c.b16 %v1619, %v1615
    %v1680 = vpack.c.b16 %v1620, %v1616
    %v1681 = vpack.c.b16 %v1621, %v1617
    %v1682 = vpack.c.b16 %v1622, %v1618
    %v1683 = vpack.c.b16 %v1627, %v1623
    %v1684 = vpack.c.b16 %v1628, %v1624
    %v1685 = vpack.c.b16 %v1629, %v1625
    %v1686 = vpack.c.b16 %v1630, %v1626
    %v1687 = vpack.c.b16 %v1635, %v1631
    %v1688 = vpack.c.b16 %v1636, %v1632
    %v1689 = vpack.c.b16 %v1637, %v1633
    %v1690 = vpack.c.b16 %v1638, %v1634
    %v1691 = vpack.c.b16 %v1643, %v1639
    %v1692 = vpack.c.b16 %v1644, %v1640
    %v1693 = vpack.c.b16 %v1645, %v1641
    %v1694 = vpack.c.b16 %v1646, %v1642
    %v1695 = vpack.c.b16 %v1651, %v1647
    %v1696 = vpack.c.b16 %v1652, %v1648
    %v1697 = vpack.c.b16 %v1653, %v1649
    %v1698 = vpack.c.b16 %v1654, %v1650
    %v1699 = vpack.c.b16 %v1659, %v1655
    %v1700 = vpack.c.b16 %v1660, %v1656
    %v1701 = vpack.c.b16 %v1661, %v1657
    %v1702 = vpack.c.b16 %v1662, %v1658
    %v1703 = vpack.c.b16 %v1667, %v1663
    %v1704 = vpack.c.b16 %v1668, %v1664
    %v1705 = vpack.c.b16 %v1669, %v1665
    %v1706 = vpack.c.b16 %v1670, %v1666
    %v1707 = vpack.c.b16 %v1675, %v1671
    %v1708 = vpack.c.b16 %v1676, %v1672
    %v1709 = vpack.c.b16 %v1677, %v1673
    %v1710 = vpack.c.b16 %v1678, %v1674
    %1743 = vmatprep.subr.bf16.mxu0 %v1680
    %1744 = vmatpush1.bf16.msra.mxu0 %v1679
    %1745 = vmatprep.subr.bf16.mxu0 %v1684
    %1746 = vmatpush1.bf16.msra.mxu0 %v1683
    %1747 = vmatprep.subr.bf16.mxu0 %v1688
    %1748 = vmatpush1.bf16.msra.mxu0 %v1687
    %1749 = vmatprep.subr.bf16.mxu0 %v1692
    %1750 = vmatpush1.bf16.msra.mxu0 %v1691
    %1751 = vmatprep.subr.bf16.mxu0 %v1696
    %1752 = vmatpush1.bf16.msra.mxu0 %v1695
    %1753 = vmatprep.subr.bf16.mxu0 %v1700
    %1754 = vmatpush1.bf16.msra.mxu0 %v1699
    %1755 = vmatprep.subr.bf16.mxu0 %v1704
    %1756 = vmatpush1.bf16.msra.mxu0 %v1703
    %1757 = vmatprep.subr.bf16.mxu0 %v1708
    %1758 = vmatpush1.bf16.msra.mxu0 %v1707
    %1759 = vmatprep.subr.bf16.mxu0 0
    %1760 = vmatpush1.bf16.msra.mxu0 0
    %1761 = vmatprep.subr.bf16.mxu0 0
    %1762 = vmatpush1.bf16.msra.mxu0 0
    %1763 = vmatprep.subr.bf16.mxu0 0
    %1764 = vmatpush1.bf16.msra.mxu0 0
    %1765 = vmatprep.subr.bf16.mxu0 0
    %1766 = vmatpush1.bf16.msra.mxu0 0
    %1767 = vmatprep.subr.bf16.mxu0 0
    %1768 = vmatpush1.bf16.msra.mxu0 0
    %1769 = vmatprep.subr.bf16.mxu0 0
    %1770 = vmatpush1.bf16.msra.mxu0 0
    %1771 = vmatprep.subr.bf16.mxu0 0
    %1772 = vmatpush1.bf16.msra.mxu0 0
    %1773 = vmatprep.subr.bf16.mxu0 0
    %1774 = vmatpush1.bf16.msra.mxu0 0
    %1775 = vmatprep.mubr.bf16.mxu0 0
    %1776 = vmatmul.mubr.bf16.gmra.mrb[0].mxu0 %v1528
    %v1777 = vpop.f32.mrb[0].mxu0
    %v1778 = vadd.f32 %v1566, %v1777
    %v1779 = vpop.f32.mrb[0].mxu0
    %v1780 = vadd.f32 %v1570, %v1779
    %v1781 = vpop.f32.mrb[0].mxu0
    %v1782 = vadd.f32 %v1566, %v1781
    %v1783 = vpop.f32.mrb[0].mxu0
    %v1784 = vadd.f32 %v1570, %v1783
    %1785 = vdwg.mxu0
    %1786 = vmatprep.subr.bf16.mxu0 %v1682
    %1787 = vmatpush1.bf16.msra.mxu0 %v1681
    %1788 = vmatprep.subr.bf16.mxu0 %v1686
    %1789 = vmatpush1.bf16.msra.mxu0 %v1685
    %1790 = vmatprep.subr.bf16.mxu0 %v1690
    %1791 = vmatpush1.bf16.msra.mxu0 %v1689
    %1792 = vmatprep.subr.bf16.mxu0 %v1694
    %1793 = vmatpush1.bf16.msra.mxu0 %v1693
    %1794 = vmatprep.subr.bf16.mxu0 %v1698
    %1795 = vmatpush1.bf16.msra.mxu0 %v1697
    %1796 = vmatprep.subr.bf16.mxu0 %v1702
    %1797 = vmatpush1.bf16.msra.mxu0 %v1701
    %1798 = vmatprep.subr.bf16.mxu0 %v1706
    %1799 = vmatpush1.bf16.msra.mxu0 %v1705
    %1800 = vmatprep.subr.bf16.mxu0 %v1710
    %1801 = vmatpush1.bf16.msra.mxu0 %v1709
    %1802 = vmatprep.subr.bf16.mxu0 0
    %1803 = vmatpush1.bf16.msra.mxu0 0
    %1804 = vmatprep.subr.bf16.mxu0 0
    %1805 = vmatpush1.bf16.msra.mxu0 0
    %1806 = vmatprep.subr.bf16.mxu0 0
    %1807 = vmatpush1.bf16.msra.mxu0 0
    %1808 = vmatprep.subr.bf16.mxu0 0
    %1809 = vmatpush1.bf16.msra.mxu0 0
    %1810 = vmatprep.subr.bf16.mxu0 0
    %1811 = vmatpush1.bf16.msra.mxu0 0
    %1812 = vmatprep.subr.bf16.mxu0 0
    %1813 = vmatpush1.bf16.msra.mxu0 0
    %1814 = vmatprep.subr.bf16.mxu0 0
    %1815 = vmatpush1.bf16.msra.mxu0 0
    %1816 = vmatprep.subr.bf16.mxu0 0
    %1817 = vmatpush1.bf16.msra.mxu0 0
    %1818 = vmatprep.mubr.bf16.mxu0 0
    %1819 = vmatmul.mubr.bf16.gmra.mrb[0].mxu0 %v1528
    %v1820 = vpop.f32.mrb[0].mxu0
    %v1821 = vadd.f32 %v1574, %v1820
    %v1822 = vpop.f32.mrb[0].mxu0
    %v1823 = vadd.f32 %v1578, %v1822
    %v1824 = vpop.f32.mrb[0].mxu0
    %v1825 = vadd.f32 %v1574, %v1824
    %v1826 = vpop.f32.mrb[0].mxu0
    %v1827 = vadd.f32 %v1578, %v1826
    %1828 = vdwg.mxu0
    %v1829 = vmul.f32 %v1778, %v1778
    %v1830 = vmul.f32 %v1780, %v1780
    %v1831 = vmul.f32 %v1821, %v1821
    %v1832 = vmul.f32 %v1823, %v1823
    %v1833 = vmul.f32 %v1782, %v1782
    %v1834 = vmul.f32 %v1784, %v1784
    %v1835 = vmul.f32 %v1825, %v1825
    %v1836 = vmul.f32 %v1827, %v1827
    %v1837 = vmul.f32 %v1778, %v1829
    %v1838 = vmul.f32 %v1780, %v1830
    %v1839 = vmul.f32 %v1821, %v1831
    %v1840 = vmul.f32 %v1823, %v1832
    %v1841 = vmul.f32 %v1782, %v1833
    %v1842 = vmul.f32 %v1784, %v1834
    %v1843 = vmul.f32 %v1825, %v1835
    %v1844 = vmul.f32 %v1827, %v1836
    %v1845 = vmul.f32 %v1837, 0.044715
    %v1846 = vmul.f32 %v1838, 0.044715
    %v1847 = vmul.f32 %v1839, 0.044715
    %v1848 = vmul.f32 %v1840, 0.044715
    %v1849 = vmul.f32 %v1841, 0.044715
    %v1850 = vmul.f32 %v1842, 0.044715
    %v1851 = vmul.f32 %v1843, 0.044715
    %v1852 = vmul.f32 %v1844, 0.044715
    %v1853 = vadd.f32 %v1778, %v1845
    %v1854 = vadd.f32 %v1780, %v1846
    %v1855 = vadd.f32 %v1821, %v1847
    %v1856 = vadd.f32 %v1823, %v1848
    %v1857 = vadd.f32 %v1782, %v1849
    %v1858 = vadd.f32 %v1784, %v1850
    %v1859 = vadd.f32 %v1825, %v1851
    %v1860 = vadd.f32 %v1827, %v1852
    %v1861 = vmul.f32 %v1853, 0.7978846
    %v1862 = vmul.f32 %v1854, 0.7978846
    %v1863 = vmul.f32 %v1855, 0.7978846
    %v1864 = vmul.f32 %v1856, 0.7978846
    %v1865 = vmul.f32 %v1857, 0.7978846
    %v1866 = vmul.f32 %v1858, 0.7978846
    %v1867 = vmul.f32 %v1859, 0.7978846
    %v1868 = vmul.f32 %v1860, 0.7978846
    %v1869 = vtanh.pop %v1861
    %v1870 = vtanh.pop %v1862
    %v1871 = vtanh.pop %v1863
    %v1872 = vtanh.pop %v1864
    %v1873 = vtanh.pop %v1865
    %v1874 = vtanh.pop %v1866
    %v1875 = vtanh.pop %v1867
    %v1876 = vtanh.pop %v1868
    %v1877 = vadd.f32 %v1869, 1.0
    %v1878 = vadd.f32 %v1870, 1.0
    %v1879 = vadd.f32 %v1871, 1.0
    %v1880 = vadd.f32 %v1872, 1.0
    %v1881 = vadd.f32 %v1873, 1.0
    %v1882 = vadd.f32 %v1874, 1.0
    %v1883 = vadd.f32 %v1875, 1.0
    %v1884 = vadd.f32 %v1876, 1.0
    %v1885 = vmul.f32 %v1877, 0.5
    %v1886 = vmul.f32 %v1878, 0.5
    %v1887 = vmul.f32 %v1879, 0.5
    %v1888 = vmul.f32 %v1880, 0.5
    %v1889 = vmul.f32 %v1881, 0.5
    %v1890 = vmul.f32 %v1882, 0.5
    %v1891 = vmul.f32 %v1883, 0.5
    %v1892 = vmul.f32 %v1884, 0.5
    %v1893 = vmul.f32 %v1778, %v1885
    %v1894 = vmul.f32 %v1780, %v1886
    %v1895 = vmul.f32 %v1821, %v1887
    %v1896 = vmul.f32 %v1823, %v1888
    %v1897 = vmul.f32 %v1782, %v1889
    %v1898 = vmul.f32 %v1784, %v1890
    %v1899 = vmul.f32 %v1825, %v1891
    %v1900 = vmul.f32 %v1827, %v1892
    %v1901 = vpack.c.bf16 %v1897, %v1893
    %v1902 = vpack.c.bf16 %v1898, %v1894
    %v1903 = vpack.c.bf16 %v1899, %v1895
    %v1904 = vpack.c.bf16 %v1900, %v1896
    %v1905 = vld [vmem:[#allocation6] sm:$0xf]
    %v1906 = vld [vmem:[#allocation6 + $0x4] sm:$0xf]
    %v1907 = vld [vmem:[#allocation6 + $0x8] sm:$0xf]
    %v1908 = vld [vmem:[#allocation6 + $0xc] sm:$0xf]
    %v1909 = vld [vmem:[#allocation6 + $0x10] sm:$0xf]
    %v1910 = vld [vmem:[#allocation6 + $0x14] sm:$0xf]
    %v1911 = vld [vmem:[#allocation6 + $0x18] sm:$0xf]
    %v1912 = vld [vmem:[#allocation6 + $0x1c] sm:$0xf]
    %v1913 = vld [vmem:[#allocation6 + $0x20] sm:$0xf]
    %v1914 = vld [vmem:[#allocation6 + $0x24] sm:$0xf]
    %v1915 = vld [vmem:[#allocation6 + $0x28] sm:$0xf]
    %v1916 = vld [vmem:[#allocation6 + $0x2c] sm:$0xf]
    %v1917 = vld [vmem:[#allocation6 + $0x30] sm:$0xf]
    %v1918 = vld [vmem:[#allocation6 + $0x34] sm:$0xf]
    %v1919 = vld [vmem:[#allocation6 + $0x38] sm:$0xf]
    %v1920 = vld [vmem:[#allocation6 + $0x3c] sm:$0xf]
    %v1921 = vld [vmem:[#allocation6 + $0x40] sm:$0xf]
    %v1922 = vld [vmem:[#allocation6 + $0x44] sm:$0xf]
    %v1923 = vld [vmem:[#allocation6 + $0x48] sm:$0xf]
    %v1924 = vld [vmem:[#allocation6 + $0x4c] sm:$0xf]
    %v1925 = vld [vmem:[#allocation6 + $0x50] sm:$0xf]
    %v1926 = vld [vmem:[#allocation6 + $0x54] sm:$0xf]
    %v1927 = vld [vmem:[#allocation6 + $0x58] sm:$0xf]
    %v1928 = vld [vmem:[#allocation6 + $0x5c] sm:$0xf]
    %v1929 = vld [vmem:[#allocation6 + $0x60] sm:$0xf]
    %v1930 = vld [vmem:[#allocation6 + $0x64] sm:$0xf]
    %v1931 = vld [vmem:[#allocation6 + $0x68] sm:$0xf]
    %v1932 = vld [vmem:[#allocation6 + $0x6c] sm:$0xf]
    %v1933 = vld [vmem:[#allocation6 + $0x70] sm:$0xf]
    %v1934 = vld [vmem:[#allocation6 + $0x74] sm:$0xf]
    %v1935 = vld [vmem:[#allocation6 + $0x78] sm:$0xf]
    %v1936 = vld [vmem:[#allocation6 + $0x7c] sm:$0xf]
    %v1937 = vld [vmem:[#allocation6 + $0x80] sm:$0xf]
    %v1938 = vld [vmem:[#allocation6 + $0x84] sm:$0xf]
    %v1939 = vld [vmem:[#allocation6 + $0x88] sm:$0xf]
    %v1940 = vld [vmem:[#allocation6 + $0x8c] sm:$0xf]
    %v1941 = vld [vmem:[#allocation6 + $0x90] sm:$0xf]
    %v1942 = vld [vmem:[#allocation6 + $0x94] sm:$0xf]
    %v1943 = vld [vmem:[#allocation6 + $0x98] sm:$0xf]
    %v1944 = vld [vmem:[#allocation6 + $0x9c] sm:$0xf]
    %v1945 = vld [vmem:[#allocation6 + $0xa0] sm:$0xf]
    %v1946 = vld [vmem:[#allocation6 + $0xa4] sm:$0xf]
    %v1947 = vld [vmem:[#allocation6 + $0xa8] sm:$0xf]
    %v1948 = vld [vmem:[#allocation6 + $0xac] sm:$0xf]
    %v1949 = vld [vmem:[#allocation6 + $0xb0] sm:$0xf]
    %v1950 = vld [vmem:[#allocation6 + $0xb4] sm:$0xf]
    %v1951 = vld [vmem:[#allocation6 + $0xb8] sm:$0xf]
    %v1952 = vld [vmem:[#allocation6 + $0xbc] sm:$0xf]
    %v1953 = vld [vmem:[#allocation6 + $0xc0] sm:$0xf]
    %v1954 = vld [vmem:[#allocation6 + $0xc4] sm:$0xf]
    %v1955 = vld [vmem:[#allocation6 + $0xc8] sm:$0xf]
    %v1956 = vld [vmem:[#allocation6 + $0xcc] sm:$0xf]
    %v1957 = vld [vmem:[#allocation6 + $0xd0] sm:$0xf]
    %v1958 = vld [vmem:[#allocation6 + $0xd4] sm:$0xf]
    %v1959 = vld [vmem:[#allocation6 + $0xd8] sm:$0xf]
    %v1960 = vld [vmem:[#allocation6 + $0xdc] sm:$0xf]
    %v1961 = vld [vmem:[#allocation6 + $0xe0] sm:$0xf]
    %v1962 = vld [vmem:[#allocation6 + $0xe4] sm:$0xf]
    %v1963 = vld [vmem:[#allocation6 + $0xe8] sm:$0xf]
    %v1964 = vld [vmem:[#allocation6 + $0xec] sm:$0xf]
    %v1965 = vld [vmem:[#allocation6 + $0xf0] sm:$0xf]
    %v1966 = vld [vmem:[#allocation6 + $0xf4] sm:$0xf]
    %v1967 = vld [vmem:[#allocation6 + $0xf8] sm:$0xf]
    %v1968 = vld [vmem:[#allocation6 + $0xfc] sm:$0xf]
    %v1969 = vld [vmem:[%s13] sm:$0x1]
    %v1971 = vlaneseq
    %v1972 = vshrl.u32 %v1971, 7
    %v1973 = vsub.s32 0, %v1972
    %v1974 = vrot.slane %v1969, %v1973
    %v2040 = vunpack.c.l.b16 %v1905
    %v2041 = vunpack.c.l.b16 %v1906
    %v2042 = vunpack.c.l.b16 %v1907
    %v2043 = vunpack.c.l.b16 %v1908
    %v2044 = vunpack.c.l.b16 %v1909
    %v2045 = vunpack.c.l.b16 %v1910
    %v2046 = vunpack.c.l.b16 %v1911
    %v2047 = vunpack.c.l.b16 %v1912
    %v2048 = vunpack.c.l.b16 %v1913
    %v2049 = vunpack.c.l.b16 %v1914
    %v2050 = vunpack.c.l.b16 %v1915
    %v2051 = vunpack.c.l.b16 %v1916
    %v2052 = vunpack.c.l.b16 %v1917
    %v2053 = vunpack.c.l.b16 %v1918
    %v2054 = vunpack.c.l.b16 %v1919
    %v2055 = vunpack.c.l.b16 %v1920
    %v2056 = vunpack.c.l.b16 %v1921
    %v2057 = vunpack.c.l.b16 %v1922
    %v2058 = vunpack.c.l.b16 %v1923
    %v2059 = vunpack.c.l.b16 %v1924
    %v2060 = vunpack.c.l.b16 %v1925
    %v2061 = vunpack.c.l.b16 %v1926
    %v2062 = vunpack.c.l.b16 %v1927
    %v2063 = vunpack.c.l.b16 %v1928
    %v2064 = vunpack.c.l.b16 %v1929
    %v2065 = vunpack.c.l.b16 %v1930
    %v2066 = vunpack.c.l.b16 %v1931
    %v2067 = vunpack.c.l.b16 %v1932
    %v2068 = vunpack.c.l.b16 %v1933
    %v2069 = vunpack.c.l.b16 %v1934
    %v2070 = vunpack.c.l.b16 %v1935
    %v2071 = vunpack.c.l.b16 %v1936
    %v2072 = vunpack.c.l.b16 %v1937
    %v2073 = vunpack.c.l.b16 %v1938
    %v2074 = vunpack.c.l.b16 %v1939
    %v2075 = vunpack.c.l.b16 %v1940
    %v2076 = vunpack.c.l.b16 %v1941
    %v2077 = vunpack.c.l.b16 %v1942
    %v2078 = vunpack.c.l.b16 %v1943
    %v2079 = vunpack.c.l.b16 %v1944
    %v2080 = vunpack.c.l.b16 %v1945
    %v2081 = vunpack.c.l.b16 %v1946
    %v2082 = vunpack.c.l.b16 %v1947
    %v2083 = vunpack.c.l.b16 %v1948
    %v2084 = vunpack.c.l.b16 %v1949
    %v2085 = vunpack.c.l.b16 %v1950
    %v2086 = vunpack.c.l.b16 %v1951
    %v2087 = vunpack.c.l.b16 %v1952
    %v2088 = vunpack.c.l.b16 %v1953
    %v2089 = vunpack.c.l.b16 %v1954
    %v2090 = vunpack.c.l.b16 %v1955
    %v2091 = vunpack.c.l.b16 %v1956
    %v2092 = vunpack.c.l.b16 %v1957
    %v2093 = vunpack.c.l.b16 %v1958
    %v2094 = vunpack.c.l.b16 %v1959
    %v2095 = vunpack.c.l.b16 %v1960
    %v2096 = vunpack.c.l.b16 %v1961
    %v2097 = vunpack.c.l.b16 %v1962
    %v2098 = vunpack.c.l.b16 %v1963
    %v2099 = vunpack.c.l.b16 %v1964
    %v2100 = vunpack.c.l.b16 %v1965
    %v2101 = vunpack.c.l.b16 %v1966
    %v2102 = vunpack.c.l.b16 %v1967
    %v2103 = vunpack.c.l.b16 %v1968
    %v2104 = vpack.c.b16 %v2041, %v2040
    %v2105 = vpack.c.b16 %v2043, %v2042
    %v2106 = vpack.c.b16 %v2045, %v2044
    %v2107 = vpack.c.b16 %v2047, %v2046
    %v2108 = vpack.c.b16 %v2049, %v2048
    %v2109 = vpack.c.b16 %v2051, %v2050
    %v2110 = vpack.c.b16 %v2053, %v2052
    %v2111 = vpack.c.b16 %v2055, %v2054
    %v2112 = vpack.c.b16 %v2057, %v2056
    %v2113 = vpack.c.b16 %v2059, %v2058
    %v2114 = vpack.c.b16 %v2061, %v2060
    %v2115 = vpack.c.b16 %v2063, %v2062
    %v2116 = vpack.c.b16 %v2065, %v2064
    %v2117 = vpack.c.b16 %v2067, %v2066
    %v2118 = vpack.c.b16 %v2069, %v2068
    %v2119 = vpack.c.b16 %v2071, %v2070
    %v2120 = vpack.c.b16 %v2073, %v2072
    %v2121 = vpack.c.b16 %v2075, %v2074
    %v2122 = vpack.c.b16 %v2077, %v2076
    %v2123 = vpack.c.b16 %v2079, %v2078
    %v2124 = vpack.c.b16 %v2081, %v2080
    %v2125 = vpack.c.b16 %v2083, %v2082
    %v2126 = vpack.c.b16 %v2085, %v2084
    %v2127 = vpack.c.b16 %v2087, %v2086
    %v2128 = vpack.c.b16 %v2089, %v2088
    %v2129 = vpack.c.b16 %v2091, %v2090
    %v2130 = vpack.c.b16 %v2093, %v2092
    %v2131 = vpack.c.b16 %v2095, %v2094
    %v2132 = vpack.c.b16 %v2097, %v2096
    %v2133 = vpack.c.b16 %v2099, %v2098
    %v2134 = vpack.c.b16 %v2101, %v2100
    %v2135 = vpack.c.b16 %v2103, %v2102
    %2168 = vmatprep.subr.bf16.mxu0 0
    %2169 = vmatpush1.bf16.msra.mxu0 %v2104
    %2170 = vmatprep.subr.bf16.mxu0 0
    %2171 = vmatpush1.bf16.msra.mxu0 %v2105
    %2172 = vmatprep.subr.bf16.mxu0 0
    %2173 = vmatpush1.bf16.msra.mxu0 %v2106
    %2174 = vmatprep.subr.bf16.mxu0 0
    %2175 = vmatpush1.bf16.msra.mxu0 %v2107
    %2176 = vmatprep.subr.bf16.mxu0 0
    %2177 = vmatpush1.bf16.msra.mxu0 %v2108
    %2178 = vmatprep.subr.bf16.mxu0 0
    %2179 = vmatpush1.bf16.msra.mxu0 %v2109
    %2180 = vmatprep.subr.bf16.mxu0 0
    %2181 = vmatpush1.bf16.msra.mxu0 %v2110
    %2182 = vmatprep.subr.bf16.mxu0 0
    %2183 = vmatpush1.bf16.msra.mxu0 %v2111
    %2184 = vmatprep.subr.bf16.mxu0 0
    %2185 = vmatpush1.bf16.msra.mxu0 %v2112
    %2186 = vmatprep.subr.bf16.mxu0 0
    %2187 = vmatpush1.bf16.msra.mxu0 %v2113
    %2188 = vmatprep.subr.bf16.mxu0 0
    %2189 = vmatpush1.bf16.msra.mxu0 %v2114
    %2190 = vmatprep.subr.bf16.mxu0 0
    %2191 = vmatpush1.bf16.msra.mxu0 %v2115
    %2192 = vmatprep.subr.bf16.mxu0 0
    %2193 = vmatpush1.bf16.msra.mxu0 %v2116
    %2194 = vmatprep.subr.bf16.mxu0 0
    %2195 = vmatpush1.bf16.msra.mxu0 %v2117
    %2196 = vmatprep.subr.bf16.mxu0 0
    %2197 = vmatpush1.bf16.msra.mxu0 %v2118
    %2198 = vmatprep.subr.bf16.mxu0 0
    %2199 = vmatpush1.bf16.msra.mxu0 %v2119
    %2200 = vmatprep.mubr.bf16.mxu0 %v1902
    %2201 = vmatmul.mubr.bf16.gmra.mrb[0].mxu0 %v1901
    %v2202 = vpop.f32.mrb[0].mxu0
    %v2203 = vadd.f32 %v1974, %v2202
    %v2204 = vpop.f32.mrb[0].mxu0
    %v2205 = vpop.f32.mrb[0].mxu0
    %v2206 = vadd.f32 %v1974, %v2205
    %v2207 = vpop.f32.mrb[0].mxu0
    %2208 = vdwg.mxu0
    %2209 = vmatprep.subr.bf16.mxu0 0
    %2210 = vmatpush1.bf16.msra.mxu0 %v2120
    %2211 = vmatprep.subr.bf16.mxu0 0
    %2212 = vmatpush1.bf16.msra.mxu0 %v2121
    %2213 = vmatprep.subr.bf16.mxu0 0
    %2214 = vmatpush1.bf16.msra.mxu0 %v2122
    %2215 = vmatprep.subr.bf16.mxu0 0
    %2216 = vmatpush1.bf16.msra.mxu0 %v2123
    %2217 = vmatprep.subr.bf16.mxu0 0
    %2218 = vmatpush1.bf16.msra.mxu0 %v2124
    %2219 = vmatprep.subr.bf16.mxu0 0
    %2220 = vmatpush1.bf16.msra.mxu0 %v2125
    %2221 = vmatprep.subr.bf16.mxu0 0
    %2222 = vmatpush1.bf16.msra.mxu0 %v2126
    %2223 = vmatprep.subr.bf16.mxu0 0
    %2224 = vmatpush1.bf16.msra.mxu0 %v2127
    %2225 = vmatprep.subr.bf16.mxu0 0
    %2226 = vmatpush1.bf16.msra.mxu0 %v2128
    %2227 = vmatprep.subr.bf16.mxu0 0
    %2228 = vmatpush1.bf16.msra.mxu0 %v2129
    %2229 = vmatprep.subr.bf16.mxu0 0
    %2230 = vmatpush1.bf16.msra.mxu0 %v2130
    %2231 = vmatprep.subr.bf16.mxu0 0
    %2232 = vmatpush1.bf16.msra.mxu0 %v2131
    %2233 = vmatprep.subr.bf16.mxu0 0
    %2234 = vmatpush1.bf16.msra.mxu0 %v2132
    %2235 = vmatprep.subr.bf16.mxu0 0
    %2236 = vmatpush1.bf16.msra.mxu0 %v2133
    %2237 = vmatprep.subr.bf16.mxu0 0
    %2238 = vmatpush1.bf16.msra.mxu0 %v2134
    %2239 = vmatprep.subr.bf16.mxu0 0
    %2240 = vmatpush1.bf16.msra.mxu0 %v2135
    %2241 = vmatprep.mubr.bf16.mxu0 %v1904
    %2242 = vmatmul.mubr.bf16.gmra.mrb[0].mxu0 %v1903
    %v2243 = vpop.f32.mrb[0].mxu0
    %v2244 = vadd.f32 %v2203, %v2243
    %v2245 = vpop.f32.mrb[0].mxu0
    %v2246 = vpop.f32.mrb[0].mxu0
    %v2247 = vadd.f32 %v2206, %v2246
    %v2248 = vpop.f32.mrb[0].mxu0
    %2249 = vdwg.mxu0
    %v2250 = vadd.f32 %v1526, %v2244
    %v2251 = vadd.f32 %v1527, %v2247
    %v2252 = vld [vmem:[%s14] sm:$0x1]
    %v2253 = vld [vmem:[%s15] sm:$0x1]
    %2254 = vadd.xlane.f32.xlu0 %v2250
    %v2255 = vpop.xlane.xlu0 %2254
    %2256 = vadd.xlane.f32.xlu0 %v2251
    %v2257 = vpop.xlane.xlu0 %2256
    %v2258 = vmul.f32 %v2255, %v103
    %v2259 = vmul.f32 %v2257, %v103
    %v2260 = vsub.f32 %v2250, %v2258
    %v2261 = vsub.f32 %v2251, %v2259
    %v2262 = vmul.f32 %v2260, %v2260
    %v2263 = vmul.f32 %v2261, %v2261
    %2264 = vadd.xlane.f32.xlu0 %v2262
    %v2265 = vpop.xlane.xlu0 %2264
    %2266 = vadd.xlane.f32.xlu0 %v2263
    %v2267 = vpop.xlane.xlu0 %2266
    %v2268 = vmul.f32 %v2265, %v103
    %v2269 = vmul.f32 %v2267, %v103
    %v2270 = vadd.f32 %v2268, 1e-12
    %v2271 = vadd.f32 %v2269, 1e-12
    %v2272 = vrsqrt.pop %v2270
    %v2273 = vrsqrt.pop %v2271
    %v2274 = vmul.f32 %v2260, %v2272
    %v2275 = vmul.f32 %v2261, %v2273
    %v2277 = vlaneseq
    %v2278 = vshrl.u32 %v2277, 7
    %v2279 = vsub.s32 0, %v2278
    %v2280 = vrot.slane %v2252, %v2279
    %v2282 = vmul.f32 %v2274, %v2280
    %v2283 = vmul.f32 %v2275, %v2280
    %v2285 = vlaneseq
    %v2286 = vshrl.u32 %v2285, 7
    %v2287 = vsub.s32 0, %v2286
    %v2288 = vrot.slane %v2253, %v2287
    %v2290 = vadd.f32 %v2282, %v2288
    %v2291 = vadd.f32 %v2283, %v2288
    %v2292 = vpack.c.bf16 %v2291, %v2290
    %s2293 = scalar_lea.vmem [#allocation2], 192
    %v2294 = vld [vmem:[%s2293] sm:$0xff]
    %v2295 = vld [vmem:[%s2293 + $0x8] sm:$0xf]
    %v2296 = vld [vmem:[%s2293 + $0xc] sm:$0xff]
    %v2297 = vld [vmem:[%s2293 + $0x14] sm:$0xf]
    %v2298 = vld [vmem:[%s2293 + $0x18] sm:$0xff]
    %v2299 = vld [vmem:[%s2293 + $0x20] sm:$0xf]
    %v2300 = vld [vmem:[%s2293 + $0x24] sm:$0xff]
    %v2301 = vld [vmem:[%s2293 + $0x2c] sm:$0xf]
    %v2302 = vld [vmem:[%s2293 + $0x30] sm:$0xff]
    %v2303 = vld [vmem:[%s2293 + $0x38] sm:$0xf]
    %v2304 = vld [vmem:[%s2293 + $0x3c] sm:$0xff]
    %v2305 = vld [vmem:[%s2293 + $0x44] sm:$0xf]
    %v2306 = vld [vmem:[%s2293 + $0x48] sm:$0xff]
    %v2307 = vld [vmem:[%s2293 + $0x50] sm:$0xf]
    %v2308 = vld [vmem:[%s2293 + $0x54] sm:$0xff]
    %v2309 = vld [vmem:[%s2293 + $0x5c] sm:$0xf]
    %v2310 = vld [vmem:[%s2293 + $0x60] sm:$0xff]
    %v2311 = vld [vmem:[%s2293 + $0x68] sm:$0xf]
    %v2312 = vld [vmem:[%s2293 + $0x6c] sm:$0xff]
    %v2313 = vld [vmem:[%s2293 + $0x74] sm:$0xf]
    %v2314 = vld [vmem:[%s2293 + $0x78] sm:$0xff]
    %v2315 = vld [vmem:[%s2293 + $0x80] sm:$0xf]
    %v2316 = vld [vmem:[%s2293 + $0x84] sm:$0xff]
    %v2317 = vld [vmem:[%s2293 + $0x8c] sm:$0xf]
    %v2318 = vld [vmem:[%s2293 + $0x90] sm:$0xff]
    %v2319 = vld [vmem:[%s2293 + $0x98] sm:$0xf]
    %v2320 = vld [vmem:[%s2293 + $0x9c] sm:$0xff]
    %v2321 = vld [vmem:[%s2293 + $0xa4] sm:$0xf]
    %v2322 = vld [vmem:[%s2293 + $0xa8] sm:$0xff]
    %v2323 = vld [vmem:[%s2293 + $0xb0] sm:$0xf]
    %v2324 = vld [vmem:[%s2293 + $0xb4] sm:$0xff]
    %v2325 = vld [vmem:[%s2293 + $0xbc] sm:$0xf]
    %s2326 = scalar_lea.vmem %s5, 3
    %v2327 = vld [vmem:[%s2326] sm:$0x7]
    %v2329 = vlaneseq
    %v2330 = vshrl.u32 %v2329, 7
    %v2331 = vsub.s32 0, %v2330
    %v2332 = vrot.slane %v2327, %v2331
    %v2333 = vlaneseq
    %v2334 = vshrl.u32 %v2333, 7
    %v2335 = vsub.s32 1, %v2334
    %v2336 = vrot.slane %v2327, %v2335
    %v2337 = vlaneseq
    %v2338 = vshrl.u32 %v2337, 7
    %v2339 = vsub.s32 2, %v2338
    %v2340 = vrot.slane %v2327, %v2339
    %v2376 = vunpack.c.l.b16 %v2294
    %v2377 = vunpack.c.h.b16 %v2294
    %v2378 = vunpack.c.l.b16 %v2295
    %v2379 = vunpack.c.l.b16 %v2296
    %v2380 = vunpack.c.h.b16 %v2296
    %v2381 = vunpack.c.l.b16 %v2297
    %v2382 = vunpack.c.l.b16 %v2298
    %v2383 = vunpack.c.h.b16 %v2298
    %v2384 = vunpack.c.l.b16 %v2299
    %v2385 = vunpack.c.l.b16 %v2300
    %v2386 = vunpack.c.h.b16 %v2300
    %v2387 = vunpack.c.l.b16 %v2301
    %v2388 = vunpack.c.l.b16 %v2302
    %v2389 = vunpack.c.h.b16 %v2302
    %v2390 = vunpack.c.l.b16 %v2303
    %v2391 = vunpack.c.l.b16 %v2304
    %v2392 = vunpack.c.h.b16 %v2304
    %v2393 = vunpack.c.l.b16 %v2305
    %v2394 = vunpack.c.l.b16 %v2306
    %v2395 = vunpack.c.h.b16 %v2306
    %v2396 = vunpack.c.l.b16 %v2307
    %v2397 = vunpack.c.l.b16 %v2308
    %v2398 = vunpack.c.h.b16 %v2308
    %v2399 = vunpack.c.l.b16 %v2309
    %v2400 = vunpack.c.l.b16 %v2310
    %v2401 = vunpack.c.h.b16 %v2310
    %v2402 = vunpack.c.l.b16 %v2311
    %v2403 = vunpack.c.l.b16 %v2312
    %v2404 = vunpack.c.h.b16 %v2312
    %v2405 = vunpack.c.l.b16 %v2313
    %v2406 = vunpack.c.l.b16 %v2314
    %v2407 = vunpack.c.h.b16 %v2314
    %v2408 = vunpack.c.l.b16 %v2315
    %v2409 = vunpack.c.l.b16 %v2316
    %v2410 = vunpack.c.h.b16 %v2316
    %v2411 = vunpack.c.l.b16 %v2317
    %v2412 = vunpack.c.l.b16 %v2318
    %v2413 = vunpack.c.h.b16 %v2318
    %v2414 = vunpack.c.l.b16 %v2319
    %v2415 = vunpack.c.l.b16 %v2320
    %v2416 = vunpack.c.h.b16 %v2320
    %v2417 = vunpack.c.l.b16 %v2321
    %v2418 = vunpack.c.l.b16 %v2322
    %v2419 = vunpack.c.h.b16 %v2322
    %v2420 = vunpack.c.l.b16 %v2323
    %v2421 = vunpack.c.l.b16 %v2324
    %v2422 = vunpack.c.h.b16 %v2324
    %v2423 = vunpack.c.l.b16 %v2325
    %v2424 = vpack.c.b16 %v2379, %v2376
    %v2425 = vpack.c.b16 %v2380, %v2377
    %v2426 = vpack.c.b16 %v2381, %v2378
    %v2427 = vpack.c.b16 %v2385, %v2382
    %v2428 = vpack.c.b16 %v2386, %v2383
    %v2429 = vpack.c.b16 %v2387, %v2384
    %v2430 = vpack.c.b16 %v2391, %v2388
    %v2431 = vpack.c.b16 %v2392, %v2389
    %v2432 = vpack.c.b16 %v2393, %v2390
    %v2433 = vpack.c.b16 %v2397, %v2394
    %v2434 = vpack.c.b16 %v2398, %v2395
    %v2435 = vpack.c.b16 %v2399, %v2396
    %v2436 = vpack.c.b16 %v2403, %v2400
    %v2437 = vpack.c.b16 %v2404, %v2401
    %v2438 = vpack.c.b16 %v2405, %v2402
    %v2439 = vpack.c.b16 %v2409, %v2406
    %v2440 = vpack.c.b16 %v2410, %v2407
    %v2441 = vpack.c.b16 %v2411, %v2408
    %v2442 = vpack.c.b16 %v2415, %v2412
    %v2443 = vpack.c.b16 %v2416, %v2413
    %v2444 = vpack.c.b16 %v2417, %v2414
    %v2445 = vpack.c.b16 %v2421, %v2418
    %v2446 = vpack.c.b16 %v2422, %v2419
    %v2447 = vpack.c.b16 %v2423, %v2420
    %2472 = vmatprep.subr.bf16.mxu0 %v2425
    %2473 = vmatpush1.bf16.msra.mxu0 %v2424
    %2474 = vmatprep.subr.bf16.mxu0 %v2428
    %2475 = vmatpush1.bf16.msra.mxu0 %v2427
    %2476 = vmatprep.subr.bf16.mxu0 %v2431
    %2477 = vmatpush1.bf16.msra.mxu0 %v2430
    %2478 = vmatprep.subr.bf16.mxu0 %v2434
    %2479 = vmatpush1.bf16.msra.mxu0 %v2433
    %2480 = vmatprep.subr.bf16.mxu0 %v2437
    %2481 = vmatpush1.bf16.msra.mxu0 %v2436
    %2482 = vmatprep.subr.bf16.mxu0 %v2440
    %2483 = vmatpush1.bf16.msra.mxu0 %v2439
    %2484 = vmatprep.subr.bf16.mxu0 %v2443
    %2485 = vmatpush1.bf16.msra.mxu0 %v2442
    %2486 = vmatprep.subr.bf16.mxu0 %v2446
    %2487 = vmatpush1.bf16.msra.mxu0 %v2445
    %2488 = vmatprep.subr.bf16.mxu0 0
    %2489 = vmatpush1.bf16.msra.mxu0 0
    %2490 = vmatprep.subr.bf16.mxu0 0
    %2491 = vmatpush1.bf16.msra.mxu0 0
    %2492 = vmatprep.subr.bf16.mxu0 0
    %2493 = vmatpush1.bf16.msra.mxu0 0
    %2494 = vmatprep.subr.bf16.mxu0 0
    %2495 = vmatpush1.bf16.msra.mxu0 0
    %2496 = vmatprep.subr.bf16.mxu0 0
    %2497 = vmatpush1.bf16.msra.mxu0 0
    %2498 = vmatprep.subr.bf16.mxu0 0
    %2499 = vmatpush1.bf16.msra.mxu0 0
    %2500 = vmatprep.subr.bf16.mxu0 0
    %2501 = vmatpush1.bf16.msra.mxu0 0
    %2502 = vmatprep.subr.bf16.mxu0 0
    %2503 = vmatpush1.bf16.msra.mxu0 0
    %2504 = vmatprep.mubr.bf16.mxu0 0
    %2505 = vmatmul.mubr.bf16.gmra.mrb[0].mxu0 %v2292
    %v2506 = vpop.f32.mrb[0].mxu0
    %v2507 = vadd.f32 %v2332, %v2506
    %v2508 = vpop.f32.mrb[0].mxu0
    %v2509 = vadd.f32 %v2336, %v2508
    %v2510 = vpop.f32.mrb[0].mxu0
    %v2511 = vadd.f32 %v2332, %v2510
    %v2512 = vpop.f32.mrb[0].mxu0
    %v2513 = vadd.f32 %v2336, %v2512
    %2514 = vdwg.mxu0
    %2515 = vmatprep.subr.bf16.mxu0 0
    %2516 = vmatpush1.bf16.msra.mxu0 %v2426
    %2517 = vmatprep.subr.bf16.mxu0 0
    %2518 = vmatpush1.bf16.msra.mxu0 %v2429
    %2519 = vmatprep.subr.bf16.mxu0 0
    %2520 = vmatpush1.bf16.msra.mxu0 %v2432
    %2521 = vmatprep.subr.bf16.mxu0 0
    %2522 = vmatpush1.bf16.msra.mxu0 %v2435
    %2523 = vmatprep.subr.bf16.mxu0 0
    %2524 = vmatpush1.bf16.msra.mxu0 %v2438
    %2525 = vmatprep.subr.bf16.mxu0 0
    %2526 = vmatpush1.bf16.msra.mxu0 %v2441
    %2527 = vmatprep.subr.bf16.mxu0 0
    %2528 = vmatpush1.bf16.msra.mxu0 %v2444
    %2529 = vmatprep.subr.bf16.mxu0 0
    %2530 = vmatpush1.bf16.msra.mxu0 %v2447
    %2531 = vmatprep.subr.bf16.mxu0 0
    %2532 = vmatpush1.bf16.msra.mxu0 0
    %2533 = vmatprep.subr.bf16.mxu0 0
    %2534 = vmatpush1.bf16.msra.mxu0 0
    %2535 = vmatprep.subr.bf16.mxu0 0
    %2536 = vmatpush1.bf16.msra.mxu0 0
    %2537 = vmatprep.subr.bf16.mxu0 0
    %2538 = vmatpush1.bf16.msra.mxu0 0
    %2539 = vmatprep.subr.bf16.mxu0 0
    %2540 = vmatpush1.bf16.msra.mxu0 0
    %2541 = vmatprep.subr.bf16.mxu0 0
    %2542 = vmatpush1.bf16.msra.mxu0 0
    %2543 = vmatprep.subr.bf16.mxu0 0
    %2544 = vmatpush1.bf16.msra.mxu0 0
    %2545 = vmatprep.subr.bf16.mxu0 0
    %2546 = vmatpush1.bf16.msra.mxu0 0
    %2547 = vmatprep.mubr.bf16.mxu0 0
    %2548 = vmatmul.mubr.bf16.gmra.mrb[0].mxu0 %v2292
    %v2549 = vpop.f32.mrb[0].mxu0
    %v2550 = vadd.f32 %v2340, %v2549
    %v2551 = vpop.f32.mrb[0].mxu0
    %v2552 = vpop.f32.mrb[0].mxu0
    %v2553 = vadd.f32 %v2340, %v2552
    %v2554 = vpop.f32.mrb[0].mxu0
    %2555 = vdwg.mxu0
    %v2556 = vpack.c.bf16 %v2511, %v2507
    %2558 = vrot.lane.b32.xlu0 %v2556, 96
    %v2559 = vpop.permute.xlu0 %2558
    %2560 = vrot.lane.b32.xlu0 %v2556, 64
    %v2561 = vpop.permute.xlu0 %2560
    %2562 = vrot.lane.b32.xlu0 %v2556, 32
    %v2563 = vpop.permute.xlu0 %2562
    %v2564 = vunpack.c.l.b16 %v2556
    %v2565 = vunpack.c.h.b16 %v2556
    %v2566 = vunpack.c.l.b16 %v2559
    %v2567 = vunpack.c.h.b16 %v2559
    %v2568 = vunpack.c.l.b16 %v2561
    %v2569 = vunpack.c.h.b16 %v2561
    %v2570 = vunpack.c.l.b16 %v2563
    %v2571 = vunpack.c.h.b16 %v2563
    %v2572 = vpack.c.b16 %v2564, %v2564
    %v2573 = vpack.c.b16 %v2565, %v2565
    %v2574 = vpack.c.b16 %v2566, %v2566
    %v2575 = vpack.c.b16 %v2567, %v2567
    %v2576 = vpack.c.b16 %v2568, %v2568
    %v2577 = vpack.c.b16 %v2569, %v2569
    %v2578 = vpack.c.b16 %v2570, %v2570
    %v2579 = vpack.c.b16 %v2571, %v2571
    %v2580 = vpack.c.bf16 %v2513, %v2509
    %2582 = vrot.lane.b32.xlu0 %v2580, 96
    %v2583 = vpop.permute.xlu0 %2582
    %2584 = vrot.lane.b32.xlu0 %v2580, 64
    %v2585 = vpop.permute.xlu0 %2584
    %2586 = vrot.lane.b32.xlu0 %v2580, 32
    %v2587 = vpop.permute.xlu0 %2586
    %v2588 = vunpack.c.l.b16 %v2580
    %v2589 = vunpack.c.h.b16 %v2580
    %v2590 = vunpack.c.l.b16 %v2583
    %v2591 = vunpack.c.h.b16 %v2583
    %v2592 = vunpack.c.l.b16 %v2585
    %v2593 = vunpack.c.h.b16 %v2585
    %v2594 = vunpack.c.l.b16 %v2587
    %v2595 = vunpack.c.h.b16 %v2587
    %v2596 = vpack.c.b16 %v2588, %v2588
    %v2597 = vpack.c.b16 %v2589, %v2589
    %v2598 = vpack.c.b16 %v2590, %v2590
    %v2599 = vpack.c.b16 %v2591, %v2591
    %v2600 = vpack.c.b16 %v2592, %v2592
    %v2601 = vpack.c.b16 %v2593, %v2593
    %v2602 = vpack.c.b16 %v2594, %v2594
    %v2603 = vpack.c.b16 %v2595, %v2595
    %v2604 = vpack.c.bf16 %v2553, %v2550
    %2606 = vrot.lane.b32.xlu0 %v2604, 96
    %v2607 = vpop.permute.xlu0 %2606
    %2608 = vrot.lane.b32.xlu0 %v2604, 64
    %v2609 = vpop.permute.xlu0 %2608
    %2610 = vrot.lane.b32.xlu0 %v2604, 32
    %v2611 = vpop.permute.xlu0 %2610
    %v2612 = vunpack.c.l.b16 %v2604
    %v2613 = vunpack.c.h.b16 %v2604
    %v2614 = vunpack.c.l.b16 %v2607
    %v2615 = vunpack.c.h.b16 %v2607
    %v2616 = vunpack.c.l.b16 %v2609
    %v2617 = vunpack.c.h.b16 %v2609
    %v2618 = vunpack.c.l.b16 %v2611
    %v2619 = vunpack.c.h.b16 %v2611
    %v2620 = vpack.c.b16 %v2612, %v2612
    %v2621 = vpack.c.b16 %v2613, %v2613
    %v2622 = vpack.c.b16 %v2614, %v2614
    %v2623 = vpack.c.b16 %v2615, %v2615
    %v2624 = vpack.c.b16 %v2616, %v2616
    %v2625 = vpack.c.b16 %v2617, %v2617
    %v2626 = vpack.c.b16 %v2618, %v2618
    %v2627 = vpack.c.b16 %v2619, %v2619
    %v2629 = vsel %vm506, %v2572, 0
    %v2632 = vsel %vm506, %v2596, 0
    %2634 = vmatprep.subr.bf16.mxu0 0
    %2635 = vmatpush1.bf16.xpose.msra.mxu0 %v2632
    %2636 = vmatprep.subr.bf16.mxu0 0
    %2637 = vmatpush1.bf16.xpose.msra.mxu0 0
    %2638 = vmatprep.subr.bf16.mxu0 0
    %2639 = vmatpush1.bf16.xpose.msra.mxu0 0
    %2640 = vmatprep.subr.bf16.mxu0 0
    %2641 = vmatpush1.bf16.xpose.msra.mxu0 0
    %2642 = vmatprep.subr.bf16.mxu0 0
    %2643 = vmatpush1.bf16.xpose.msra.mxu0 0
    %2644 = vmatprep.subr.bf16.mxu0 0
    %2645 = vmatpush1.bf16.xpose.msra.mxu0 0
    %2646 = vmatprep.subr.bf16.mxu0 0
    %2647 = vmatpush1.bf16.xpose.msra.mxu0 0
    %2648 = vmatprep.subr.bf16.mxu0 0
    %2649 = vmatpush1.bf16.xpose.msra.mxu0 0
    %2650 = vmatprep.subr.bf16.mxu0 0
    %2651 = vmatpush1.bf16.xpose.msra.mxu0 0
    %2652 = vmatprep.subr.bf16.mxu0 0
    %2653 = vmatpush1.bf16.xpose.msra.mxu0 0
    %2654 = vmatprep.subr.bf16.mxu0 0
    %2655 = vmatpush1.bf16.xpose.msra.mxu0 0
    %2656 = vmatprep.subr.bf16.mxu0 0
    %2657 = vmatpush1.bf16.xpose.msra.mxu0 0
    %2658 = vmatprep.subr.bf16.mxu0 0
    %2659 = vmatpush1.bf16.xpose.msra.mxu0 0
    %2660 = vmatprep.subr.bf16.mxu0 0
    %2661 = vmatpush1.bf16.xpose.msra.mxu0 0
    %2662 = vmatprep.subr.bf16.mxu0 0
    %2663 = vmatpush1.bf16.xpose.msra.mxu0 0
    %2664 = vmatprep.subr.bf16.mxu0 0
    %2665 = vmatpush1.bf16.xpose.msra.mxu0 0
    %2666 = vmatprep.mubr.bf16.mxu0 0
    %2667 = vmatmul.mubr.bf16.gmra.mrb[0].mxu0 %v2629
    %v2668 = vpop.f32.mrb[0].mxu0
    %v2669 = vadd.f32 %v165, %v2668
    %v2670 = vpop.f32.mrb[0].mxu0
    %v2671 = vpop.f32.mrb[0].mxu0
    %v2672 = vpop.f32.mrb[0].mxu0
    %2673 = vdwg.mxu0
    %v2675 = vsel %vm506, %v2573, 0
    %v2678 = vsel %vm506, %v2597, 0
    %2680 = vmatprep.subr.bf16.mxu0 0
    %2681 = vmatpush1.bf16.xpose.msra.mxu0 %v2678
    %2682 = vmatprep.subr.bf16.mxu0 0
    %2683 = vmatpush1.bf16.xpose.msra.mxu0 0
    %2684 = vmatprep.subr.bf16.mxu0 0
    %2685 = vmatpush1.bf16.xpose.msra.mxu0 0
    %2686 = vmatprep.subr.bf16.mxu0 0
    %2687 = vmatpush1.bf16.xpose.msra.mxu0 0
    %2688 = vmatprep.subr.bf16.mxu0 0
    %2689 = vmatpush1.bf16.xpose.msra.mxu0 0
    %2690 = vmatprep.subr.bf16.mxu0 0
    %2691 = vmatpush1.bf16.xpose.msra.mxu0 0
    %2692 = vmatprep.subr.bf16.mxu0 0
    %2693 = vmatpush1.bf16.xpose.msra.mxu0 0
    %2694 = vmatprep.subr.bf16.mxu0 0
    %2695 = vmatpush1.bf16.xpose.msra.mxu0 0
    %2696 = vmatprep.subr.bf16.mxu0 0
    %2697 = vmatpush1.bf16.xpose.msra.mxu0 0
    %2698 = vmatprep.subr.bf16.mxu0 0
    %2699 = vmatpush1.bf16.xpose.msra.mxu0 0
    %2700 = vmatprep.subr.bf16.mxu0 0
    %2701 = vmatpush1.bf16.xpose.msra.mxu0 0
    %2702 = vmatprep.subr.bf16.mxu0 0
    %2703 = vmatpush1.bf16.xpose.msra.mxu0 0
    %2704 = vmatprep.subr.bf16.mxu0 0
    %2705 = vmatpush1.bf16.xpose.msra.mxu0 0
    %2706 = vmatprep.subr.bf16.mxu0 0
    %2707 = vmatpush1.bf16.xpose.msra.mxu0 0
    %2708 = vmatprep.subr.bf16.mxu0 0
    %2709 = vmatpush1.bf16.xpose.msra.mxu0 0
    %2710 = vmatprep.subr.bf16.mxu0 0
    %2711 = vmatpush1.bf16.xpose.msra.mxu0 0
    %2712 = vmatprep.mubr.bf16.mxu0 0
    %2713 = vmatmul.mubr.bf16.gmra.mrb[0].mxu0 %v2675
    %v2714 = vpop.f32.mrb[0].mxu0
    %v2715 = vadd.f32 %v169, %v2714
    %v2716 = vpop.f32.mrb[0].mxu0
    %v2717 = vpop.f32.mrb[0].mxu0
    %v2718 = vpop.f32.mrb[0].mxu0
    %2719 = vdwg.mxu0
    %v2721 = vsel %vm506, %v2574, 0
    %v2724 = vsel %vm506, %v2598, 0
    %2726 = vmatprep.subr.bf16.mxu0 0
    %2727 = vmatpush1.bf16.xpose.msra.mxu0 %v2724
    %2728 = vmatprep.subr.bf16.mxu0 0
    %2729 = vmatpush1.bf16.xpose.msra.mxu0 0
    %2730 = vmatprep.subr.bf16.mxu0 0
    %2731 = vmatpush1.bf16.xpose.msra.mxu0 0
    %2732 = vmatprep.subr.bf16.mxu0 0
    %2733 = vmatpush1.bf16.xpose.msra.mxu0 0
    %2734 = vmatprep.subr.bf16.mxu0 0
    %2735 = vmatpush1.bf16.xpose.msra.mxu0 0
    %2736 = vmatprep.subr.bf16.mxu0 0
    %2737 = vmatpush1.bf16.xpose.msra.mxu0 0
    %2738 = vmatprep.subr.bf16.mxu0 0
    %2739 = vmatpush1.bf16.xpose.msra.mxu0 0
    %2740 = vmatprep.subr.bf16.mxu0 0
    %2741 = vmatpush1.bf16.xpose.msra.mxu0 0
    %2742 = vmatprep.subr.bf16.mxu0 0
    %2743 = vmatpush1.bf16.xpose.msra.mxu0 0
    %2744 = vmatprep.subr.bf16.mxu0 0
    %2745 = vmatpush1.bf16.xpose.msra.mxu0 0
    %2746 = vmatprep.subr.bf16.mxu0 0
    %2747 = vmatpush1.bf16.xpose.msra.mxu0 0
    %2748 = vmatprep.subr.bf16.mxu0 0
    %2749 = vmatpush1.bf16.xpose.msra.mxu0 0
    %2750 = vmatprep.subr.bf16.mxu0 0
    %2751 = vmatpush1.bf16.xpose.msra.mxu0 0
    %2752 = vmatprep.subr.bf16.mxu0 0
    %2753 = vmatpush1.bf16.xpose.msra.mxu0 0
    %2754 = vmatprep.subr.bf16.mxu0 0
    %2755 = vmatpush1.bf16.xpose.msra.mxu0 0
    %2756 = vmatprep.subr.bf16.mxu0 0
    %2757 = vmatpush1.bf16.xpose.msra.mxu0 0
    %2758 = vmatprep.mubr.bf16.mxu0 0
    %2759 = vmatmul.mubr.bf16.gmra.mrb[0].mxu0 %v2721
    %v2760 = vpop.f32.mrb[0].mxu0
    %v2761 = vadd.f32 %v165, %v2760
    %v2762 = vpop.f32.mrb[0].mxu0
    %v2763 = vpop.f32.mrb[0].mxu0
    %v2764 = vpop.f32.mrb[0].mxu0
    %2765 = vdwg.mxu0
    %v2767 = vsel %vm506, %v2575, 0
    %v2770 = vsel %vm506, %v2599, 0
    %2772 = vmatprep.subr.bf16.mxu0 0
    %2773 = vmatpush1.bf16.xpose.msra.mxu0 %v2770
    %2774 = vmatprep.subr.bf16.mxu0 0
    %2775 = vmatpush1.bf16.xpose.msra.mxu0 0
    %2776 = vmatprep.subr.bf16.mxu0 0
    %2777 = vmatpush1.bf16.xpose.msra.mxu0 0
    %2778 = vmatprep.subr.bf16.mxu0 0
    %2779 = vmatpush1.bf16.xpose.msra.mxu0 0
    %2780 = vmatprep.subr.bf16.mxu0 0
    %2781 = vmatpush1.bf16.xpose.msra.mxu0 0
    %2782 = vmatprep.subr.bf16.mxu0 0
    %2783 = vmatpush1.bf16.xpose.msra.mxu0 0
    %2784 = vmatprep.subr.bf16.mxu0 0
    %2785 = vmatpush1.bf16.xpose.msra.mxu0 0
    %2786 = vmatprep.subr.bf16.mxu0 0
    %2787 = vmatpush1.bf16.xpose.msra.mxu0 0
    %2788 = vmatprep.subr.bf16.mxu0 0
    %2789 = vmatpush1.bf16.xpose.msra.mxu0 0
    %2790 = vmatprep.subr.bf16.mxu0 0
    %2791 = vmatpush1.bf16.xpose.msra.mxu0 0
    %2792 = vmatprep.subr.bf16.mxu0 0
    %2793 = vmatpush1.bf16.xpose.msra.mxu0 0
    %2794 = vmatprep.subr.bf16.mxu0 0
    %2795 = vmatpush1.bf16.xpose.msra.mxu0 0
    %2796 = vmatprep.subr.bf16.mxu0 0
    %2797 = vmatpush1.bf16.xpose.msra.mxu0 0
    %2798 = vmatprep.subr.bf16.mxu0 0
    %2799 = vmatpush1.bf16.xpose.msra.mxu0 0
    %2800 = vmatprep.subr.bf16.mxu0 0
    %2801 = vmatpush1.bf16.xpose.msra.mxu0 0
    %2802 = vmatprep.subr.bf16.mxu0 0
    %2803 = vmatpush1.bf16.xpose.msra.mxu0 0
    %2804 = vmatprep.mubr.bf16.mxu0 0
    %2805 = vmatmul.mubr.bf16.gmra.mrb[0].mxu0 %v2767
    %v2806 = vpop.f32.mrb[0].mxu0
    %v2807 = vadd.f32 %v169, %v2806
    %v2808 = vpop.f32.mrb[0].mxu0
    %v2809 = vpop.f32.mrb[0].mxu0
    %v2810 = vpop.f32.mrb[0].mxu0
    %2811 = vdwg.mxu0
    %v2813 = vsel %vm506, %v2576, 0
    %v2816 = vsel %vm506, %v2600, 0
    %2818 = vmatprep.subr.bf16.mxu0 0
    %2819 = vmatpush1.bf16.xpose.msra.mxu0 %v2816
    %2820 = vmatprep.subr.bf16.mxu0 0
    %2821 = vmatpush1.bf16.xpose.msra.mxu0 0
    %2822 = vmatprep.subr.bf16.mxu0 0
    %2823 = vmatpush1.bf16.xpose.msra.mxu0 0
    %2824 = vmatprep.subr.bf16.mxu0 0
    %2825 = vmatpush1.bf16.xpose.msra.mxu0 0
    %2826 = vmatprep.subr.bf16.mxu0 0
    %2827 = vmatpush1.bf16.xpose.msra.mxu0 0
    %2828 = vmatprep.subr.bf16.mxu0 0
    %2829 = vmatpush1.bf16.xpose.msra.mxu0 0
    %2830 = vmatprep.subr.bf16.mxu0 0
    %2831 = vmatpush1.bf16.xpose.msra.mxu0 0
    %2832 = vmatprep.subr.bf16.mxu0 0
    %2833 = vmatpush1.bf16.xpose.msra.mxu0 0
    %2834 = vmatprep.subr.bf16.mxu0 0
    %2835 = vmatpush1.bf16.xpose.msra.mxu0 0
    %2836 = vmatprep.subr.bf16.mxu0 0
    %2837 = vmatpush1.bf16.xpose.msra.mxu0 0
    %2838 = vmatprep.subr.bf16.mxu0 0
    %2839 = vmatpush1.bf16.xpose.msra.mxu0 0
    %2840 = vmatprep.subr.bf16.mxu0 0
    %2841 = vmatpush1.bf16.xpose.msra.mxu0 0
    %2842 = vmatprep.subr.bf16.mxu0 0
    %2843 = vmatpush1.bf16.xpose.msra.mxu0 0
    %2844 = vmatprep.subr.bf16.mxu0 0
    %2845 = vmatpush1.bf16.xpose.msra.mxu0 0
    %2846 = vmatprep.subr.bf16.mxu0 0
    %2847 = vmatpush1.bf16.xpose.msra.mxu0 0
    %2848 = vmatprep.subr.bf16.mxu0 0
    %2849 = vmatpush1.bf16.xpose.msra.mxu0 0
    %2850 = vmatprep.mubr.bf16.mxu0 0
    %2851 = vmatmul.mubr.bf16.gmra.mrb[0].mxu0 %v2813
    %v2852 = vpop.f32.mrb[0].mxu0
    %v2853 = vadd.f32 %v165, %v2852
    %v2854 = vpop.f32.mrb[0].mxu0
    %v2855 = vpop.f32.mrb[0].mxu0
    %v2856 = vpop.f32.mrb[0].mxu0
    %2857 = vdwg.mxu0
    %v2859 = vsel %vm506, %v2577, 0
    %v2862 = vsel %vm506, %v2601, 0
    %2864 = vmatprep.subr.bf16.mxu0 0
    %2865 = vmatpush1.bf16.xpose.msra.mxu0 %v2862
    %2866 = vmatprep.subr.bf16.mxu0 0
    %2867 = vmatpush1.bf16.xpose.msra.mxu0 0
    %2868 = vmatprep.subr.bf16.mxu0 0
    %2869 = vmatpush1.bf16.xpose.msra.mxu0 0
    %2870 = vmatprep.subr.bf16.mxu0 0
    %2871 = vmatpush1.bf16.xpose.msra.mxu0 0
    %2872 = vmatprep.subr.bf16.mxu0 0
    %2873 = vmatpush1.bf16.xpose.msra.mxu0 0
    %2874 = vmatprep.subr.bf16.mxu0 0
    %2875 = vmatpush1.bf16.xpose.msra.mxu0 0
    %2876 = vmatprep.subr.bf16.mxu0 0
    %2877 = vmatpush1.bf16.xpose.msra.mxu0 0
    %2878 = vmatprep.subr.bf16.mxu0 0
    %2879 = vmatpush1.bf16.xpose.msra.mxu0 0
    %2880 = vmatprep.subr.bf16.mxu0 0
    %2881 = vmatpush1.bf16.xpose.msra.mxu0 0
    %2882 = vmatprep.subr.bf16.mxu0 0
    %2883 = vmatpush1.bf16.xpose.msra.mxu0 0
    %2884 = vmatprep.subr.bf16.mxu0 0
    %2885 = vmatpush1.bf16.xpose.msra.mxu0 0
    %2886 = vmatprep.subr.bf16.mxu0 0
    %2887 = vmatpush1.bf16.xpose.msra.mxu0 0
    %2888 = vmatprep.subr.bf16.mxu0 0
    %2889 = vmatpush1.bf16.xpose.msra.mxu0 0
    %2890 = vmatprep.subr.bf16.mxu0 0
    %2891 = vmatpush1.bf16.xpose.msra.mxu0 0
    %2892 = vmatprep.subr.bf16.mxu0 0
    %2893 = vmatpush1.bf16.xpose.msra.mxu0 0
    %2894 = vmatprep.subr.bf16.mxu0 0
    %2895 = vmatpush1.bf16.xpose.msra.mxu0 0
    %2896 = vmatprep.mubr.bf16.mxu0 0
    %2897 = vmatmul.mubr.bf16.gmra.mrb[0].mxu0 %v2859
    %v2898 = vpop.f32.mrb[0].mxu0
    %v2899 = vadd.f32 %v169, %v2898
    %v2900 = vpop.f32.mrb[0].mxu0
    %v2901 = vpop.f32.mrb[0].mxu0
    %v2902 = vpop.f32.mrb[0].mxu0
    %2903 = vdwg.mxu0
    %v2905 = vsel %vm506, %v2578, 0
    %v2908 = vsel %vm506, %v2602, 0
    %2910 = vmatprep.subr.bf16.mxu0 0
    %2911 = vmatpush1.bf16.xpose.msra.mxu0 %v2908
    %2912 = vmatprep.subr.bf16.mxu0 0
    %2913 = vmatpush1.bf16.xpose.msra.mxu0 0
    %2914 = vmatprep.subr.bf16.mxu0 0
    %2915 = vmatpush1.bf16.xpose.msra.mxu0 0
    %2916 = vmatprep.subr.bf16.mxu0 0
    %2917 = vmatpush1.bf16.xpose.msra.mxu0 0
    %2918 = vmatprep.subr.bf16.mxu0 0
    %2919 = vmatpush1.bf16.xpose.msra.mxu0 0
    %2920 = vmatprep.subr.bf16.mxu0 0
    %2921 = vmatpush1.bf16.xpose.msra.mxu0 0
    %2922 = vmatprep.subr.bf16.mxu0 0
    %2923 = vmatpush1.bf16.xpose.msra.mxu0 0
    %2924 = vmatprep.subr.bf16.mxu0 0
    %2925 = vmatpush1.bf16.xpose.msra.mxu0 0
    %2926 = vmatprep.subr.bf16.mxu0 0
    %2927 = vmatpush1.bf16.xpose.msra.mxu0 0
    %2928 = vmatprep.subr.bf16.mxu0 0
    %2929 = vmatpush1.bf16.xpose.msra.mxu0 0
    %2930 = vmatprep.subr.bf16.mxu0 0
    %2931 = vmatpush1.bf16.xpose.msra.mxu0 0
    %2932 = vmatprep.subr.bf16.mxu0 0
    %2933 = vmatpush1.bf16.xpose.msra.mxu0 0
    %2934 = vmatprep.subr.bf16.mxu0 0
    %2935 = vmatpush1.bf16.xpose.msra.mxu0 0
    %2936 = vmatprep.subr.bf16.mxu0 0
    %2937 = vmatpush1.bf16.xpose.msra.mxu0 0
    %2938 = vmatprep.subr.bf16.mxu0 0
    %2939 = vmatpush1.bf16.xpose.msra.mxu0 0
    %2940 = vmatprep.subr.bf16.mxu0 0
    %2941 = vmatpush1.bf16.xpose.msra.mxu0 0
    %2942 = vmatprep.mubr.bf16.mxu0 0
    %2943 = vmatmul.mubr.bf16.gmra.mrb[0].mxu0 %v2905
    %v2944 = vpop.f32.mrb[0].mxu0
    %v2945 = vadd.f32 %v165, %v2944
    %v2946 = vpop.f32.mrb[0].mxu0
    %v2947 = vpop.f32.mrb[0].mxu0
    %v2948 = vpop.f32.mrb[0].mxu0
    %2949 = vdwg.mxu0
    %v2951 = vsel %vm506, %v2579, 0
    %v2954 = vsel %vm506, %v2603, 0
    %2956 = vmatprep.subr.bf16.mxu0 0
    %2957 = vmatpush1.bf16.xpose.msra.mxu0 %v2954
    %2958 = vmatprep.subr.bf16.mxu0 0
    %2959 = vmatpush1.bf16.xpose.msra.mxu0 0
    %2960 = vmatprep.subr.bf16.mxu0 0
    %2961 = vmatpush1.bf16.xpose.msra.mxu0 0
    %2962 = vmatprep.subr.bf16.mxu0 0
    %2963 = vmatpush1.bf16.xpose.msra.mxu0 0
    %2964 = vmatprep.subr.bf16.mxu0 0
    %2965 = vmatpush1.bf16.xpose.msra.mxu0 0
    %2966 = vmatprep.subr.bf16.mxu0 0
    %2967 = vmatpush1.bf16.xpose.msra.mxu0 0
    %2968 = vmatprep.subr.bf16.mxu0 0
    %2969 = vmatpush1.bf16.xpose.msra.mxu0 0
    %2970 = vmatprep.subr.bf16.mxu0 0
    %2971 = vmatpush1.bf16.xpose.msra.mxu0 0
    %2972 = vmatprep.subr.bf16.mxu0 0
    %2973 = vmatpush1.bf16.xpose.msra.mxu0 0
    %2974 = vmatprep.subr.bf16.mxu0 0
    %2975 = vmatpush1.bf16.xpose.msra.mxu0 0
    %2976 = vmatprep.subr.bf16.mxu0 0
    %2977 = vmatpush1.bf16.xpose.msra.mxu0 0
    %2978 = vmatprep.subr.bf16.mxu0 0
    %2979 = vmatpush1.bf16.xpose.msra.mxu0 0
    %2980 = vmatprep.subr.bf16.mxu0 0
    %2981 = vmatpush1.bf16.xpose.msra.mxu0 0
    %2982 = vmatprep.subr.bf16.mxu0 0
    %2983 = vmatpush1.bf16.xpose.msra.mxu0 0
    %2984 = vmatprep.subr.bf16.mxu0 0
    %2985 = vmatpush1.bf16.xpose.msra.mxu0 0
    %2986 = vmatprep.subr.bf16.mxu0 0
    %2987 = vmatpush1.bf16.xpose.msra.mxu0 0
    %2988 = vmatprep.mubr.bf16.mxu0 0
    %2989 = vmatmul.mubr.bf16.gmra.mrb[0].mxu0 %v2951
    %v2990 = vpop.f32.mrb[0].mxu0
    %v2991 = vadd.f32 %v169, %v2990
    %v2992 = vpop.f32.mrb[0].mxu0
    %v2993 = vpop.f32.mrb[0].mxu0
    %v2994 = vpop.f32.mrb[0].mxu0
    %2995 = vdwg.mxu0
    %v2996 = vsel %vm875, %v2669, -inf
    %2997 = vmax.xlane.f32.xlu0 %v2996
    %v2998 = vpop.xlane.xlu0 %2997
    %v2999 = vsel %vm875, %v2715, -inf
    %3000 = vmax.xlane.f32.xlu0 %v2999
    %v3001 = vpop.xlane.xlu0 %3000
    %v3002 = vsel %vm875, %v2761, -inf
    %3003 = vmax.xlane.f32.xlu0 %v3002
    %v3004 = vpop.xlane.xlu0 %3003
    %v3005 = vsel %vm875, %v2807, -inf
    %3006 = vmax.xlane.f32.xlu0 %v3005
    %v3007 = vpop.xlane.xlu0 %3006
    %v3008 = vsel %vm875, %v2853, -inf
    %3009 = vmax.xlane.f32.xlu0 %v3008
    %v3010 = vpop.xlane.xlu0 %3009
    %v3011 = vsel %vm875, %v2899, -inf
    %3012 = vmax.xlane.f32.xlu0 %v3011
    %v3013 = vpop.xlane.xlu0 %3012
    %v3014 = vsel %vm875, %v2945, -inf
    %3015 = vmax.xlane.f32.xlu0 %v3014
    %v3016 = vpop.xlane.xlu0 %3015
    %v3017 = vsel %vm875, %v2991, -inf
    %3018 = vmax.xlane.f32.xlu0 %v3017
    %v3019 = vpop.xlane.xlu0 %3018
    %v3020 = vsub.f32 %v2669, %v2998
    %v3021 = vsub.f32 %v2715, %v3001
    %v3022 = vsub.f32 %v2761, %v3004
    %v3023 = vsub.f32 %v2807, %v3007
    %v3024 = vsub.f32 %v2853, %v3010
    %v3025 = vsub.f32 %v2899, %v3013
    %v3026 = vsub.f32 %v2945, %v3016
    %v3027 = vsub.f32 %v2991, %v3019
    %v3028 = vmul.f32 %v3020, 1.442695
    %v3029 = vpow.pop %v3028
    %v3030 = vmul.f32 %v3021, 1.442695
    %v3031 = vpow.pop %v3030
    %v3032 = vmul.f32 %v3022, 1.442695
    %v3033 = vpow.pop %v3032
    %v3034 = vmul.f32 %v3023, 1.442695
    %v3035 = vpow.pop %v3034
    %v3036 = vmul.f32 %v3024, 1.442695
    %v3037 = vpow.pop %v3036
    %v3038 = vmul.f32 %v3025, 1.442695
    %v3039 = vpow.pop %v3038
    %v3040 = vmul.f32 %v3026, 1.442695
    %v3041 = vpow.pop %v3040
    %v3042 = vmul.f32 %v3027, 1.442695
    %v3043 = vpow.pop %v3042
    %v3044 = vsel %vm875, %v3029, 0.0
    %3045 = vadd.xlane.f32.xlu0 %v3044
    %v3046 = vpop.xlane.xlu0 %3045
    %v3047 = vsel %vm875, %v3031, 0.0
    %3048 = vadd.xlane.f32.xlu0 %v3047
    %v3049 = vpop.xlane.xlu0 %3048
    %v3050 = vsel %vm875, %v3033, 0.0
    %3051 = vadd.xlane.f32.xlu0 %v3050
    %v3052 = vpop.xlane.xlu0 %3051
    %v3053 = vsel %vm875, %v3035, 0.0
    %3054 = vadd.xlane.f32.xlu0 %v3053
    %v3055 = vpop.xlane.xlu0 %3054
    %v3056 = vsel %vm875, %v3037, 0.0
    %3057 = vadd.xlane.f32.xlu0 %v3056
    %v3058 = vpop.xlane.xlu0 %3057
    %v3059 = vsel %vm875, %v3039, 0.0
    %3060 = vadd.xlane.f32.xlu0 %v3059
    %v3061 = vpop.xlane.xlu0 %3060
    %v3062 = vsel %vm875, %v3041, 0.0
    %3063 = vadd.xlane.f32.xlu0 %v3062
    %v3064 = vpop.xlane.xlu0 %3063
    %v3065 = vsel %vm875, %v3043, 0.0
    %3066 = vadd.xlane.f32.xlu0 %v3065
    %v3067 = vpop.xlane.xlu0 %3066
    %v3068 = vrcp.pop %v3046
    %v3069 = vrcp.pop %v3049
    %v3070 = vrcp.pop %v3052
    %v3071 = vrcp.pop %v3055
    %v3072 = vrcp.pop %v3058
    %v3073 = vrcp.pop %v3061
    %v3074 = vrcp.pop %v3064
    %v3075 = vrcp.pop %v3067
    %v3076 = vmul.f32 %v3029, %v3068
    %v3077 = vmul.f32 %v3031, %v3069
    %v3078 = vmul.f32 %v3033, %v3070
    %v3079 = vmul.f32 %v3035, %v3071
    %v3080 = vmul.f32 %v3037, %v3072
    %v3081 = vmul.f32 %v3039, %v3073
    %v3082 = vmul.f32 %v3041, %v3074
    %v3083 = vmul.f32 %v3043, %v3075
    %v3084 = vpack.c.bf16 %v3076, %v3076
    %v3085 = vpack.c.bf16 %v3077, %v3077
    %v3086 = vpack.c.bf16 %v3078, %v3078
    %v3087 = vpack.c.bf16 %v3079, %v3079
    %v3088 = vpack.c.bf16 %v3080, %v3080
    %v3089 = vpack.c.bf16 %v3081, %v3081
    %v3090 = vpack.c.bf16 %v3082, %v3082
    %v3091 = vpack.c.bf16 %v3083, %v3083
    %v3093 = vsel %vm875, %v3084, 0
    %v3096 = vsel %vm975, %v2620, 0
    %3098 = vmatprep.subr.bf16.mxu0 0
    %3099 = vmatpush1.bf16.msra.mxu0 %v3096
    %3100 = vmatprep.subr.bf16.mxu0 0
    %3101 = vmatpush1.bf16.msra.mxu0 0
    %3102 = vmatprep.subr.bf16.mxu0 0
    %3103 = vmatpush1.bf16.msra.mxu0 0
    %3104 = vmatprep.subr.bf16.mxu0 0
    %3105 = vmatpush1.bf16.msra.mxu0 0
    %3106 = vmatprep.subr.bf16.mxu0 0
    %3107 = vmatpush1.bf16.msra.mxu0 0
    %3108 = vmatprep.subr.bf16.mxu0 0
    %3109 = vmatpush1.bf16.msra.mxu0 0
    %3110 = vmatprep.subr.bf16.mxu0 0
    %3111 = vmatpush1.bf16.msra.mxu0 0
    %3112 = vmatprep.subr.bf16.mxu0 0
    %3113 = vmatpush1.bf16.msra.mxu0 0
    %3114 = vmatprep.subr.bf16.mxu0 0
    %3115 = vmatpush1.bf16.msra.mxu0 0
    %3116 = vmatprep.subr.bf16.mxu0 0
    %3117 = vmatpush1.bf16.msra.mxu0 0
    %3118 = vmatprep.subr.bf16.mxu0 0
    %3119 = vmatpush1.bf16.msra.mxu0 0
    %3120 = vmatprep.subr.bf16.mxu0 0
    %3121 = vmatpush1.bf16.msra.mxu0 0
    %3122 = vmatprep.subr.bf16.mxu0 0
    %3123 = vmatpush1.bf16.msra.mxu0 0
    %3124 = vmatprep.subr.bf16.mxu0 0
    %3125 = vmatpush1.bf16.msra.mxu0 0
    %3126 = vmatprep.subr.bf16.mxu0 0
    %3127 = vmatpush1.bf16.msra.mxu0 0
    %3128 = vmatprep.subr.bf16.mxu0 0
    %3129 = vmatpush1.bf16.msra.mxu0 0
    %3130 = vmatprep.mubr.bf16.mxu0 0
    %3131 = vmatmul.mubr.bf16.gmra.mrb[0].mxu0 %v3093
    %v3132 = vpop.f32.mrb[0].mxu0
    %v3133 = vadd.f32 0.0, %v3132
    %v3134 = vpop.f32.mrb[0].mxu0
    %v3135 = vpop.f32.mrb[0].mxu0
    %v3136 = vpop.f32.mrb[0].mxu0
    %3137 = vdwg.mxu0
    %v3139 = vsel %vm875, %v3085, 0
    %v3142 = vsel %vm975, %v2621, 0
    %3144 = vmatprep.subr.bf16.mxu0 0
    %3145 = vmatpush1.bf16.msra.mxu0 %v3142
    %3146 = vmatprep.subr.bf16.mxu0 0
    %3147 = vmatpush1.bf16.msra.mxu0 0
    %3148 = vmatprep.subr.bf16.mxu0 0
    %3149 = vmatpush1.bf16.msra.mxu0 0
    %3150 = vmatprep.subr.bf16.mxu0 0
    %3151 = vmatpush1.bf16.msra.mxu0 0
    %3152 = vmatprep.subr.bf16.mxu0 0
    %3153 = vmatpush1.bf16.msra.mxu0 0
    %3154 = vmatprep.subr.bf16.mxu0 0
    %3155 = vmatpush1.bf16.msra.mxu0 0
    %3156 = vmatprep.subr.bf16.mxu0 0
    %3157 = vmatpush1.bf16.msra.mxu0 0
    %3158 = vmatprep.subr.bf16.mxu0 0
    %3159 = vmatpush1.bf16.msra.mxu0 0
    %3160 = vmatprep.subr.bf16.mxu0 0
    %3161 = vmatpush1.bf16.msra.mxu0 0
    %3162 = vmatprep.subr.bf16.mxu0 0
    %3163 = vmatpush1.bf16.msra.mxu0 0
    %3164 = vmatprep.subr.bf16.mxu0 0
    %3165 = vmatpush1.bf16.msra.mxu0 0
    %3166 = vmatprep.subr.bf16.mxu0 0
    %3167 = vmatpush1.bf16.msra.mxu0 0
    %3168 = vmatprep.subr.bf16.mxu0 0
    %3169 = vmatpush1.bf16.msra.mxu0 0
    %3170 = vmatprep.subr.bf16.mxu0 0
    %3171 = vmatpush1.bf16.msra.mxu0 0
    %3172 = vmatprep.subr.bf16.mxu0 0
    %3173 = vmatpush1.bf16.msra.mxu0 0
    %3174 = vmatprep.subr.bf16.mxu0 0
    %3175 = vmatpush1.bf16.msra.mxu0 0
    %3176 = vmatprep.mubr.bf16.mxu0 0
    %3177 = vmatmul.mubr.bf16.gmra.mrb[0].mxu0 %v3139
    %v3178 = vpop.f32.mrb[0].mxu0
    %v3179 = vadd.f32 0.0, %v3178
    %v3180 = vpop.f32.mrb[0].mxu0
    %v3181 = vpop.f32.mrb[0].mxu0
    %v3182 = vpop.f32.mrb[0].mxu0
    %3183 = vdwg.mxu0
    %v3185 = vsel %vm875, %v3086, 0
    %v3188 = vsel %vm975, %v2622, 0
    %3190 = vmatprep.subr.bf16.mxu0 0
    %3191 = vmatpush1.bf16.msra.mxu0 %v3188
    %3192 = vmatprep.subr.bf16.mxu0 0
    %3193 = vmatpush1.bf16.msra.mxu0 0
    %3194 = vmatprep.subr.bf16.mxu0 0
    %3195 = vmatpush1.bf16.msra.mxu0 0
    %3196 = vmatprep.subr.bf16.mxu0 0
    %3197 = vmatpush1.bf16.msra.mxu0 0
    %3198 = vmatprep.subr.bf16.mxu0 0
    %3199 = vmatpush1.bf16.msra.mxu0 0
    %3200 = vmatprep.subr.bf16.mxu0 0
    %3201 = vmatpush1.bf16.msra.mxu0 0
    %3202 = vmatprep.subr.bf16.mxu0 0
    %3203 = vmatpush1.bf16.msra.mxu0 0
    %3204 = vmatprep.subr.bf16.mxu0 0
    %3205 = vmatpush1.bf16.msra.mxu0 0
    %3206 = vmatprep.subr.bf16.mxu0 0
    %3207 = vmatpush1.bf16.msra.mxu0 0
    %3208 = vmatprep.subr.bf16.mxu0 0
    %3209 = vmatpush1.bf16.msra.mxu0 0
    %3210 = vmatprep.subr.bf16.mxu0 0
    %3211 = vmatpush1.bf16.msra.mxu0 0
    %3212 = vmatprep.subr.bf16.mxu0 0
    %3213 = vmatpush1.bf16.msra.mxu0 0
    %3214 = vmatprep.subr.bf16.mxu0 0
    %3215 = vmatpush1.bf16.msra.mxu0 0
    %3216 = vmatprep.subr.bf16.mxu0 0
    %3217 = vmatpush1.bf16.msra.mxu0 0
    %3218 = vmatprep.subr.bf16.mxu0 0
    %3219 = vmatpush1.bf16.msra.mxu0 0
    %3220 = vmatprep.subr.bf16.mxu0 0
    %3221 = vmatpush1.bf16.msra.mxu0 0
    %3222 = vmatprep.mubr.bf16.mxu0 0
    %3223 = vmatmul.mubr.bf16.gmra.mrb[0].mxu0 %v3185
    %v3224 = vpop.f32.mrb[0].mxu0
    %v3225 = vadd.f32 0.0, %v3224
    %v3226 = vpop.f32.mrb[0].mxu0
    %v3227 = vpop.f32.mrb[0].mxu0
    %v3228 = vpop.f32.mrb[0].mxu0
    %3229 = vdwg.mxu0
    %v3231 = vsel %vm875, %v3087, 0
    %v3234 = vsel %vm975, %v2623, 0
    %3236 = vmatprep.subr.bf16.mxu0 0
    %3237 = vmatpush1.bf16.msra.mxu0 %v3234
    %3238 = vmatprep.subr.bf16.mxu0 0
    %3239 = vmatpush1.bf16.msra.mxu0 0
    %3240 = vmatprep.subr.bf16.mxu0 0
    %3241 = vmatpush1.bf16.msra.mxu0 0
    %3242 = vmatprep.subr.bf16.mxu0 0
    %3243 = vmatpush1.bf16.msra.mxu0 0
    %3244 = vmatprep.subr.bf16.mxu0 0
    %3245 = vmatpush1.bf16.msra.mxu0 0
    %3246 = vmatprep.subr.bf16.mxu0 0
    %3247 = vmatpush1.bf16.msra.mxu0 0
    %3248 = vmatprep.subr.bf16.mxu0 0
    %3249 = vmatpush1.bf16.msra.mxu0 0
    %3250 = vmatprep.subr.bf16.mxu0 0
    %3251 = vmatpush1.bf16.msra.mxu0 0
    %3252 = vmatprep.subr.bf16.mxu0 0
    %3253 = vmatpush1.bf16.msra.mxu0 0
    %3254 = vmatprep.subr.bf16.mxu0 0
    %3255 = vmatpush1.bf16.msra.mxu0 0
    %3256 = vmatprep.subr.bf16.mxu0 0
    %3257 = vmatpush1.bf16.msra.mxu0 0
    %3258 = vmatprep.subr.bf16.mxu0 0
    %3259 = vmatpush1.bf16.msra.mxu0 0
    %3260 = vmatprep.subr.bf16.mxu0 0
    %3261 = vmatpush1.bf16.msra.mxu0 0
    %3262 = vmatprep.subr.bf16.mxu0 0
    %3263 = vmatpush1.bf16.msra.mxu0 0
    %3264 = vmatprep.subr.bf16.mxu0 0
    %3265 = vmatpush1.bf16.msra.mxu0 0
    %3266 = vmatprep.subr.bf16.mxu0 0
    %3267 = vmatpush1.bf16.msra.mxu0 0
    %3268 = vmatprep.mubr.bf16.mxu0 0
    %3269 = vmatmul.mubr.bf16.gmra.mrb[0].mxu0 %v3231
    %v3270 = vpop.f32.mrb[0].mxu0
    %v3271 = vadd.f32 0.0, %v3270
    %v3272 = vpop.f32.mrb[0].mxu0
    %v3273 = vpop.f32.mrb[0].mxu0
    %v3274 = vpop.f32.mrb[0].mxu0
    %3275 = vdwg.mxu0
    %v3277 = vsel %vm875, %v3088, 0
    %v3280 = vsel %vm975, %v2624, 0
    %3282 = vmatprep.subr.bf16.mxu0 0
    %3283 = vmatpush1.bf16.msra.mxu0 %v3280
    %3284 = vmatprep.subr.bf16.mxu0 0
    %3285 = vmatpush1.bf16.msra.mxu0 0
    %3286 = vmatprep.subr.bf16.mxu0 0
    %3287 = vmatpush1.bf16.msra.mxu0 0
    %3288 = vmatprep.subr.bf16.mxu0 0
    %3289 = vmatpush1.bf16.msra.mxu0 0
    %3290 = vmatprep.subr.bf16.mxu0 0
    %3291 = vmatpush1.bf16.msra.mxu0 0
    %3292 = vmatprep.subr.bf16.mxu0 0
    %3293 = vmatpush1.bf16.msra.mxu0 0
    %3294 = vmatprep.subr.bf16.mxu0 0
    %3295 = vmatpush1.bf16.msra.mxu0 0
    %3296 = vmatprep.subr.bf16.mxu0 0
    %3297 = vmatpush1.bf16.msra.mxu0 0
    %3298 = vmatprep.subr.bf16.mxu0 0
    %3299 = vmatpush1.bf16.msra.mxu0 0
    %3300 = vmatprep.subr.bf16.mxu0 0
    %3301 = vmatpush1.bf16.msra.mxu0 0
    %3302 = vmatprep.subr.bf16.mxu0 0
    %3303 = vmatpush1.bf16.msra.mxu0 0
    %3304 = vmatprep.subr.bf16.mxu0 0
    %3305 = vmatpush1.bf16.msra.mxu0 0
    %3306 = vmatprep.subr.bf16.mxu0 0
    %3307 = vmatpush1.bf16.msra.mxu0 0
    %3308 = vmatprep.subr.bf16.mxu0 0
    %3309 = vmatpush1.bf16.msra.mxu0 0
    %3310 = vmatprep.subr.bf16.mxu0 0
    %3311 = vmatpush1.bf16.msra.mxu0 0
    %3312 = vmatprep.subr.bf16.mxu0 0
    %3313 = vmatpush1.bf16.msra.mxu0 0
    %3314 = vmatprep.mubr.bf16.mxu0 0
    %3315 = vmatmul.mubr.bf16.gmra.mrb[0].mxu0 %v3277
    %v3316 = vpop.f32.mrb[0].mxu0
    %v3317 = vadd.f32 0.0, %v3316
    %v3318 = vpop.f32.mrb[0].mxu0
    %v3319 = vpop.f32.mrb[0].mxu0
    %v3320 = vpop.f32.mrb[0].mxu0
    %3321 = vdwg.mxu0
    %v3323 = vsel %vm875, %v3089, 0
    %v3326 = vsel %vm975, %v2625, 0
    %3328 = vmatprep.subr.bf16.mxu0 0
    %3329 = vmatpush1.bf16.msra.mxu0 %v3326
    %3330 = vmatprep.subr.bf16.mxu0 0
    %3331 = vmatpush1.bf16.msra.mxu0 0
    %3332 = vmatprep.subr.bf16.mxu0 0
    %3333 = vmatpush1.bf16.msra.mxu0 0
    %3334 = vmatprep.subr.bf16.mxu0 0
    %3335 = vmatpush1.bf16.msra.mxu0 0
    %3336 = vmatprep.subr.bf16.mxu0 0
    %3337 = vmatpush1.bf16.msra.mxu0 0
    %3338 = vmatprep.subr.bf16.mxu0 0
    %3339 = vmatpush1.bf16.msra.mxu0 0
    %3340 = vmatprep.subr.bf16.mxu0 0
    %3341 = vmatpush1.bf16.msra.mxu0 0
    %3342 = vmatprep.subr.bf16.mxu0 0
    %3343 = vmatpush1.bf16.msra.mxu0 0
    %3344 = vmatprep.subr.bf16.mxu0 0
    %3345 = vmatpush1.bf16.msra.mxu0 0
    %3346 = vmatprep.subr.bf16.mxu0 0
    %3347 = vmatpush1.bf16.msra.mxu0 0
    %3348 = vmatprep.subr.bf16.mxu0 0
    %3349 = vmatpush1.bf16.msra.mxu0 0
    %3350 = vmatprep.subr.bf16.mxu0 0
    %3351 = vmatpush1.bf16.msra.mxu0 0
    %3352 = vmatprep.subr.bf16.mxu0 0
    %3353 = vmatpush1.bf16.msra.mxu0 0
    %3354 = vmatprep.subr.bf16.mxu0 0
    %3355 = vmatpush1.bf16.msra.mxu0 0
    %3356 = vmatprep.subr.bf16.mxu0 0
    %3357 = vmatpush1.bf16.msra.mxu0 0
    %3358 = vmatprep.subr.bf16.mxu0 0
    %3359 = vmatpush1.bf16.msra.mxu0 0
    %3360 = vmatprep.mubr.bf16.mxu0 0
    %3361 = vmatmul.mubr.bf16.gmra.mrb[0].mxu0 %v3323
    %v3362 = vpop.f32.mrb[0].mxu0
    %v3363 = vadd.f32 0.0, %v3362
    %v3364 = vpop.f32.mrb[0].mxu0
    %v3365 = vpop.f32.mrb[0].mxu0
    %v3366 = vpop.f32.mrb[0].mxu0
    %3367 = vdwg.mxu0
    %v3369 = vsel %vm875, %v3090, 0
    %v3372 = vsel %vm975, %v2626, 0
    %3374 = vmatprep.subr.bf16.mxu0 0
    %3375 = vmatpush1.bf16.msra.mxu0 %v3372
    %3376 = vmatprep.subr.bf16.mxu0 0
    %3377 = vmatpush1.bf16.msra.mxu0 0
    %3378 = vmatprep.subr.bf16.mxu0 0
    %3379 = vmatpush1.bf16.msra.mxu0 0
    %3380 = vmatprep.subr.bf16.mxu0 0
    %3381 = vmatpush1.bf16.msra.mxu0 0
    %3382 = vmatprep.subr.bf16.mxu0 0
    %3383 = vmatpush1.bf16.msra.mxu0 0
    %3384 = vmatprep.subr.bf16.mxu0 0
    %3385 = vmatpush1.bf16.msra.mxu0 0
    %3386 = vmatprep.subr.bf16.mxu0 0
    %3387 = vmatpush1.bf16.msra.mxu0 0
    %3388 = vmatprep.subr.bf16.mxu0 0
    %3389 = vmatpush1.bf16.msra.mxu0 0
    %3390 = vmatprep.subr.bf16.mxu0 0
    %3391 = vmatpush1.bf16.msra.mxu0 0
    %3392 = vmatprep.subr.bf16.mxu0 0
    %3393 = vmatpush1.bf16.msra.mxu0 0
    %3394 = vmatprep.subr.bf16.mxu0 0
    %3395 = vmatpush1.bf16.msra.mxu0 0
    %3396 = vmatprep.subr.bf16.mxu0 0
    %3397 = vmatpush1.bf16.msra.mxu0 0
    %3398 = vmatprep.subr.bf16.mxu0 0
    %3399 = vmatpush1.bf16.msra.mxu0 0
    %3400 = vmatprep.subr.bf16.mxu0 0
    %3401 = vmatpush1.bf16.msra.mxu0 0
    %3402 = vmatprep.subr.bf16.mxu0 0
    %3403 = vmatpush1.bf16.msra.mxu0 0
    %3404 = vmatprep.subr.bf16.mxu0 0
    %3405 = vmatpush1.bf16.msra.mxu0 0
    %3406 = vmatprep.mubr.bf16.mxu0 0
    %3407 = vmatmul.mubr.bf16.gmra.mrb[0].mxu0 %v3369
    %v3408 = vpop.f32.mrb[0].mxu0
    %v3409 = vadd.f32 0.0, %v3408
    %v3410 = vpop.f32.mrb[0].mxu0
    %v3411 = vpop.f32.mrb[0].mxu0
    %v3412 = vpop.f32.mrb[0].mxu0
    %3413 = vdwg.mxu0
    %v3415 = vsel %vm875, %v3091, 0
    %v3418 = vsel %vm975, %v2627, 0
    %3420 = vmatprep.subr.bf16.mxu0 0
    %3421 = vmatpush1.bf16.msra.mxu0 %v3418
    %3422 = vmatprep.subr.bf16.mxu0 0
    %3423 = vmatpush1.bf16.msra.mxu0 0
    %3424 = vmatprep.subr.bf16.mxu0 0
    %3425 = vmatpush1.bf16.msra.mxu0 0
    %3426 = vmatprep.subr.bf16.mxu0 0
    %3427 = vmatpush1.bf16.msra.mxu0 0
    %3428 = vmatprep.subr.bf16.mxu0 0
    %3429 = vmatpush1.bf16.msra.mxu0 0
    %3430 = vmatprep.subr.bf16.mxu0 0
    %3431 = vmatpush1.bf16.msra.mxu0 0
    %3432 = vmatprep.subr.bf16.mxu0 0
    %3433 = vmatpush1.bf16.msra.mxu0 0
    %3434 = vmatprep.subr.bf16.mxu0 0
    %3435 = vmatpush1.bf16.msra.mxu0 0
    %3436 = vmatprep.subr.bf16.mxu0 0
    %3437 = vmatpush1.bf16.msra.mxu0 0
    %3438 = vmatprep.subr.bf16.mxu0 0
    %3439 = vmatpush1.bf16.msra.mxu0 0
    %3440 = vmatprep.subr.bf16.mxu0 0
    %3441 = vmatpush1.bf16.msra.mxu0 0
    %3442 = vmatprep.subr.bf16.mxu0 0
    %3443 = vmatpush1.bf16.msra.mxu0 0
    %3444 = vmatprep.subr.bf16.mxu0 0
    %3445 = vmatpush1.bf16.msra.mxu0 0
    %3446 = vmatprep.subr.bf16.mxu0 0
    %3447 = vmatpush1.bf16.msra.mxu0 0
    %3448 = vmatprep.subr.bf16.mxu0 0
    %3449 = vmatpush1.bf16.msra.mxu0 0
    %3450 = vmatprep.subr.bf16.mxu0 0
    %3451 = vmatpush1.bf16.msra.mxu0 0
    %3452 = vmatprep.mubr.bf16.mxu0 0
    %3453 = vmatmul.mubr.bf16.gmra.mrb[0].mxu0 %v3415
    %v3454 = vpop.f32.mrb[0].mxu0
    %v3455 = vadd.f32 0.0, %v3454
    %v3456 = vpop.f32.mrb[0].mxu0
    %v3457 = vpop.f32.mrb[0].mxu0
    %v3458 = vpop.f32.mrb[0].mxu0
    %3459 = vdwg.mxu0
    %3462 = vrot.lane.b32.xlu0 %v3225, 32
    %v3463 = vpop.permute.xlu0 %3462
    %3464 = vrot.lane.b32.xlu0 %v3271, 32
    %v3465 = vpop.permute.xlu0 %3464
    %3470 = vrot.lane.b32.xlu0 %v3317, 64
    %v3471 = vpop.permute.xlu0 %3470
    %3472 = vrot.lane.b32.xlu0 %v3363, 64
    %v3473 = vpop.permute.xlu0 %3472
    %3478 = vrot.lane.b32.xlu0 %v3409, 96
    %v3479 = vpop.permute.xlu0 %3478
    %3480 = vrot.lane.b32.xlu0 %v3455, 96
    %v3481 = vpop.permute.xlu0 %3480
    %v3484 = vsel %vm506, %v3133, %v3463
    %v3485 = vsel %vm506, %v3179, %v3465
    %v3486 = vsel %vm1367, %v3484, %v3471
    %v3487 = vsel %vm1367, %v3485, %v3473
    %v3488 = vsel %vm1370, %v3486, %v3479
    %v3489 = vsel %vm1370, %v3487, %v3481
    %v3490 = vpack.c.bf16 %v3489, %v3488
    %s3491 = scalar_lea.vmem %s6, 64
    %v3492 = vld [vmem:[%s3491] sm:$0xf]
    %v3493 = vld [vmem:[%s3491 + $0x4] sm:$0xf]
    %v3494 = vld [vmem:[%s3491 + $0x8] sm:$0xf]
    %v3495 = vld [vmem:[%s3491 + $0xc] sm:$0xf]
    %v3496 = vld [vmem:[%s3491 + $0x10] sm:$0xf]
    %v3497 = vld [vmem:[%s3491 + $0x14] sm:$0xf]
    %v3498 = vld [vmem:[%s3491 + $0x18] sm:$0xf]
    %v3499 = vld [vmem:[%s3491 + $0x1c] sm:$0xf]
    %v3500 = vld [vmem:[%s3491 + $0x20] sm:$0xf]
    %v3501 = vld [vmem:[%s3491 + $0x24] sm:$0xf]
    %v3502 = vld [vmem:[%s3491 + $0x28] sm:$0xf]
    %v3503 = vld [vmem:[%s3491 + $0x2c] sm:$0xf]
    %v3504 = vld [vmem:[%s3491 + $0x30] sm:$0xf]
    %v3505 = vld [vmem:[%s3491 + $0x34] sm:$0xf]
    %v3506 = vld [vmem:[%s3491 + $0x38] sm:$0xf]
    %v3507 = vld [vmem:[%s3491 + $0x3c] sm:$0xf]
    %s3508 = scalar_lea.vmem %s7, 1
    %v3509 = vld [vmem:[%s3508] sm:$0x1]
    %v3511 = vlaneseq
    %v3512 = vshrl.u32 %v3511, 7
    %v3513 = vsub.s32 0, %v3512
    %v3514 = vrot.slane %v3509, %v3513
    %v3532 = vunpack.c.l.b16 %v3492
    %v3533 = vunpack.c.l.b16 %v3493
    %v3534 = vunpack.c.l.b16 %v3494
    %v3535 = vunpack.c.l.b16 %v3495
    %v3536 = vunpack.c.l.b16 %v3496
    %v3537 = vunpack.c.l.b16 %v3497
    %v3538 = vunpack.c.l.b16 %v3498
    %v3539 = vunpack.c.l.b16 %v3499
    %v3540 = vunpack.c.l.b16 %v3500
    %v3541 = vunpack.c.l.b16 %v3501
    %v3542 = vunpack.c.l.b16 %v3502
    %v3543 = vunpack.c.l.b16 %v3503
    %v3544 = vunpack.c.l.b16 %v3504
    %v3545 = vunpack.c.l.b16 %v3505
    %v3546 = vunpack.c.l.b16 %v3506
    %v3547 = vunpack.c.l.b16 %v3507
    %v3548 = vpack.c.b16 %v3533, %v3532
    %v3549 = vpack.c.b16 %v3535, %v3534
    %v3550 = vpack.c.b16 %v3537, %v3536
    %v3551 = vpack.c.b16 %v3539, %v3538
    %v3552 = vpack.c.b16 %v3541, %v3540
    %v3553 = vpack.c.b16 %v3543, %v3542
    %v3554 = vpack.c.b16 %v3545, %v3544
    %v3555 = vpack.c.b16 %v3547, %v3546
    %3564 = vmatprep.subr.bf16.mxu0 0
    %3565 = vmatpush1.bf16.msra.mxu0 %v3548
    %3566 = vmatprep.subr.bf16.mxu0 0
    %3567 = vmatpush1.bf16.msra.mxu0 %v3549
    %3568 = vmatprep.subr.bf16.mxu0 0
    %3569 = vmatpush1.bf16.msra.mxu0 %v3550
    %3570 = vmatprep.subr.bf16.mxu0 0
    %3571 = vmatpush1.bf16.msra.mxu0 %v3551
    %3572 = vmatprep.subr.bf16.mxu0 0
    %3573 = vmatpush1.bf16.msra.mxu0 %v3552
    %3574 = vmatprep.subr.bf16.mxu0 0
    %3575 = vmatpush1.bf16.msra.mxu0 %v3553
    %3576 = vmatprep.subr.bf16.mxu0 0
    %3577 = vmatpush1.bf16.msra.mxu0 %v3554
    %3578 = vmatprep.subr.bf16.mxu0 0
    %3579 = vmatpush1.bf16.msra.mxu0 %v3555
    %3580 = vmatprep.subr.bf16.mxu0 0
    %3581 = vmatpush1.bf16.msra.mxu0 0
    %3582 = vmatprep.subr.bf16.mxu0 0
    %3583 = vmatpush1.bf16.msra.mxu0 0
    %3584 = vmatprep.subr.bf16.mxu0 0
    %3585 = vmatpush1.bf16.msra.mxu0 0
    %3586 = vmatprep.subr.bf16.mxu0 0
    %3587 = vmatpush1.bf16.msra.mxu0 0
    %3588 = vmatprep.subr.bf16.mxu0 0
    %3589 = vmatpush1.bf16.msra.mxu0 0
    %3590 = vmatprep.subr.bf16.mxu0 0
    %3591 = vmatpush1.bf16.msra.mxu0 0
    %3592 = vmatprep.subr.bf16.mxu0 0
    %3593 = vmatpush1.bf16.msra.mxu0 0
    %3594 = vmatprep.subr.bf16.mxu0 0
    %3595 = vmatpush1.bf16.msra.mxu0 0
    %3596 = vmatprep.mubr.bf16.mxu0 0
    %3597 = vmatmul.mubr.bf16.gmra.mrb[0].mxu0 %v3490
    %v3598 = vpop.f32.mrb[0].mxu0
    %v3599 = vadd.f32 %v3514, %v3598
    %v3600 = vpop.f32.mrb[0].mxu0
    %v3601 = vpop.f32.mrb[0].mxu0
    %v3602 = vadd.f32 %v3514, %v3601
    %v3603 = vpop.f32.mrb[0].mxu0
    %3604 = vdwg.mxu0
    %v3605 = vadd.f32 %v2290, %v3599
    %v3606 = vadd.f32 %v2291, %v3602
    %s3607 = scalar_lea.vmem %s8, 1
    %v3608 = vld [vmem:[%s3607] sm:$0x1]
    %s3609 = scalar_lea.vmem %s9, 1
    %v3610 = vld [vmem:[%s3609] sm:$0x1]
    %3611 = vadd.xlane.f32.xlu0 %v3605
    %v3612 = vpop.xlane.xlu0 %3611
    %3613 = vadd.xlane.f32.xlu0 %v3606
    %v3614 = vpop.xlane.xlu0 %3613
    %v3615 = vmul.f32 %v3612, %v103
    %v3616 = vmul.f32 %v3614, %v103
    %v3617 = vsub.f32 %v3605, %v3615
    %v3618 = vsub.f32 %v3606, %v3616
    %v3619 = vmul.f32 %v3617, %v3617
    %v3620 = vmul.f32 %v3618, %v3618
    %3621 = vadd.xlane.f32.xlu0 %v3619
    %v3622 = vpop.xlane.xlu0 %3621
    %3623 = vadd.xlane.f32.xlu0 %v3620
    %v3624 = vpop.xlane.xlu0 %3623
    %v3625 = vmul.f32 %v3622, %v103
    %v3626 = vmul.f32 %v3624, %v103
    %v3627 = vadd.f32 %v3625, 1e-12
    %v3628 = vadd.f32 %v3626, 1e-12
    %v3629 = vrsqrt.pop %v3627
    %v3630 = vrsqrt.pop %v3628
    %v3631 = vmul.f32 %v3617, %v3629
    %v3632 = vmul.f32 %v3618, %v3630
    %v3634 = vlaneseq
    %v3635 = vshrl.u32 %v3634, 7
    %v3636 = vsub.s32 0, %v3635
    %v3637 = vrot.slane %v3608, %v3636
    %v3639 = vmul.f32 %v3631, %v3637
    %v3640 = vmul.f32 %v3632, %v3637
    %v3642 = vlaneseq
    %v3643 = vshrl.u32 %v3642, 7
    %v3644 = vsub.s32 0, %v3643
    %v3645 = vrot.slane %v3610, %v3644
    %v3647 = vadd.f32 %v3639, %v3645
    %v3648 = vadd.f32 %v3640, %v3645
    %v3649 = vpack.c.bf16 %v3648, %v3647
    %s3650 = scalar_lea.vmem [#allocation4], 256
    %v3651 = vld [vmem:[%s3650] sm:$0xff]
    %v3652 = vld [vmem:[%s3650 + $0x8] sm:$0xff]
    %v3653 = vld [vmem:[%s3650 + $0x10] sm:$0xff]
    %v3654 = vld [vmem:[%s3650 + $0x18] sm:$0xff]
    %v3655 = vld [vmem:[%s3650 + $0x20] sm:$0xff]
    %v3656 = vld [vmem:[%s3650 + $0x28] sm:$0xff]
    %v3657 = vld [vmem:[%s3650 + $0x30] sm:$0xff]
    %v3658 = vld [vmem:[%s3650 + $0x38] sm:$0xff]
    %v3659 = vld [vmem:[%s3650 + $0x40] sm:$0xff]
    %v3660 = vld [vmem:[%s3650 + $0x48] sm:$0xff]
    %v3661 = vld [vmem:[%s3650 + $0x50] sm:$0xff]
    %v3662 = vld [vmem:[%s3650 + $0x58] sm:$0xff]
    %v3663 = vld [vmem:[%s3650 + $0x60] sm:$0xff]
    %v3664 = vld [vmem:[%s3650 + $0x68] sm:$0xff]
    %v3665 = vld [vmem:[%s3650 + $0x70] sm:$0xff]
    %v3666 = vld [vmem:[%s3650 + $0x78] sm:$0xff]
    %v3667 = vld [vmem:[%s3650 + $0x80] sm:$0xff]
    %v3668 = vld [vmem:[%s3650 + $0x88] sm:$0xff]
    %v3669 = vld [vmem:[%s3650 + $0x90] sm:$0xff]
    %v3670 = vld [vmem:[%s3650 + $0x98] sm:$0xff]
    %v3671 = vld [vmem:[%s3650 + $0xa0] sm:$0xff]
    %v3672 = vld [vmem:[%s3650 + $0xa8] sm:$0xff]
    %v3673 = vld [vmem:[%s3650 + $0xb0] sm:$0xff]
    %v3674 = vld [vmem:[%s3650 + $0xb8] sm:$0xff]
    %v3675 = vld [vmem:[%s3650 + $0xc0] sm:$0xff]
    %v3676 = vld [vmem:[%s3650 + $0xc8] sm:$0xff]
    %v3677 = vld [vmem:[%s3650 + $0xd0] sm:$0xff]
    %v3678 = vld [vmem:[%s3650 + $0xd8] sm:$0xff]
    %v3679 = vld [vmem:[%s3650 + $0xe0] sm:$0xff]
    %v3680 = vld [vmem:[%s3650 + $0xe8] sm:$0xff]
    %v3681 = vld [vmem:[%s3650 + $0xf0] sm:$0xff]
    %v3682 = vld [vmem:[%s3650 + $0xf8] sm:$0xff]
    %s3683 = scalar_lea.vmem %s11, 4
    %v3684 = vld [vmem:[%s3683] sm:$0xf]
    %v3686 = vlaneseq
    %v3687 = vshrl.u32 %v3686, 7
    %v3688 = vsub.s32 0, %v3687
    %v3689 = vrot.slane %v3684, %v3688
    %v3690 = vlaneseq
    %v3691 = vshrl.u32 %v3690, 7
    %v3692 = vsub.s32 1, %v3691
    %v3693 = vrot.slane %v3684, %v3692
    %v3694 = vlaneseq
    %v3695 = vshrl.u32 %v3694, 7
    %v3696 = vsub.s32 2, %v3695
    %v3697 = vrot.slane %v3684, %v3696
    %v3698 = vlaneseq
    %v3699 = vshrl.u32 %v3698, 7
    %v3700 = vsub.s32 3, %v3699
    %v3701 = vrot.slane %v3684, %v3700
    %v3738 = vunpack.c.l.b16 %v3651
    %v3739 = vunpack.c.h.b16 %v3651
    %v3740 = vunpack.c.l.b16 %v3652
    %v3741 = vunpack.c.h.b16 %v3652
    %v3742 = vunpack.c.l.b16 %v3653
    %v3743 = vunpack.c.h.b16 %v3653
    %v3744 = vunpack.c.l.b16 %v3654
    %v3745 = vunpack.c.h.b16 %v3654
    %v3746 = vunpack.c.l.b16 %v3655
    %v3747 = vunpack.c.h.b16 %v3655
    %v3748 = vunpack.c.l.b16 %v3656
    %v3749 = vunpack.c.h.b16 %v3656
    %v3750 = vunpack.c.l.b16 %v3657
    %v3751 = vunpack.c.h.b16 %v3657
    %v3752 = vunpack.c.l.b16 %v3658
    %v3753 = vunpack.c.h.b16 %v3658
    %v3754 = vunpack.c.l.b16 %v3659
    %v3755 = vunpack.c.h.b16 %v3659
    %v3756 = vunpack.c.l.b16 %v3660
    %v3757 = vunpack.c.h.b16 %v3660
    %v3758 = vunpack.c.l.b16 %v3661
    %v3759 = vunpack.c.h.b16 %v3661
    %v3760 = vunpack.c.l.b16 %v3662
    %v3761 = vunpack.c.h.b16 %v3662
    %v3762 = vunpack.c.l.b16 %v3663
    %v3763 = vunpack.c.h.b16 %v3663
    %v3764 = vunpack.c.l.b16 %v3664
    %v3765 = vunpack.c.h.b16 %v3664
    %v3766 = vunpack.c.l.b16 %v3665
    %v3767 = vunpack.c.h.b16 %v3665
    %v3768 = vunpack.c.l.b16 %v3666
    %v3769 = vunpack.c.h.b16 %v3666
    %v3770 = vunpack.c.l.b16 %v3667
    %v3771 = vunpack.c.h.b16 %v3667
    %v3772 = vunpack.c.l.b16 %v3668
    %v3773 = vunpack.c.h.b16 %v3668
    %v3774 = vunpack.c.l.b16 %v3669
    %v3775 = vunpack.c.h.b16 %v3669
    %v3776 = vunpack.c.l.b16 %v3670
    %v3777 = vunpack.c.h.b16 %v3670
    %v3778 = vunpack.c.l.b16 %v3671
    %v3779 = vunpack.c.h.b16 %v3671
    %v3780 = vunpack.c.l.b16 %v3672
    %v3781 = vunpack.c.h.b16 %v3672
    %v3782 = vunpack.c.l.b16 %v3673
    %v3783 = vunpack.c.h.b16 %v3673
    %v3784 = vunpack.c.l.b16 %v3674
    %v3785 = vunpack.c.h.b16 %v3674
    %v3786 = vunpack.c.l.b16 %v3675
    %v3787 = vunpack.c.h.b16 %v3675
    %v3788 = vunpack.c.l.b16 %v3676
    %v3789 = vunpack.c.h.b16 %v3676
    %v3790 = vunpack.c.l.b16 %v3677
    %v3791 = vunpack.c.h.b16 %v3677
    %v3792 = vunpack.c.l.b16 %v3678
    %v3793 = vunpack.c.h.b16 %v3678
    %v3794 = vunpack.c.l.b16 %v3679
    %v3795 = vunpack.c.h.b16 %v3679
    %v3796 = vunpack.c.l.b16 %v3680
    %v3797 = vunpack.c.h.b16 %v3680
    %v3798 = vunpack.c.l.b16 %v3681
    %v3799 = vunpack.c.h.b16 %v3681
    %v3800 = vunpack.c.l.b16 %v3682
    %v3801 = vunpack.c.h.b16 %v3682
    %v3802 = vpack.c.b16 %v3742, %v3738
    %v3803 = vpack.c.b16 %v3743, %v3739
    %v3804 = vpack.c.b16 %v3744, %v3740
    %v3805 = vpack.c.b16 %v3745, %v3741
    %v3806 = vpack.c.b16 %v3750, %v3746
    %v3807 = vpack.c.b16 %v3751, %v3747
    %v3808 = vpack.c.b16 %v3752, %v3748
    %v3809 = vpack.c.b16 %v3753, %v3749
    %v3810 = vpack.c.b16 %v3758, %v3754
    %v3811 = vpack.c.b16 %v3759, %v3755
    %v3812 = vpack.c.b16 %v3760, %v3756
    %v3813 = vpack.c.b16 %v3761, %v3757
    %v3814 = vpack.c.b16 %v3766, %v3762
    %v3815 = vpack.c.b16 %v3767, %v3763
    %v3816 = vpack.c.b16 %v3768, %v3764
    %v3817 = vpack.c.b16 %v3769, %v3765
    %v3818 = vpack.c.b16 %v3774, %v3770
    %v3819 = vpack.c.b16 %v3775, %v3771
    %v3820 = vpack.c.b16 %v3776, %v3772
    %v3821 = vpack.c.b16 %v3777, %v3773
    %v3822 = vpack.c.b16 %v3782, %v3778
    %v3823 = vpack.c.b16 %v3783, %v3779
    %v3824 = vpack.c.b16 %v3784, %v3780
    %v3825 = vpack.c.b16 %v3785, %v3781
    %v3826 = vpack.c.b16 %v3790, %v3786
    %v3827 = vpack.c.b16 %v3791, %v3787
    %v3828 = vpack.c.b16 %v3792, %v3788
    %v3829 = vpack.c.b16 %v3793, %v3789
    %v3830 = vpack.c.b16 %v3798, %v3794
    %v3831 = vpack.c.b16 %v3799, %v3795
    %v3832 = vpack.c.b16 %v3800, %v3796
    %v3833 = vpack.c.b16 %v3801, %v3797
    %3866 = vmatprep.subr.bf16.mxu0 %v3803
    %3867 = vmatpush1.bf16.msra.mxu0 %v3802
    %3868 = vmatprep.subr.bf16.mxu0 %v3807
    %3869 = vmatpush1.bf16.msra.mxu0 %v3806
    %3870 = vmatprep.subr.bf16.mxu0 %v3811
    %3871 = vmatpush1.bf16.msra.mxu0 %v3810
    %3872 = vmatprep.subr.bf16.mxu0 %v3815
    %3873 = vmatpush1.bf16.msra.mxu0 %v3814
    %3874 = vmatprep.subr.bf16.mxu0 %v3819
    %3875 = vmatpush1.bf16.msra.mxu0 %v3818
    %3876 = vmatprep.subr.bf16.mxu0 %v3823
    %3877 = vmatpush1.bf16.msra.mxu0 %v3822
    %3878 = vmatprep.subr.bf16.mxu0 %v3827
    %3879 = vmatpush1.bf16.msra.mxu0 %v3826
    %3880 = vmatprep.subr.bf16.mxu0 %v3831
    %3881 = vmatpush1.bf16.msra.mxu0 %v3830
    %3882 = vmatprep.subr.bf16.mxu0 0
    %3883 = vmatpush1.bf16.msra.mxu0 0
    %3884 = vmatprep.subr.bf16.mxu0 0
    %3885 = vmatpush1.bf16.msra.mxu0 0
    %3886 = vmatprep.subr.bf16.mxu0 0
    %3887 = vmatpush1.bf16.msra.mxu0 0
    %3888 = vmatprep.subr.bf16.mxu0 0
    %3889 = vmatpush1.bf16.msra.mxu0 0
    %3890 = vmatprep.subr.bf16.mxu0 0
    %3891 = vmatpush1.bf16.msra.mxu0 0
    %3892 = vmatprep.subr.bf16.mxu0 0
    %3893 = vmatpush1.bf16.msra.mxu0 0
    %3894 = vmatprep.subr.bf16.mxu0 0
    %3895 = vmatpush1.bf16.msra.mxu0 0
    %3896 = vmatprep.subr.bf16.mxu0 0
    %3897 = vmatpush1.bf16.msra.mxu0 0
    %3898 = vmatprep.mubr.bf16.mxu0 0
    %3899 = vmatmul.mubr.bf16.gmra.mrb[0].mxu0 %v3649
    %v3900 = vpop.f32.mrb[0].mxu0
    %v3901 = vadd.f32 %v3689, %v3900
    %v3902 = vpop.f32.mrb[0].mxu0
    %v3903 = vadd.f32 %v3693, %v3902
    %v3904 = vpop.f32.mrb[0].mxu0
    %v3905 = vadd.f32 %v3689, %v3904
    %v3906 = vpop.f32.mrb[0].mxu0
    %v3907 = vadd.f32 %v3693, %v3906
    %3908 = vdwg.mxu0
    %3909 = vmatprep.subr.bf16.mxu0 %v3805
    %3910 = vmatpush1.bf16.msra.mxu0 %v3804
    %3911 = vmatprep.subr.bf16.mxu0 %v3809
    %3912 = vmatpush1.bf16.msra.mxu0 %v3808
    %3913 = vmatprep.subr.bf16.mxu0 %v3813
    %3914 = vmatpush1.bf16.msra.mxu0 %v3812
    %3915 = vmatprep.subr.bf16.mxu0 %v3817
    %3916 = vmatpush1.bf16.msra.mxu0 %v3816
    %3917 = vmatprep.subr.bf16.mxu0 %v3821
    %3918 = vmatpush1.bf16.msra.mxu0 %v3820
    %3919 = vmatprep.subr.bf16.mxu0 %v3825
    %3920 = vmatpush1.bf16.msra.mxu0 %v3824
    %3921 = vmatprep.subr.bf16.mxu0 %v3829
    %3922 = vmatpush1.bf16.msra.mxu0 %v3828
    %3923 = vmatprep.subr.bf16.mxu0 %v3833
    %3924 = vmatpush1.bf16.msra.mxu0 %v3832
    %3925 = vmatprep.subr.bf16.mxu0 0
    %3926 = vmatpush1.bf16.msra.mxu0 0
    %3927 = vmatprep.subr.bf16.mxu0 0
    %3928 = vmatpush1.bf16.msra.mxu0 0
    %3929 = vmatprep.subr.bf16.mxu0 0
    %3930 = vmatpush1.bf16.msra.mxu0 0
    %3931 = vmatprep.subr.bf16.mxu0 0
    %3932 = vmatpush1.bf16.msra.mxu0 0
    %3933 = vmatprep.subr.bf16.mxu0 0
    %3934 = vmatpush1.bf16.msra.mxu0 0
    %3935 = vmatprep.subr.bf16.mxu0 0
    %3936 = vmatpush1.bf16.msra.mxu0 0
    %3937 = vmatprep.subr.bf16.mxu0 0
    %3938 = vmatpush1.bf16.msra.mxu0 0
    %3939 = vmatprep.subr.bf16.mxu0 0
    %3940 = vmatpush1.bf16.msra.mxu0 0
    %3941 = vmatprep.mubr.bf16.mxu0 0
    %3942 = vmatmul.mubr.bf16.gmra.mrb[0].mxu0 %v3649
    %v3943 = vpop.f32.mrb[0].mxu0
    %v3944 = vadd.f32 %v3697, %v3943
    %v3945 = vpop.f32.mrb[0].mxu0
    %v3946 = vadd.f32 %v3701, %v3945
    %v3947 = vpop.f32.mrb[0].mxu0
    %v3948 = vadd.f32 %v3697, %v3947
    %v3949 = vpop.f32.mrb[0].mxu0
    %v3950 = vadd.f32 %v3701, %v3949
    %3951 = vdwg.mxu0
    %v3952 = vmul.f32 %v3901, %v3901
    %v3953 = vmul.f32 %v3903, %v3903
    %v3954 = vmul.f32 %v3944, %v3944
    %v3955 = vmul.f32 %v3946, %v3946
    %v3956 = vmul.f32 %v3905, %v3905
    %v3957 = vmul.f32 %v3907, %v3907
    %v3958 = vmul.f32 %v3948, %v3948
    %v3959 = vmul.f32 %v3950, %v3950
    %v3960 = vmul.f32 %v3901, %v3952
    %v3961 = vmul.f32 %v3903, %v3953
    %v3962 = vmul.f32 %v3944, %v3954
    %v3963 = vmul.f32 %v3946, %v3955
    %v3964 = vmul.f32 %v3905, %v3956
    %v3965 = vmul.f32 %v3907, %v3957
    %v3966 = vmul.f32 %v3948, %v3958
    %v3967 = vmul.f32 %v3950, %v3959
    %v3968 = vmul.f32 %v3960, 0.044715
    %v3969 = vmul.f32 %v3961, 0.044715
    %v3970 = vmul.f32 %v3962, 0.044715
    %v3971 = vmul.f32 %v3963, 0.044715
    %v3972 = vmul.f32 %v3964, 0.044715
    %v3973 = vmul.f32 %v3965, 0.044715
    %v3974 = vmul.f32 %v3966, 0.044715
    %v3975 = vmul.f32 %v3967, 0.044715
    %v3976 = vadd.f32 %v3901, %v3968
    %v3977 = vadd.f32 %v3903, %v3969
    %v3978 = vadd.f32 %v3944, %v3970
    %v3979 = vadd.f32 %v3946, %v3971
    %v3980 = vadd.f32 %v3905, %v3972
    %v3981 = vadd.f32 %v3907, %v3973
    %v3982 = vadd.f32 %v3948, %v3974
    %v3983 = vadd.f32 %v3950, %v3975
    %v3984 = vmul.f32 %v3976, 0.7978846
    %v3985 = vmul.f32 %v3977, 0.7978846
    %v3986 = vmul.f32 %v3978, 0.7978846
    %v3987 = vmul.f32 %v3979, 0.7978846
    %v3988 = vmul.f32 %v3980, 0.7978846
    %v3989 = vmul.f32 %v3981, 0.7978846
    %v3990 = vmul.f32 %v3982, 0.7978846
    %v3991 = vmul.f32 %v3983, 0.7978846
    %v3992 = vtanh.pop %v3984
    %v3993 = vtanh.pop %v3985
    %v3994 = vtanh.pop %v3986
    %v3995 = vtanh.pop %v3987
    %v3996 = vtanh.pop %v3988
    %v3997 = vtanh.pop %v3989
    %v3998 = vtanh.pop %v3990
    %v3999 = vtanh.pop %v3991
    %v4000 = vadd.f32 %v3992, 1.0
    %v4001 = vadd.f32 %v3993, 1.0
    %v4002 = vadd.f32 %v3994, 1.0
    %v4003 = vadd.f32 %v3995, 1.0
    %v4004 = vadd.f32 %v3996, 1.0
    %v4005 = vadd.f32 %v3997, 1.0
    %v4006 = vadd.f32 %v3998, 1.0
    %v4007 = vadd.f32 %v3999, 1.0
    %v4008 = vmul.f32 %v4000, 0.5
    %v4009 = vmul.f32 %v4001, 0.5
    %v4010 = vmul.f32 %v4002, 0.5
    %v4011 = vmul.f32 %v4003, 0.5
    %v4012 = vmul.f32 %v4004, 0.5
    %v4013 = vmul.f32 %v4005, 0.5
    %v4014 = vmul.f32 %v4006, 0.5
    %v4015 = vmul.f32 %v4007, 0.5
    %v4016 = vmul.f32 %v3901, %v4008
    %v4017 = vmul.f32 %v3903, %v4009
    %v4018 = vmul.f32 %v3944, %v4010
    %v4019 = vmul.f32 %v3946, %v4011
    %v4020 = vmul.f32 %v3905, %v4012
    %v4021 = vmul.f32 %v3907, %v4013
    %v4022 = vmul.f32 %v3948, %v4014
    %v4023 = vmul.f32 %v3950, %v4015
    %v4024 = vpack.c.bf16 %v4020, %v4016
    %v4025 = vpack.c.bf16 %v4021, %v4017
    %v4026 = vpack.c.bf16 %v4022, %v4018
    %v4027 = vpack.c.bf16 %v4023, %v4019
    %s4028 = scalar_lea.vmem [#allocation6], 256
    %v4029 = vld [vmem:[%s4028] sm:$0xf]
    %v4030 = vld [vmem:[%s4028 + $0x4] sm:$0xf]
    %v4031 = vld [vmem:[%s4028 + $0x8] sm:$0xf]
    %v4032 = vld [vmem:[%s4028 + $0xc] sm:$0xf]
    %v4033 = vld [vmem:[%s4028 + $0x10] sm:$0xf]
    %v4034 = vld [vmem:[%s4028 + $0x14] sm:$0xf]
    %v4035 = vld [vmem:[%s4028 + $0x18] sm:$0xf]
    %v4036 = vld [vmem:[%s4028 + $0x1c] sm:$0xf]
    %v4037 = vld [vmem:[%s4028 + $0x20] sm:$0xf]
    %v4038 = vld [vmem:[%s4028 + $0x24] sm:$0xf]
    %v4039 = vld [vmem:[%s4028 + $0x28] sm:$0xf]
    %v4040 = vld [vmem:[%s4028 + $0x2c] sm:$0xf]
    %v4041 = vld [vmem:[%s4028 + $0x30] sm:$0xf]
    %v4042 = vld [vmem:[%s4028 + $0x34] sm:$0xf]
    %v4043 = vld [vmem:[%s4028 + $0x38] sm:$0xf]
    %v4044 = vld [vmem:[%s4028 + $0x3c] sm:$0xf]
    %v4045 = vld [vmem:[%s4028 + $0x40] sm:$0xf]
    %v4046 = vld [vmem:[%s4028 + $0x44] sm:$0xf]
    %v4047 = vld [vmem:[%s4028 + $0x48] sm:$0xf]
    %v4048 = vld [vmem:[%s4028 + $0x4c] sm:$0xf]
    %v4049 = vld [vmem:[%s4028 + $0x50] sm:$0xf]
    %v4050 = vld [vmem:[%s4028 + $0x54] sm:$0xf]
    %v4051 = vld [vmem:[%s4028 + $0x58] sm:$0xf]
    %v4052 = vld [vmem:[%s4028 + $0x5c] sm:$0xf]
    %v4053 = vld [vmem:[%s4028 + $0x60] sm:$0xf]
    %v4054 = vld [vmem:[%s4028 + $0x64] sm:$0xf]
    %v4055 = vld [vmem:[%s4028 + $0x68] sm:$0xf]
    %v4056 = vld [vmem:[%s4028 + $0x6c] sm:$0xf]
    %v4057 = vld [vmem:[%s4028 + $0x70] sm:$0xf]
    %v4058 = vld [vmem:[%s4028 + $0x74] sm:$0xf]
    %v4059 = vld [vmem:[%s4028 + $0x78] sm:$0xf]
    %v4060 = vld [vmem:[%s4028 + $0x7c] sm:$0xf]
    %v4061 = vld [vmem:[%s4028 + $0x80] sm:$0xf]
    %v4062 = vld [vmem:[%s4028 + $0x84] sm:$0xf]
    %v4063 = vld [vmem:[%s4028 + $0x88] sm:$0xf]
    %v4064 = vld [vmem:[%s4028 + $0x8c] sm:$0xf]
    %v4065 = vld [vmem:[%s4028 + $0x90] sm:$0xf]
    %v4066 = vld [vmem:[%s4028 + $0x94] sm:$0xf]
    %v4067 = vld [vmem:[%s4028 + $0x98] sm:$0xf]
    %v4068 = vld [vmem:[%s4028 + $0x9c] sm:$0xf]
    %v4069 = vld [vmem:[%s4028 + $0xa0] sm:$0xf]
    %v4070 = vld [vmem:[%s4028 + $0xa4] sm:$0xf]
    %v4071 = vld [vmem:[%s4028 + $0xa8] sm:$0xf]
    %v4072 = vld [vmem:[%s4028 + $0xac] sm:$0xf]
    %v4073 = vld [vmem:[%s4028 + $0xb0] sm:$0xf]
    %v4074 = vld [vmem:[%s4028 + $0xb4] sm:$0xf]
    %v4075 = vld [vmem:[%s4028 + $0xb8] sm:$0xf]
    %v4076 = vld [vmem:[%s4028 + $0xbc] sm:$0xf]
    %v4077 = vld [vmem:[%s4028 + $0xc0] sm:$0xf]
    %v4078 = vld [vmem:[%s4028 + $0xc4] sm:$0xf]
    %v4079 = vld [vmem:[%s4028 + $0xc8] sm:$0xf]
    %v4080 = vld [vmem:[%s4028 + $0xcc] sm:$0xf]
    %v4081 = vld [vmem:[%s4028 + $0xd0] sm:$0xf]
    %v4082 = vld [vmem:[%s4028 + $0xd4] sm:$0xf]
    %v4083 = vld [vmem:[%s4028 + $0xd8] sm:$0xf]
    %v4084 = vld [vmem:[%s4028 + $0xdc] sm:$0xf]
    %v4085 = vld [vmem:[%s4028 + $0xe0] sm:$0xf]
    %v4086 = vld [vmem:[%s4028 + $0xe4] sm:$0xf]
    %v4087 = vld [vmem:[%s4028 + $0xe8] sm:$0xf]
    %v4088 = vld [vmem:[%s4028 + $0xec] sm:$0xf]
    %v4089 = vld [vmem:[%s4028 + $0xf0] sm:$0xf]
    %v4090 = vld [vmem:[%s4028 + $0xf4] sm:$0xf]
    %v4091 = vld [vmem:[%s4028 + $0xf8] sm:$0xf]
    %v4092 = vld [vmem:[%s4028 + $0xfc] sm:$0xf]
    %s4093 = scalar_lea.vmem %s13, 1
    %v4094 = vld [vmem:[%s4093] sm:$0x1]
    %v4096 = vlaneseq
    %v4097 = vshrl.u32 %v4096, 7
    %v4098 = vsub.s32 0, %v4097
    %v4099 = vrot.slane %v4094, %v4098
    %v4165 = vunpack.c.l.b16 %v4029
    %v4166 = vunpack.c.l.b16 %v4030
    %v4167 = vunpack.c.l.b16 %v4031
    %v4168 = vunpack.c.l.b16 %v4032
    %v4169 = vunpack.c.l.b16 %v4033
    %v4170 = vunpack.c.l.b16 %v4034
    %v4171 = vunpack.c.l.b16 %v4035
    %v4172 = vunpack.c.l.b16 %v4036
    %v4173 = vunpack.c.l.b16 %v4037
    %v4174 = vunpack.c.l.b16 %v4038
    %v4175 = vunpack.c.l.b16 %v4039
    %v4176 = vunpack.c.l.b16 %v4040
    %v4177 = vunpack.c.l.b16 %v4041
    %v4178 = vunpack.c.l.b16 %v4042
    %v4179 = vunpack.c.l.b16 %v4043
    %v4180 = vunpack.c.l.b16 %v4044
    %v4181 = vunpack.c.l.b16 %v4045
    %v4182 = vunpack.c.l.b16 %v4046
    %v4183 = vunpack.c.l.b16 %v4047
    %v4184 = vunpack.c.l.b16 %v4048
    %v4185 = vunpack.c.l.b16 %v4049
    %v4186 = vunpack.c.l.b16 %v4050
    %v4187 = vunpack.c.l.b16 %v4051
    %v4188 = vunpack.c.l.b16 %v4052
    %v4189 = vunpack.c.l.b16 %v4053
    %v4190 = vunpack.c.l.b16 %v4054
    %v4191 = vunpack.c.l.b16 %v4055
    %v4192 = vunpack.c.l.b16 %v4056
    %v4193 = vunpack.c.l.b16 %v4057
    %v4194 = vunpack.c.l.b16 %v4058
    %v4195 = vunpack.c.l.b16 %v4059
    %v4196 = vunpack.c.l.b16 %v4060
    %v4197 = vunpack.c.l.b16 %v4061
    %v4198 = vunpack.c.l.b16 %v4062
    %v4199 = vunpack.c.l.b16 %v4063
    %v4200 = vunpack.c.l.b16 %v4064
    %v4201 = vunpack.c.l.b16 %v4065
    %v4202 = vunpack.c.l.b16 %v4066
    %v4203 = vunpack.c.l.b16 %v4067
    %v4204 = vunpack.c.l.b16 %v4068
    %v4205 = vunpack.c.l.b16 %v4069
    %v4206 = vunpack.c.l.b16 %v4070
    %v4207 = vunpack.c.l.b16 %v4071
    %v4208 = vunpack.c.l.b16 %v4072
    %v4209 = vunpack.c.l.b16 %v4073
    %v4210 = vunpack.c.l.b16 %v4074
    %v4211 = vunpack.c.l.b16 %v4075
    %v4212 = vunpack.c.l.b16 %v4076
    %v4213 = vunpack.c.l.b16 %v4077
    %v4214 = vunpack.c.l.b16 %v4078
    %v4215 = vunpack.c.l.b16 %v4079
    %v4216 = vunpack.c.l.b16 %v4080
    %v4217 = vunpack.c.l.b16 %v4081
    %v4218 = vunpack.c.l.b16 %v4082
    %v4219 = vunpack.c.l.b16 %v4083
    %v4220 = vunpack.c.l.b16 %v4084
    %v4221 = vunpack.c.l.b16 %v4085
    %v4222 = vunpack.c.l.b16 %v4086
    %v4223 = vunpack.c.l.b16 %v4087
    %v4224 = vunpack.c.l.b16 %v4088
    %v4225 = vunpack.c.l.b16 %v4089
    %v4226 = vunpack.c.l.b16 %v4090
    %v4227 = vunpack.c.l.b16 %v4091
    %v4228 = vunpack.c.l.b16 %v4092
    %v4229 = vpack.c.b16 %v4166, %v4165
    %v4230 = vpack.c.b16 %v4168, %v4167
    %v4231 = vpack.c.b16 %v4170, %v4169
    %v4232 = vpack.c.b16 %v4172, %v4171
    %v4233 = vpack.c.b16 %v4174, %v4173
    %v4234 = vpack.c.b16 %v4176, %v4175
    %v4235 = vpack.c.b16 %v4178, %v4177
    %v4236 = vpack.c.b16 %v4180, %v4179
    %v4237 = vpack.c.b16 %v4182, %v4181
    %v4238 = vpack.c.b16 %v4184, %v4183
    %v4239 = vpack.c.b16 %v4186, %v4185
    %v4240 = vpack.c.b16 %v4188, %v4187
    %v4241 = vpack.c.b16 %v4190, %v4189
    %v4242 = vpack.c.b16 %v4192, %v4191
    %v4243 = vpack.c.b16 %v4194, %v4193
    %v4244 = vpack.c.b16 %v4196, %v4195
    %v4245 = vpack.c.b16 %v4198, %v4197
    %v4246 = vpack.c.b16 %v4200, %v4199
    %v4247 = vpack.c.b16 %v4202, %v4201
    %v4248 = vpack.c.b16 %v4204, %v4203
    %v4249 = vpack.c.b16 %v4206, %v4205
    %v4250 = vpack.c.b16 %v4208, %v4207
    %v4251 = vpack.c.b16 %v4210, %v4209
    %v4252 = vpack.c.b16 %v4212, %v4211
    %v4253 = vpack.c.b16 %v4214, %v4213
    %v4254 = vpack.c.b16 %v4216, %v4215
    %v4255 = vpack.c.b16 %v4218, %v4217
    %v4256 = vpack.c.b16 %v4220, %v4219
    %v4257 = vpack.c.b16 %v4222, %v4221
    %v4258 = vpack.c.b16 %v4224, %v4223
    %v4259 = vpack.c.b16 %v4226, %v4225
    %v4260 = vpack.c.b16 %v4228, %v4227
    %4293 = vmatprep.subr.bf16.mxu0 0
    %4294 = vmatpush1.bf16.msra.mxu0 %v4229
    %4295 = vmatprep.subr.bf16.mxu0 0
    %4296 = vmatpush1.bf16.msra.mxu0 %v4230
    %4297 = vmatprep.subr.bf16.mxu0 0
    %4298 = vmatpush1.bf16.msra.mxu0 %v4231
    %4299 = vmatprep.subr.bf16.mxu0 0
    %4300 = vmatpush1.bf16.msra.mxu0 %v4232
    %4301 = vmatprep.subr.bf16.mxu0 0
    %4302 = vmatpush1.bf16.msra.mxu0 %v4233
    %4303 = vmatprep.subr.bf16.mxu0 0
    %4304 = vmatpush1.bf16.msra.mxu0 %v4234
    %4305 = vmatprep.subr.bf16.mxu0 0
    %4306 = vmatpush1.bf16.msra.mxu0 %v4235
    %4307 = vmatprep.subr.bf16.mxu0 0
    %4308 = vmatpush1.bf16.msra.mxu0 %v4236
    %4309 = vmatprep.subr.bf16.mxu0 0
    %4310 = vmatpush1.bf16.msra.mxu0 %v4237
    %4311 = vmatprep.subr.bf16.mxu0 0
    %4312 = vmatpush1.bf16.msra.mxu0 %v4238
    %4313 = vmatprep.subr.bf16.mxu0 0
    %4314 = vmatpush1.bf16.msra.mxu0 %v4239
    %4315 = vmatprep.subr.bf16.mxu0 0
    %4316 = vmatpush1.bf16.msra.mxu0 %v4240
    %4317 = vmatprep.subr.bf16.mxu0 0
    %4318 = vmatpush1.bf16.msra.mxu0 %v4241
    %4319 = vmatprep.subr.bf16.mxu0 0
    %4320 = vmatpush1.bf16.msra.mxu0 %v4242
    %4321 = vmatprep.subr.bf16.mxu0 0
    %4322 = vmatpush1.bf16.msra.mxu0 %v4243
    %4323 = vmatprep.subr.bf16.mxu0 0
    %4324 = vmatpush1.bf16.msra.mxu0 %v4244
    %4325 = vmatprep.mubr.bf16.mxu0 %v4025
    %4326 = vmatmul.mubr.bf16.gmra.mrb[0].mxu0 %v4024
    %v4327 = vpop.f32.mrb[0].mxu0
    %v4328 = vadd.f32 %v4099, %v4327
    %v4329 = vpop.f32.mrb[0].mxu0
    %v4330 = vpop.f32.mrb[0].mxu0
    %v4331 = vadd.f32 %v4099, %v4330
    %v4332 = vpop.f32.mrb[0].mxu0
    %4333 = vdwg.mxu0
    %4334 = vmatprep.subr.bf16.mxu0 0
    %4335 = vmatpush1.bf16.msra.mxu0 %v4245
    %4336 = vmatprep.subr.bf16.mxu0 0
    %4337 = vmatpush1.bf16.msra.mxu0 %v4246
    %4338 = vmatprep.subr.bf16.mxu0 0
    %4339 = vmatpush1.bf16.msra.mxu0 %v4247
    %4340 = vmatprep.subr.bf16.mxu0 0
    %4341 = vmatpush1.bf16.msra.mxu0 %v4248
    %4342 = vmatprep.subr.bf16.mxu0 0
    %4343 = vmatpush1.bf16.msra.mxu0 %v4249
    %4344 = vmatprep.subr.bf16.mxu0 0
    %4345 = vmatpush1.bf16.msra.mxu0 %v4250
    %4346 = vmatprep.subr.bf16.mxu0 0
    %4347 = vmatpush1.bf16.msra.mxu0 %v4251
    %4348 = vmatprep.subr.bf16.mxu0 0
    %4349 = vmatpush1.bf16.msra.mxu0 %v4252
    %4350 = vmatprep.subr.bf16.mxu0 0
    %4351 = vmatpush1.bf16.msra.mxu0 %v4253
    %4352 = vmatprep.subr.bf16.mxu0 0
    %4353 = vmatpush1.bf16.msra.mxu0 %v4254
    %4354 = vmatprep.subr.bf16.mxu0 0
    %4355 = vmatpush1.bf16.msra.mxu0 %v4255
    %4356 = vmatprep.subr.bf16.mxu0 0
    %4357 = vmatpush1.bf16.msra.mxu0 %v4256
    %4358 = vmatprep.subr.bf16.mxu0 0
    %4359 = vmatpush1.bf16.msra.mxu0 %v4257
    %4360 = vmatprep.subr.bf16.mxu0 0
    %4361 = vmatpush1.bf16.msra.mxu0 %v4258
    %4362 = vmatprep.subr.bf16.mxu0 0
    %4363 = vmatpush1.bf16.msra.mxu0 %v4259
    %4364 = vmatprep.subr.bf16.mxu0 0
    %4365 = vmatpush1.bf16.msra.mxu0 %v4260
    %4366 = vmatprep.mubr.bf16.mxu0 %v4027
    %4367 = vmatmul.mubr.bf16.gmra.mrb[0].mxu0 %v4026
    %v4368 = vpop.f32.mrb[0].mxu0
    %v4369 = vadd.f32 %v4328, %v4368
    %v4370 = vpop.f32.mrb[0].mxu0
    %v4371 = vpop.f32.mrb[0].mxu0
    %v4372 = vadd.f32 %v4331, %v4371
    %v4373 = vpop.f32.mrb[0].mxu0
    %4374 = vdwg.mxu0
    %v4375 = vadd.f32 %v3647, %v4369
    %v4376 = vadd.f32 %v3648, %v4372
    %s4377 = scalar_lea.vmem %s14, 1
    %v4378 = vld [vmem:[%s4377] sm:$0x1]
    %s4379 = scalar_lea.vmem %s15, 1
    %v4380 = vld [vmem:[%s4379] sm:$0x1]
    %4381 = vadd.xlane.f32.xlu0 %v4375
    %v4382 = vpop.xlane.xlu0 %4381
    %4383 = vadd.xlane.f32.xlu0 %v4376
    %v4384 = vpop.xlane.xlu0 %4383
    %v4385 = vmul.f32 %v4382, %v103
    %v4386 = vmul.f32 %v4384, %v103
    %v4387 = vsub.f32 %v4375, %v4385
    %v4388 = vsub.f32 %v4376, %v4386
    %v4389 = vmul.f32 %v4387, %v4387
    %v4390 = vmul.f32 %v4388, %v4388
    %4391 = vadd.xlane.f32.xlu0 %v4389
    %v4392 = vpop.xlane.xlu0 %4391
    %4393 = vadd.xlane.f32.xlu0 %v4390
    %v4394 = vpop.xlane.xlu0 %4393
    %v4395 = vmul.f32 %v4392, %v103
    %v4396 = vmul.f32 %v4394, %v103
    %v4397 = vadd.f32 %v4395, 1e-12
    %v4398 = vadd.f32 %v4396, 1e-12
    %v4399 = vrsqrt.pop %v4397
    %v4400 = vrsqrt.pop %v4398
    %v4401 = vmul.f32 %v4387, %v4399
    %v4402 = vmul.f32 %v4388, %v4400
    %v4404 = vlaneseq
    %v4405 = vshrl.u32 %v4404, 7
    %v4406 = vsub.s32 0, %v4405
    %v4407 = vrot.slane %v4378, %v4406
    %v4409 = vmul.f32 %v4401, %v4407
    %v4410 = vmul.f32 %v4402, %v4407
    %v4412 = vlaneseq
    %v4413 = vshrl.u32 %v4412, 7
    %v4414 = vsub.s32 0, %v4413
    %v4415 = vrot.slane %v4380, %v4414
    %v4417 = vadd.f32 %v4409, %v4415
    %v4418 = vadd.f32 %v4410, %v4415
    %4419 = vst [vmem:[%s16] sm:$0xff] %v4417
    %4420 = vst [vmem:[%s16 + $0x8] sm:$0xff] %v4418
    // Predicated region
    $region78: #{multitask_bert_forward.1} parent=1 // pred_check
      _
    $region79: #{multitask_bert_forward.1} parent=1 // pred_check_branch
      %4422 = sbr.rel (0) target = $region81
    $region80: #{multitask_bert_forward.1} parent=1 // pred_region
      _
    $region81: #{multitask_bert_forward.1} parent=1 // pred_fallthru
      _
    // Predicated region
    $region82: #{multitask_bert_forward.1} parent=1 // pred_check
      _
    $region83: #{multitask_bert_forward.1} parent=1 // pred_check_branch
      %4424 = sbr.rel (0) target = $region85
    $region84: #{multitask_bert_forward.1} parent=1 // pred_region
      _
    $region85: #{multitask_bert_forward.1} parent=1 // pred_fallthru
      _
    %4425 = vsyncpa [#allocation3], 1
    %4426 = vsyncpa [#allocation5], 1

</llo_original>
